<compile_context>
chip_gen: v5e
topology: v5e:2x2
jax: 0.10.0
libtpu: 0.0.40
codegen_flags: <defaults>
</compile_context>

<pallas_src>
import functools

import jax
import jax.numpy as jnp
from jax.experimental import pallas as pl
from jax.experimental.pallas import tpu as pltpu

EPS = 1e-5  # nn.LayerNorm default


# ----------------------------------------------------------------------------- kernel
def _tsmix_kernel(x_ref,
                  g1_ref, bn1_ref,    # temporal LN gamma/beta, lane-tiled (S, TB*C) f32
                  wtk_ref, bt_ref,    # kron(I_G, Wt): (G*S, G*S) bf16; bias (S, TB*C) f32
                  g2_ref, bn2_ref,    # feature  LN gamma/beta, lane-tiled (S, TB*C) f32
                  w1k_ref, b1_ref,    # kron(I_TB, W1^T): (TB*C, TB*H) bf16; (1, TB*H) f32
                  w2k_ref, b2_ref,    # kron(I_TB, W2^T): (TB*H, TB*C) bf16; (1, TB*C) f32
                  amat_ref,           # kron(I_TB, ones(C,C)): (TB*C, TB*C) bf16 (exact 1.0)
                  o_ref,
                  *, G, C):
    x = x_ref[...]                                   # (G*S, TB*C) f32
    GS, L = x.shape
    S = GS // G
    inv_sc = 1.0 / (S * C)                           # LN mean scale, applied in f32
    amat = amat_ref[...]

    def layer_norm(v, g_ref, b_ref):
        # Per-batch-element LayerNorm over its (S, C) slab.
        #  1) lane side: group-sum over the element's C lanes for v AND v*v in a
        #     single bf16 MXU matmul (stacked along sublanes), f32 accumulation.
        vv = jnp.concatenate([v, v * v], axis=0).astype(jnp.bfloat16)   # (2*G*S, L)
        lsum = jnp.dot(vv, amat, preferred_element_type=jnp.float32)    # (2*G*S, L)
        #  2) sublane side: segmented sum over each group's S rows via an XLU
        #     sublane reduce on the (G, S, L) view (XLU slot is otherwise idle),
        #     then the 1/(S*C) mean scale in f32.
        mu = jnp.sum(lsum[:GS].reshape(G, S, L), axis=1, keepdims=True) * inv_sc
        msq = jnp.sum(lsum[GS:].reshape(G, S, L), axis=1, keepdims=True) * inv_sc
        # Naive E[x^2]-E[x]^2; guard against cancellation-induced negatives.
        var = jnp.maximum(msq - mu * mu, 0.0)
        y = (v.reshape(G, S, L) - mu) * jax.lax.rsqrt(var + EPS)
        y = y * g_ref[...].reshape(1, S, L) + b_ref[...].reshape(1, S, L)
        return y.reshape(GS, L)

    # ---------------- temporal mixing ----------------
    # PyTorch: LN -> permute -> Linear(S, S) -> relu -> permute back -> +res.
    # Here: relu(kron(I_G, Wt) @ xn + bt) with M = K = G*S filling the MXU.
    xn = layer_norm(x, g1_ref, bn1_ref)
    z = jnp.dot(wtk_ref[...], xn.astype(jnp.bfloat16),
                preferred_element_type=jnp.float32)                     # (G*S, L)
    z = z.reshape(G, S, L) + bt_ref[...].reshape(1, S, L)               # bias per row s
    x1 = x + jnp.maximum(z, 0.0).reshape(GS, L)                         # residual, f32

    # ---------------- feature-mixing MLP ----------------
    # Per-element (S, C) @ (C, H) realised as lane-dense block-diagonal matmuls
    # against kron(I_TB, W); batch stays packed along lanes, output store is
    # lane-dense.  NOTE: kron inflates weight bytes/FLOPs by TB (acceptable at
    # H=32: 2 x 256 KiB, DMA'd once per core).
    # TODO(synk): for large H or TB, build the block-diagonal into VMEM scratch
    # once, or relayout C onto sublanes and use the small (C,H)/(H,C) weights.
    yn = layer_norm(x1, g2_ref, bn2_ref).astype(jnp.bfloat16)
    h = jnp.dot(yn, w1k_ref[...], preferred_element_type=jnp.float32) + b1_ref[...]
    h = jnp.maximum(h, 0.0).astype(jnp.bfloat16)                        # (G*S, TB*H)
    y = jnp.dot(h, w2k_ref[...], preferred_element_type=jnp.float32) + b2_ref[...]

    o_ref[...] = x1 + y                                                 # residual, f32


# ----------------------------------------------------------------------- tile selection
@functools.lru_cache(maxsize=1)
def _mxu_target_rows():
    """256-row MXU tiles on v6e/v7x, 128 on v5e/unknown (feature-detect once)."""
    try:
        kind = jax.devices()[0].device_kind.lower()
    except Exception:
        return 128
    return 256 if ("v6" in kind or "v7" in kind or "7x" in kind) else 128


def _pick_tiles(B, S, C, *, lane=128, target_rows=None):
    """Returns (TB, G).  TB = batch elements packed along lanes (TB*C multiple of
    128); G = lane-groups stacked along sublanes per grid step (M = G*S rows),
    maximised under `target_rows` while keeping >= 2 parallel grid steps whenever
    the batch allows (megacore / v7x's two TensorCores)."""
    if target_rows is None:
        target_rows = _mxu_target_rows()
    TB = next((t for t in range(1, B + 1) if B % t == 0 and (t * C) % lane == 0), B)
    # If no divisor gives lane-dense tiles (e.g. C=3, small B), TB=B falls back to a
    # single, possibly lane-sparse block (correct, just not lane-dense).
    NG = B // TB
    cands = [g for g in range(1, NG + 1) if NG % g == 0 and g * S <= target_rows] or [1]
    par = [g for g in cands if NG // g >= 2]
    return TB, (max(par) if par else max(cands))


# --------------------------------------------------------------------------- wrappers
def pack_params(params, TB, G):
    """Pre-pack weights for the lane/sublane layout.  Do this ONCE per block when
    stacking many TSMix blocks (pure XLA; constant-folds / fuses under jit)."""
    S, C = params["g1"].shape
    bf16 = jnp.bfloat16
    eye_g = jnp.eye(G, dtype=jnp.float32)
    eye_tb = jnp.eye(TB, dtype=jnp.float32)
    lane = lambda a: jnp.tile(a, (1, TB))                       # (S,C) -> (S, TB*C)
    return (
        lane(params["g1"]), lane(params["bn1"]),
        jnp.kron(eye_g, params["wt"]).astype(bf16),             # (G*S, G*S)
        jnp.tile(params["bt"], (1, TB * C)),                    # bt lane-tiled (S, TB*C)
        lane(params["g2"]), lane(params["bn2"]),
        jnp.kron(eye_tb, params["w1t"]).astype(bf16), jnp.tile(params["b1"], (1, TB)),
        jnp.kron(eye_tb, params["w2t"]).astype(bf16), jnp.tile(params["b2"], (1, TB)),
        jnp.kron(eye_tb, jnp.ones((C, C), jnp.float32)).astype(bf16),  # exact 1.0 in bf16
    )


def _build_call(S, C, H, NG, TB, G):
    GS, TBC, TBH = G * S, TB * C, TB * H

    # --- VMEM budget computed from the actual operand windows (not a blanket 48 MiB).
    f32b, bf16b = 4, 2
    operand_bytes = (GS * TBC * f32b                    # x block
                     + 5 * S * TBC * f32b               # g1, bn1, bt, g2, bn2
                     + GS * GS * bf16b                  # kron(I_G, Wt)
                     + TBC * TBH * bf16b + TBH * f32b   # kron(I_TB, W1^T), b1
                     + TBH * TBC * bf16b + TBC * f32b   # kron(I_TB, W2^T), b2
                     + TBC * TBC * bf16b                # LN lane group-sum matrix
                     + GS * TBC * f32b)                 # output block
    dbuf_bytes = 2 * operand_bytes  # Pallas double-buffers every operand window
    # (constants are still only DMA'd once: their block index never changes).
    assert dbuf_bytes <= (32 << 20), (
        f"operand windows ({dbuf_bytes / 2**20:.1f} MiB double-buffered) exceed the "
        "32 MiB budget that is safe on every generation (v7x: 64 MiB VMEM per core)")
    vmem_limit = dbuf_bytes + (16 << 20)  # + headroom for spilled temporaries

    const = lambda shape: pl.BlockSpec(shape, lambda i: (0, 0))  # grid-invariant

    return pl.pallas_call(
        functools.partial(_tsmix_kernel, G=G, C=C),
        out_shape=jax.ShapeDtypeStruct((NG * S, TBC), jnp.float32),
        grid_spec=pltpu.PrefetchScalarGridSpec(
            num_scalar_prefetch=0,
            grid=(NG // G,),
            in_specs=[
                pl.BlockSpec((GS, TBC), lambda i: (i, 0)),   # x: G lane-groups / step
                const((S, TBC)), const((S, TBC)),            # LN1 gamma / beta
                const((GS, GS)), const((S, TBC)),            # kron(I_G, Wt), bt
                const((S, TBC)), const((S, TBC)),            # LN2 gamma / beta
                const((TBC, TBH)), const((1, TBH)),          # kron(I_TB, W1^T), b1
                const((TBH, TBC)), const((1, TBC)),          # kron(I_TB, W2^T), b2
                const((TBC, TBC)),                           # LN lane group-sum matrix
            ],
            out_specs=pl.BlockSpec((GS, TBC), lambda i: (i, 0)),
        ),
        compiler_params=pltpu.CompilerParams(
            dimension_semantics=("parallel",),   # batch-group axis: megacore / 2x TC
            vmem_limit_bytes=vmem_limit,
        ),
    )


def tsmix_block_packed(xt, packed, *, S, C, H, NG, TB, G):
    """Forward on the packed (NG*S, TB*C) layout.  Use this when stacking several
    TSMix blocks so activations stay lane-packed and only the model boundary pays
    the (B,S,C) <-> packed transposes."""
    return _build_call(S, C, H, NG, TB, G)(xt, *packed)


def tsmix_block(x, params, *, target_rows=None):
    """x: (B, S, C) float32 -> (B, S, C) float32 (single TSMixBlock forward)."""
    B, S, C = x.shape
    H = params["w1t"].shape[1]
    TB, G = _pick_tiles(B, S, C, target_rows=target_rows)
    NG = B // TB
    # (B,S,C) -> (NG*S, TB*C): row = g*S + s, lane = j*C + c  (b = g*TB + j).
    xt = x.reshape(NG, TB, S, C).transpose(0, 2, 1, 3).reshape(NG * S, TB * C)
    out2d = tsmix_block_packed(xt, pack_params(params, TB, G),
                               S=S, C=C, H=H, NG=NG, TB=TB, G=G)
    return out2d.reshape(NG, S, TB, C).transpose(0, 2, 1, 3).reshape(B, S, C)


# ----------------------------------------------------------------------------- params / ref
def init_params(key, ch_in, seq_len, hidden):
    """Deterministic synthetic init matching the PyTorch module's shapes."""
    ks = jax.random.split(key, 6)
    f32 = jnp.float32
    return {
        # TemporalBlock.norm (LayerNorm([S, C]))
        "g1":  jnp.ones((seq_len, ch_in), f32),
        "bn1": jnp.zeros((seq_len, ch_in), f32),
        # TemporalBlock.linear: Linear(seq_len, seq_len)
        "wt":  (0.1 * jax.random.normal(ks[0], (seq_len, seq_len))).astype(f32),
        "bt":  (0.1 * jax.random.normal(ks[1], (seq_len, 1))).astype(f32),
        # FeaturalBlock.norm (LayerNorm([S, C]))
        "g2":  jnp.ones((seq_len, ch_in), f32),
        "bn2": jnp.zeros((seq_len, ch_in), f32),
        # FeaturalBlock.linear1: Linear(ch_in, hidden) -- stored pre-transposed (C, H)
        "w1t": (0.1 * jax.random.normal(ks[2], (ch_in, hidden))).astype(f32),
        "b1":  (0.1 * jax.random.normal(ks[3], (1, hidden))).astype(f32),
        # FeaturalBlock.linear2: Linear(hidden, ch_in) -- stored pre-transposed (H, C)
        "w2t": (0.1 * jax.random.normal(ks[4], (hidden, ch_in))).astype(f32),
        "b2":  (0.1 * jax.random.normal(ks[5], (1, ch_in))).astype(f32),
    }


def tsmix_block_ref(x, p):
    """Pure-JAX f32 reference mirroring the PyTorch forward (dropout = identity)."""
    def ln(v, g, b):
        mu = jnp.mean(v, axis=(1, 2), keepdims=True)
        var = jnp.mean((v - mu) ** 2, axis=(1, 2), keepdims=True)
        return (v - mu) / jnp.sqrt(var + EPS) * g + b

    t = ln(x, p["g1"], p["bn1"])
    t = jnp.transpose(t, (0, 2, 1))                 # (B, C, S)
    t = t @ p["wt"].T + p["bt"][:, 0]
    t = jax.nn.relu(t)
    t = jnp.transpose(t, (0, 2, 1))                 # (B, S, C)
    x1 = x + t
    f = ln(x1, p["g2"], p["bn2"])
    f = jax.nn.relu(f @ p["w1t"] + p["b1"])
    f = f @ p["w2t"] + p["b2"]
    return x1 + f


# ----------------------------------------------------------------------------------- main
if __name__ == "__main__":
    S, C, H = 8, 4, 32                               # seq_len, ch_in, hidden_size
    key = jax.random.PRNGKey(0)
    kx, kp = jax.random.split(key)
    params = init_params(kp, C, S, H)
    fwd = jax.jit(tsmix_block)                       # transposes/kron fuse under jit

    # B=1024: TB=32, G=16 -> 128-row MXU tiles, grid of 2 (both TCs on v7x busy).
    # B=64  : TB=32, G=1  -> degenerate-stacking path, grid of 2.
    for B in (1024, 64):
        x = jax.random.normal(jax.random.fold_in(kx, B), (B, S, C), dtype=jnp.float32)
        out = jax.block_until_ready(fwd(x, params))
        ref = tsmix_block_ref(x, params)
        assert out.shape == (B, S, C)
        err = float(jnp.max(jnp.abs(out - ref)))
        # bf16 MXU inputs (f32 accumulation) vs f32 reference -> loosened tolerance.
        assert jnp.allclose(out, ref, atol=5e-2, rtol=5e-2), (
            f"B={B}: mismatch vs reference, max abs err {err:.3e}")
    print("KERNEL_OK")
</pallas_src>

<mosaic_0001>
module attributes {stable_mosaic.version = 11 : i64} {
  func.func @_tsmix_kernel(%arg0: i32, %arg1: memref<128x128xf32, #tpu.memory_space<vmem>>, %arg2: memref<8x128xf32, #tpu.memory_space<vmem>>, %arg3: memref<8x128xf32, #tpu.memory_space<vmem>>, %arg4: memref<128x128xbf16, #tpu.memory_space<vmem>>, %arg5: memref<8x128xf32, #tpu.memory_space<vmem>>, %arg6: memref<8x128xf32, #tpu.memory_space<vmem>>, %arg7: memref<8x128xf32, #tpu.memory_space<vmem>>, %arg8: memref<128x1024xbf16, #tpu.memory_space<vmem>>, %arg9: memref<1x1024xf32, #tpu.memory_space<vmem>>, %arg10: memref<1024x128xbf16, #tpu.memory_space<vmem>>, %arg11: memref<1x128xf32, #tpu.memory_space<vmem>>, %arg12: memref<128x128xbf16, #tpu.memory_space<vmem>>, %arg13: memref<128x128xf32, #tpu.memory_space<vmem>>) attributes {dimension_semantics = [#tpu.dimension_semantics<parallel>], iteration_bounds = array<i64: 2>, scalar_prefetch = 0 : i64, scratch_operands = 0 : i64, tpu.core_type = #tpu.core_type<tc>, window_params = [{transform_indices = @transform_0, window_bounds = array<i64: 128, 128>}, {pipeline_mode = #tpu.pipeline_mode<synchronous>, transform_indices = @transform_1, window_bounds = array<i64: 8, 128>}, {pipeline_mode = #tpu.pipeline_mode<synchronous>, transform_indices = @transform_2, window_bounds = array<i64: 8, 128>}, {pipeline_mode = #tpu.pipeline_mode<synchronous>, transform_indices = @transform_3, window_bounds = array<i64: 128, 128>}, {pipeline_mode = #tpu.pipeline_mode<synchronous>, transform_indices = @transform_4, window_bounds = array<i64: 8, 128>}, {pipeline_mode = #tpu.pipeline_mode<synchronous>, transform_indices = @transform_5, window_bounds = array<i64: 8, 128>}, {pipeline_mode = #tpu.pipeline_mode<synchronous>, transform_indices = @transform_6, window_bounds = array<i64: 8, 128>}, {pipeline_mode = #tpu.pipeline_mode<synchronous>, transform_indices = @transform_7, window_bounds = array<i64: 128, 1024>}, {pipeline_mode = #tpu.pipeline_mode<synchronous>, transform_indices = @transform_8, window_bounds = array<i64: 1, 1024>}, {pipeline_mode = #tpu.pipeline_mode<synchronous>, transform_indices = @transform_9, window_bounds = array<i64: 1024, 128>}, {pipeline_mode = #tpu.pipeline_mode<synchronous>, transform_indices = @transform_10, window_bounds = array<i64: 1, 128>}, {pipeline_mode = #tpu.pipeline_mode<synchronous>, transform_indices = @transform_11, window_bounds = array<i64: 128, 128>}, {transform_indices = @transform_12, window_bounds = array<i64: 128, 128>}]} {
    %c0 = arith.constant 0 : index
    %c0_0 = arith.constant 0 : index
    %0 = vector.load %arg1[%c0, %c0_0] : memref<128x128xf32, #tpu.memory_space<vmem>>, vector<128x128xf32>
    %c0_1 = arith.constant 0 : index
    %c0_2 = arith.constant 0 : index
    %1 = vector.load %arg12[%c0_1, %c0_2] : memref<128x128xbf16, #tpu.memory_space<vmem>>, vector<128x128xbf16>
    %2 = arith.mulf %0, %0 : vector<128x128xf32>
    %3 = tpu.concatenate %0, %2 in 0 : vector<128x128xf32>, vector<128x128xf32> -> vector<256x128xf32>
    %4 = arith.truncf %3 : vector<256x128xf32> to vector<256x128xbf16>
    %cst = arith.constant dense<0.000000e+00> : vector<256x128xf32>
    %5 = tpu.matmul %4, %1, %cst {dimension_numbers = #tpu.dot_dimension_numbers<[1], [0], [0], [1], [0, 0, 1, 1], [], []>} : vector<256x128xbf16>, vector<128x128xbf16>, vector<256x128xf32> -> vector<256x128xf32>
    %6 = vector.extract_strided_slice %5 {offsets = [0, 0], sizes = [128, 128], strides = [1, 1]} : vector<256x128xf32> to vector<128x128xf32>
    %7 = vector.shape_cast %6 : vector<128x128xf32> to vector<16x8x128xf32>
    %cst_3 = arith.constant dense<0.000000e+00> : vector<16x128xf32>
    %8 = vector.multi_reduction <add>, %7, %cst_3 [1] : vector<16x8x128xf32> to vector<16x128xf32>
    %9 = vector.shape_cast %8 : vector<16x128xf32> to vector<16x1x128xf32>
    %cst_4 = arith.constant 3.125000e-02 : f32
    %10 = vector.broadcast %cst_4 : f32 to vector<16x1x128xf32>
    %11 = arith.mulf %9, %10 : vector<16x1x128xf32>
    %12 = vector.extract_strided_slice %5 {offsets = [128, 0], sizes = [128, 128], strides = [1, 1]} : vector<256x128xf32> to vector<128x128xf32>
    %13 = vector.shape_cast %12 : vector<128x128xf32> to vector<16x8x128xf32>
    %cst_5 = arith.constant dense<0.000000e+00> : vector<16x128xf32>
    %14 = vector.multi_reduction <add>, %13, %cst_5 [1] : vector<16x8x128xf32> to vector<16x128xf32>
    %15 = vector.shape_cast %14 : vector<16x128xf32> to vector<16x1x128xf32>
    %cst_6 = arith.constant 3.125000e-02 : f32
    %16 = vector.broadcast %cst_6 : f32 to vector<16x1x128xf32>
    %17 = arith.mulf %15, %16 : vector<16x1x128xf32>
    %18 = arith.mulf %11, %11 : vector<16x1x128xf32>
    %19 = arith.subf %17, %18 : vector<16x1x128xf32>
    %cst_7 = arith.constant 0.000000e+00 : f32
    %20 = vector.broadcast %cst_7 : f32 to vector<16x1x128xf32>
    %21 = arith.maximumf %19, %20 : vector<16x1x128xf32>
    %22 = vector.shape_cast %0 : vector<128x128xf32> to vector<16x8x128xf32>
    %23 = vector.broadcast %11 : vector<16x1x128xf32> to vector<16x8x128xf32>
    %24 = arith.subf %22, %23 : vector<16x8x128xf32>
    %cst_8 = arith.constant 9.99999974E-6 : f32
    %25 = vector.broadcast %cst_8 : f32 to vector<16x1x128xf32>
    %26 = arith.addf %21, %25 : vector<16x1x128xf32>
    %27 = math.rsqrt %26 : vector<16x1x128xf32>
    %28 = vector.broadcast %27 : vector<16x1x128xf32> to vector<16x8x128xf32>
    %29 = arith.mulf %24, %28 : vector<16x8x128xf32>
    %c0_9 = arith.constant 0 : index
    %c0_10 = arith.constant 0 : index
    %30 = vector.load %arg2[%c0_9, %c0_10] : memref<8x128xf32, #tpu.memory_space<vmem>>, vector<8x128xf32>
    %31 = vector.shape_cast %30 : vector<8x128xf32> to vector<1x8x128xf32>
    %32 = vector.broadcast %31 : vector<1x8x128xf32> to vector<16x8x128xf32>
    %33 = arith.mulf %29, %32 : vector<16x8x128xf32>
    %c0_11 = arith.constant 0 : index
    %c0_12 = arith.constant 0 : index
    %34 = vector.load %arg3[%c0_11, %c0_12] : memref<8x128xf32, #tpu.memory_space<vmem>>, vector<8x128xf32>
    %35 = vector.shape_cast %34 : vector<8x128xf32> to vector<1x8x128xf32>
    %36 = vector.broadcast %35 : vector<1x8x128xf32> to vector<16x8x128xf32>
    %37 = arith.addf %33, %36 : vector<16x8x128xf32>
    %38 = vector.shape_cast %37 : vector<16x8x128xf32> to vector<128x128xf32>
    %c0_13 = arith.constant 0 : index
    %c0_14 = arith.constant 0 : index
    %39 = vector.load %arg4[%c0_13, %c0_14] : memref<128x128xbf16, #tpu.memory_space<vmem>>, vector<128x128xbf16>
    %40 = arith.truncf %38 : vector<128x128xf32> to vector<128x128xbf16>
    %cst_15 = arith.constant dense<0.000000e+00> : vector<128x128xf32>
    %41 = tpu.matmul %39, %40, %cst_15 {dimension_numbers = #tpu.dot_dimension_numbers<[1], [0], [0], [1], [0, 0, 1, 1], [], []>} : vector<128x128xbf16>, vector<128x128xbf16>, vector<128x128xf32> -> vector<128x128xf32>
    %42 = vector.shape_cast %41 : vector<128x128xf32> to vector<16x8x128xf32>
    %c0_16 = arith.constant 0 : index
    %c0_17 = arith.constant 0 : index
    %43 = vector.load %arg5[%c0_16, %c0_17] : memref<8x128xf32, #tpu.memory_space<vmem>>, vector<8x128xf32>
    %44 = vector.shape_cast %43 : vector<8x128xf32> to vector<1x8x128xf32>
    %45 = vector.broadcast %44 : vector<1x8x128xf32> to vector<16x8x128xf32>
    %46 = arith.addf %42, %45 : vector<16x8x128xf32>
    %cst_18 = arith.constant 0.000000e+00 : f32
    %47 = vector.broadcast %cst_18 : f32 to vector<16x8x128xf32>
    %48 = arith.maximumf %46, %47 : vector<16x8x128xf32>
    %49 = vector.shape_cast %48 : vector<16x8x128xf32> to vector<128x128xf32>
    %50 = arith.addf %0, %49 : vector<128x128xf32>
    %51 = arith.mulf %50, %50 : vector<128x128xf32>
    %52 = tpu.concatenate %50, %51 in 0 : vector<128x128xf32>, vector<128x128xf32> -> vector<256x128xf32>
    %53 = arith.truncf %52 : vector<256x128xf32> to vector<256x128xbf16>
    %cst_19 = arith.constant dense<0.000000e+00> : vector<256x128xf32>
    %54 = tpu.matmul %53, %1, %cst_19 {dimension_numbers = #tpu.dot_dimension_numbers<[1], [0], [0], [1], [0, 0, 1, 1], [], []>} : vector<256x128xbf16>, vector<128x128xbf16>, vector<256x128xf32> -> vector<256x128xf32>
    %55 = vector.extract_strided_slice %54 {offsets = [0, 0], sizes = [128, 128], strides = [1, 1]} : vector<256x128xf32> to vector<128x128xf32>
    %56 = vector.shape_cast %55 : vector<128x128xf32> to vector<16x8x128xf32>
    %cst_20 = arith.constant dense<0.000000e+00> : vector<16x128xf32>
    %57 = vector.multi_reduction <add>, %56, %cst_20 [1] : vector<16x8x128xf32> to vector<16x128xf32>
    %58 = vector.shape_cast %57 : vector<16x128xf32> to vector<16x1x128xf32>
    %cst_21 = arith.constant 3.125000e-02 : f32
    %59 = vector.broadcast %cst_21 : f32 to vector<16x1x128xf32>
    %60 = arith.mulf %58, %59 : vector<16x1x128xf32>
    %61 = vector.extract_strided_slice %54 {offsets = [128, 0], sizes = [128, 128], strides = [1, 1]} : vector<256x128xf32> to vector<128x128xf32>
    %62 = vector.shape_cast %61 : vector<128x128xf32> to vector<16x8x128xf32>
    %cst_22 = arith.constant dense<0.000000e+00> : vector<16x128xf32>
    %63 = vector.multi_reduction <add>, %62, %cst_22 [1] : vector<16x8x128xf32> to vector<16x128xf32>
    %64 = vector.shape_cast %63 : vector<16x128xf32> to vector<16x1x128xf32>
    %cst_23 = arith.constant 3.125000e-02 : f32
    %65 = vector.broadcast %cst_23 : f32 to vector<16x1x128xf32>
    %66 = arith.mulf %64, %65 : vector<16x1x128xf32>
    %67 = arith.mulf %60, %60 : vector<16x1x128xf32>
    %68 = arith.subf %66, %67 : vector<16x1x128xf32>
    %cst_24 = arith.constant 0.000000e+00 : f32
    %69 = vector.broadcast %cst_24 : f32 to vector<16x1x128xf32>
    %70 = arith.maximumf %68, %69 : vector<16x1x128xf32>
    %71 = vector.shape_cast %50 : vector<128x128xf32> to vector<16x8x128xf32>
    %72 = vector.broadcast %60 : vector<16x1x128xf32> to vector<16x8x128xf32>
    %73 = arith.subf %71, %72 : vector<16x8x128xf32>
    %cst_25 = arith.constant 9.99999974E-6 : f32
    %74 = vector.broadcast %cst_25 : f32 to vector<16x1x128xf32>
    %75 = arith.addf %70, %74 : vector<16x1x128xf32>
    %76 = math.rsqrt %75 : vector<16x1x128xf32>
    %77 = vector.broadcast %76 : vector<16x1x128xf32> to vector<16x8x128xf32>
    %78 = arith.mulf %73, %77 : vector<16x8x128xf32>
    %c0_26 = arith.constant 0 : index
    %c0_27 = arith.constant 0 : index
    %79 = vector.load %arg6[%c0_26, %c0_27] : memref<8x128xf32, #tpu.memory_space<vmem>>, vector<8x128xf32>
    %80 = vector.shape_cast %79 : vector<8x128xf32> to vector<1x8x128xf32>
    %81 = vector.broadcast %80 : vector<1x8x128xf32> to vector<16x8x128xf32>
    %82 = arith.mulf %78, %81 : vector<16x8x128xf32>
    %c0_28 = arith.constant 0 : index
    %c0_29 = arith.constant 0 : index
    %83 = vector.load %arg7[%c0_28, %c0_29] : memref<8x128xf32, #tpu.memory_space<vmem>>, vector<8x128xf32>
    %84 = vector.shape_cast %83 : vector<8x128xf32> to vector<1x8x128xf32>
    %85 = vector.broadcast %84 : vector<1x8x128xf32> to vector<16x8x128xf32>
    %86 = arith.addf %82, %85 : vector<16x8x128xf32>
    %87 = vector.shape_cast %86 : vector<16x8x128xf32> to vector<128x128xf32>
    %88 = arith.truncf %87 : vector<128x128xf32> to vector<128x128xbf16>
    %c0_30 = arith.constant 0 : index
    %c0_31 = arith.constant 0 : index
    %89 = vector.load %arg8[%c0_30, %c0_31] : memref<128x1024xbf16, #tpu.memory_space<vmem>>, vector<128x1024xbf16>
    %cst_32 = arith.constant dense<0.000000e+00> : vector<128x1024xf32>
    %90 = tpu.matmul %88, %89, %cst_32 {dimension_numbers = #tpu.dot_dimension_numbers<[1], [0], [0], [1], [0, 0, 1, 1], [], []>} : vector<128x128xbf16>, vector<128x1024xbf16>, vector<128x1024xf32> -> vector<128x1024xf32>
    %c0_33 = arith.constant 0 : index
    %c0_34 = arith.constant 0 : index
    %91 = vector.load %arg9[%c0_33, %c0_34] : memref<1x1024xf32, #tpu.memory_space<vmem>>, vector<1x1024xf32>
    %92 = vector.broadcast %91 : vector<1x1024xf32> to vector<128x1024xf32>
    %93 = arith.addf %90, %92 : vector<128x1024xf32>
    %cst_35 = arith.constant 0.000000e+00 : f32
    %94 = vector.broadcast %cst_35 : f32 to vector<128x1024xf32>
    %95 = arith.maximumf %93, %94 : vector<128x1024xf32>
    %96 = arith.truncf %95 : vector<128x1024xf32> to vector<128x1024xbf16>
    %c0_36 = arith.constant 0 : index
    %c0_37 = arith.constant 0 : index
    %97 = vector.load %arg10[%c0_36, %c0_37] : memref<1024x128xbf16, #tpu.memory_space<vmem>>, vector<1024x128xbf16>
    %cst_38 = arith.constant dense<0.000000e+00> : vector<128x128xf32>
    %98 = tpu.matmul %96, %97, %cst_38 {dimension_numbers = #tpu.dot_dimension_numbers<[1], [0], [0], [1], [0, 0, 1, 1], [], []>} : vector<128x1024xbf16>, vector<1024x128xbf16>, vector<128x128xf32> -> vector<128x128xf32>
    %c0_39 = arith.constant 0 : index
    %c0_40 = arith.constant 0 : index
    %99 = vector.load %arg11[%c0_39, %c0_40] : memref<1x128xf32, #tpu.memory_space<vmem>>, vector<1x128xf32>
    %100 = vector.broadcast %99 : vector<1x128xf32> to vector<128x128xf32>
    %101 = arith.addf %98, %100 : vector<128x128xf32>
    %102 = arith.addf %50, %101 : vector<128x128xf32>
    %c0_41 = arith.constant 0 : index
    %c0_42 = arith.constant 0 : index
    %103 = vector.load %arg13[%c0_41, %c0_42] : memref<128x128xf32, #tpu.memory_space<vmem>>, vector<128x128xf32>
    tpu.vector_store %arg13[%c0_41, %c0_42], %102 {strides = array<i32>} : memref<128x128xf32, #tpu.memory_space<vmem>>, vector<128x128xf32>,
    return
  }
  func.func @transform_0(%arg0: i32) -> (i32, i32) {
    %c0_i32 = arith.constant 0 : i32
    %c0_i32_0 = arith.constant 0 : i32
    return %arg0, %c0_i32 : i32, i32
  }
  func.func @transform_1(%arg0: i32) -> (i32, i32) {
    %c0_i32 = arith.constant 0 : i32
    %c0_i32_0 = arith.constant 0 : i32
    %c0_i32_1 = arith.constant 0 : i32
    return %c0_i32, %c0_i32_0 : i32, i32
  }
  func.func @transform_2(%arg0: i32) -> (i32, i32) {
    %c0_i32 = arith.constant 0 : i32
    %c0_i32_0 = arith.constant 0 : i32
    %c0_i32_1 = arith.constant 0 : i32
    return %c0_i32, %c0_i32_0 : i32, i32
  }
  func.func @transform_3(%arg0: i32) -> (i32, i32) {
    %c0_i32 = arith.constant 0 : i32
    %c0_i32_0 = arith.constant 0 : i32
    %c0_i32_1 = arith.constant 0 : i32
    return %c0_i32, %c0_i32_0 : i32, i32
  }
  func.func @transform_4(%arg0: i32) -> (i32, i32) {
    %c0_i32 = arith.constant 0 : i32
    %c0_i32_0 = arith.constant 0 : i32
    %c0_i32_1 = arith.constant 0 : i32
    return %c0_i32, %c0_i32_0 : i32, i32
  }
  func.func @transform_5(%arg0: i32) -> (i32, i32) {
    %c0_i32 = arith.constant 0 : i32
    %c0_i32_0 = arith.constant 0 : i32
    %c0_i32_1 = arith.constant 0 : i32
    return %c0_i32, %c0_i32_0 : i32, i32
  }
  func.func @transform_6(%arg0: i32) -> (i32, i32) {
    %c0_i32 = arith.constant 0 : i32
    %c0_i32_0 = arith.constant 0 : i32
    %c0_i32_1 = arith.constant 0 : i32
    return %c0_i32, %c0_i32_0 : i32, i32
  }
  func.func @transform_7(%arg0: i32) -> (i32, i32) {
    %c0_i32 = arith.constant 0 : i32
    %c0_i32_0 = arith.constant 0 : i32
    %c0_i32_1 = arith.constant 0 : i32
    return %c0_i32, %c0_i32_0 : i32, i32
  }
  func.func @transform_8(%arg0: i32) -> (i32, i32) {
    %c0_i32 = arith.constant 0 : i32
    %c0_i32_0 = arith.constant 0 : i32
    %c0_i32_1 = arith.constant 0 : i32
    return %c0_i32, %c0_i32_0 : i32, i32
  }
  func.func @transform_9(%arg0: i32) -> (i32, i32) {
    %c0_i32 = arith.constant 0 : i32
    %c0_i32_0 = arith.constant 0 : i32
    %c0_i32_1 = arith.constant 0 : i32
    return %c0_i32, %c0_i32_0 : i32, i32
  }
  func.func @transform_10(%arg0: i32) -> (i32, i32) {
    %c0_i32 = arith.constant 0 : i32
    %c0_i32_0 = arith.constant 0 : i32
    %c0_i32_1 = arith.constant 0 : i32
    return %c0_i32, %c0_i32_0 : i32, i32
  }
  func.func @transform_11(%arg0: i32) -> (i32, i32) {
    %c0_i32 = arith.constant 0 : i32
    %c0_i32_0 = arith.constant 0 : i32
    %c0_i32_1 = arith.constant 0 : i32
    return %c0_i32, %c0_i32_0 : i32, i32
  }
  func.func @transform_12(%arg0: i32) -> (i32, i32) {
    %c0_i32 = arith.constant 0 : i32
    %c0_i32_0 = arith.constant 0 : i32
    return %arg0, %c0_i32 : i32, i32
  }
}

</mosaic_0001>

<llo_original>
// kernel: tsmix_block.1
$region0: #{tsmix_block.1}
  #allocation0 [shape = 'u32[]', space=smem, size = 0x4, offset = 0x4, fixed_abs, tag = 'smem constant byte address 0x4 - core index']
  #allocation1 [shape = 'u32[72,128]{1,0:T(1,128)}', space=vmem, size = 0x9000, scoped, tag = 'internal scratch']
  %s0 = inlined_call_operand.vmem [shape: f32[256,128], index: 0, kind: input, shape index: {}]
  %s1 = inlined_call_operand.vmem [shape: f32[8,128], index: 1, kind: input, shape index: {}]
  %s2 = inlined_call_operand.vmem [shape: f32[8,128], index: 2, kind: input, shape index: {}]
  %s3 = inlined_call_operand.vmem [shape: bf16[128,128], index: 3, kind: input, shape index: {}]
  %s4 = inlined_call_operand.vmem [shape: f32[8,128], index: 4, kind: input, shape index: {}]
  %s5 = inlined_call_operand.vmem [shape: f32[8,128], index: 5, kind: input, shape index: {}]
  %s6 = inlined_call_operand.vmem [shape: f32[8,128], index: 6, kind: input, shape index: {}]
  %s7 = inlined_call_operand.vmem [shape: bf16[128,1024], index: 7, kind: input, shape index: {}]
  %s8 = inlined_call_operand.vmem [shape: f32[1,1024], index: 8, kind: input, shape index: {}]
  %s9 = inlined_call_operand.vmem [shape: bf16[1024,128], index: 9, kind: input, shape index: {}]
  %s10 = inlined_call_operand.vmem [shape: f32[1,128], index: 10, kind: input, shape index: {}]
  %s11 = inlined_call_operand.vmem [shape: bf16[128,128], index: 11, kind: input, shape index: {}]
  %s12 = inlined_call_operand.vmem [shape: f32[256,128], index: 12, kind: output, shape index: {}]
  %s13 = sld [smem:[#allocation0]]
  $region81: #{tsmix_block.1} parent=0
    _
  %s15 = ssub.s32 1, %s13
  %s16 = scalar_select 0, %s15, %s13
  loop: start=0, step=1, limit=4
  $region2: #{tsmix_block.1} parent=0 // loop_pre_header
    _
  $region3: #{tsmix_block.1} parent=0 // loop_header
    %s18 = sphi 0, %s22
    %p19 = scmp.ge.s32.totalorder %s18, 4
    %s28 = sphi 0, %s30
    %s31 = sphi 0, %s28
    %s32 = sphi 0, %s31
    %s48 = sphi 0, %s32
    %s52 = sphi 0, %s52
    %s54 = sphi 0, %s52
    %s55 = sphi 0, %s54
    %s69 = sphi 0, %s55
    %s73 = sphi 0, %s73
    %s75 = sphi 0, %s73
    %s76 = sphi 0, %s75
    %s90 = sphi 0, %s76
    %s94 = sphi 0, %s94
    %s96 = sphi 0, %s94
    %s97 = sphi 0, %s96
    %s111 = sphi 0, %s97
    %s115 = sphi 0, %s115
    %s117 = sphi 0, %s115
    %s118 = sphi 0, %s117
    %s132 = sphi 0, %s118
    %s136 = sphi 0, %s136
    %s138 = sphi 0, %s136
    %s139 = sphi 0, %s138
    %s153 = sphi 0, %s139
    %s157 = sphi 0, %s157
    %s159 = sphi 0, %s157
    %s160 = sphi 0, %s159
    %s174 = sphi 0, %s160
    %s178 = sphi 0, %s178
    %s180 = sphi 0, %s178
    %s181 = sphi 0, %s180
    %s195 = sphi 0, %s181
    %s199 = sphi 0, %s199
    %s201 = sphi 0, %s199
    %s202 = sphi 0, %s201
    %s216 = sphi 0, %s202
    %s220 = sphi 0, %s220
    %s222 = sphi 0, %s220
    %s223 = sphi 0, %s222
    %s237 = sphi 0, %s223
    %s241 = sphi 0, %s241
    %s243 = sphi 0, %s241
    %s244 = sphi 0, %s243
    %s258 = sphi 0, %s244
    %s262 = sphi 0, %s262
    %s264 = sphi 0, %s262
    %s265 = sphi 0, %s264
    %s279 = sphi 0, %s265
    %s285 = sphi 0, %s287
    %s288 = sphi 0, %s285
    %s289 = sphi 0, %s288
    %s305 = sphi 0, %s289
  $region4: #{tsmix_block.1} parent=0 // loop_header_branch
    %21 = sbr.rel (%p19) target = $region8
  $region5: #{tsmix_block.1} parent=0 // loop_body
    %s23 = ssub.s32 %s18, 1
    %s24 = ssub.s32 %s18, 2
    %s25 = sadd.s32 %s18, 1
    %s26 = ssub.s32 %s18, %s25
    %p27 = scmp.eq.s32.totalorder %s26, 0
    %s29 = sadd.s32 %s28, 1
    %s30 = scalar_select %p27, %s28, %s29
    %p33 = pneg %p27
    %p34 = scmp.eq.s32.totalorder %s18, 1
    %p35 = por %p33, %p34
    %p36 = scmp.ne.s32.totalorder %s28, %s31
    %p37 = scmp.eq.s32.totalorder %s18, 0
    %p38 = por %p36, %p37
    %p39 = scmp.ne.s32.totalorder %s28, %s31
    %p40 = scmp.eq.s32.totalorder %s23, 1
    %p41 = por %p39, %p40
    %p42 = scmp.ne.s32.totalorder %s31, %s32
    %p43 = scmp.eq.s32.totalorder %s23, 0
    %p44 = por %p42, %p43
    %p45 = scmp.ne.s32.totalorder %s31, %s32
    %p46 = scmp.eq.s32.totalorder %s24, 1
    %p47 = por %p45, %p46
    %p49 = scmp.ne.s32.totalorder %s32, %s48
    %p50 = scmp.eq.s32.totalorder %s24, 0
    %p51 = por %p49, %p50
    %s53 = sadd.s32 %s52, 1
    %p56 = scmp.eq.s32.totalorder %s18, 1
    %p57 = scmp.ne.s32.totalorder %s52, %s54
    %p58 = scmp.eq.s32.totalorder %s18, 0
    %p59 = por %p57, %p58
    %p60 = scmp.ne.s32.totalorder %s52, %s54
    %p61 = scmp.eq.s32.totalorder %s23, 1
    %p62 = por %p60, %p61
    %p63 = scmp.ne.s32.totalorder %s54, %s55
    %p64 = scmp.eq.s32.totalorder %s23, 0
    %p65 = por %p63, %p64
    %p66 = scmp.ne.s32.totalorder %s54, %s55
    %p67 = scmp.eq.s32.totalorder %s24, 1
    %p68 = por %p66, %p67
    %p70 = scmp.ne.s32.totalorder %s55, %s69
    %p71 = scmp.eq.s32.totalorder %s24, 0
    %p72 = por %p70, %p71
    %s74 = sadd.s32 %s73, 1
    %p77 = scmp.eq.s32.totalorder %s18, 1
    %p78 = scmp.ne.s32.totalorder %s73, %s75
    %p79 = scmp.eq.s32.totalorder %s18, 0
    %p80 = por %p78, %p79
    %p81 = scmp.ne.s32.totalorder %s73, %s75
    %p82 = scmp.eq.s32.totalorder %s23, 1
    %p83 = por %p81, %p82
    %p84 = scmp.ne.s32.totalorder %s75, %s76
    %p85 = scmp.eq.s32.totalorder %s23, 0
    %p86 = por %p84, %p85
    %p87 = scmp.ne.s32.totalorder %s75, %s76
    %p88 = scmp.eq.s32.totalorder %s24, 1
    %p89 = por %p87, %p88
    %p91 = scmp.ne.s32.totalorder %s76, %s90
    %p92 = scmp.eq.s32.totalorder %s24, 0
    %p93 = por %p91, %p92
    %s95 = sadd.s32 %s94, 1
    %p98 = scmp.eq.s32.totalorder %s18, 1
    %p99 = scmp.ne.s32.totalorder %s94, %s96
    %p100 = scmp.eq.s32.totalorder %s18, 0
    %p101 = por %p99, %p100
    %p102 = scmp.ne.s32.totalorder %s94, %s96
    %p103 = scmp.eq.s32.totalorder %s23, 1
    %p104 = por %p102, %p103
    %p105 = scmp.ne.s32.totalorder %s96, %s97
    %p106 = scmp.eq.s32.totalorder %s23, 0
    %p107 = por %p105, %p106
    %p108 = scmp.ne.s32.totalorder %s96, %s97
    %p109 = scmp.eq.s32.totalorder %s24, 1
    %p110 = por %p108, %p109
    %p112 = scmp.ne.s32.totalorder %s97, %s111
    %p113 = scmp.eq.s32.totalorder %s24, 0
    %p114 = por %p112, %p113
    %s116 = sadd.s32 %s115, 1
    %p119 = scmp.eq.s32.totalorder %s18, 1
    %p120 = scmp.ne.s32.totalorder %s115, %s117
    %p121 = scmp.eq.s32.totalorder %s18, 0
    %p122 = por %p120, %p121
    %p123 = scmp.ne.s32.totalorder %s115, %s117
    %p124 = scmp.eq.s32.totalorder %s23, 1
    %p125 = por %p123, %p124
    %p126 = scmp.ne.s32.totalorder %s117, %s118
    %p127 = scmp.eq.s32.totalorder %s23, 0
    %p128 = por %p126, %p127
    %p129 = scmp.ne.s32.totalorder %s117, %s118
    %p130 = scmp.eq.s32.totalorder %s24, 1
    %p131 = por %p129, %p130
    %p133 = scmp.ne.s32.totalorder %s118, %s132
    %p134 = scmp.eq.s32.totalorder %s24, 0
    %p135 = por %p133, %p134
    %s137 = sadd.s32 %s136, 1
    %p140 = scmp.eq.s32.totalorder %s18, 1
    %p141 = scmp.ne.s32.totalorder %s136, %s138
    %p142 = scmp.eq.s32.totalorder %s18, 0
    %p143 = por %p141, %p142
    %p144 = scmp.ne.s32.totalorder %s136, %s138
    %p145 = scmp.eq.s32.totalorder %s23, 1
    %p146 = por %p144, %p145
    %p147 = scmp.ne.s32.totalorder %s138, %s139
    %p148 = scmp.eq.s32.totalorder %s23, 0
    %p149 = por %p147, %p148
    %p150 = scmp.ne.s32.totalorder %s138, %s139
    %p151 = scmp.eq.s32.totalorder %s24, 1
    %p152 = por %p150, %p151
    %p154 = scmp.ne.s32.totalorder %s139, %s153
    %p155 = scmp.eq.s32.totalorder %s24, 0
    %p156 = por %p154, %p155
    %s158 = sadd.s32 %s157, 1
    %p161 = scmp.eq.s32.totalorder %s18, 1
    %p162 = scmp.ne.s32.totalorder %s157, %s159
    %p163 = scmp.eq.s32.totalorder %s18, 0
    %p164 = por %p162, %p163
    %p165 = scmp.ne.s32.totalorder %s157, %s159
    %p166 = scmp.eq.s32.totalorder %s23, 1
    %p167 = por %p165, %p166
    %p168 = scmp.ne.s32.totalorder %s159, %s160
    %p169 = scmp.eq.s32.totalorder %s23, 0
    %p170 = por %p168, %p169
    %p171 = scmp.ne.s32.totalorder %s159, %s160
    %p172 = scmp.eq.s32.totalorder %s24, 1
    %p173 = por %p171, %p172
    %p175 = scmp.ne.s32.totalorder %s160, %s174
    %p176 = scmp.eq.s32.totalorder %s24, 0
    %p177 = por %p175, %p176
    %s179 = sadd.s32 %s178, 1
    %p182 = scmp.eq.s32.totalorder %s18, 1
    %p183 = scmp.ne.s32.totalorder %s178, %s180
    %p184 = scmp.eq.s32.totalorder %s18, 0
    %p185 = por %p183, %p184
    %p186 = scmp.ne.s32.totalorder %s178, %s180
    %p187 = scmp.eq.s32.totalorder %s23, 1
    %p188 = por %p186, %p187
    %p189 = scmp.ne.s32.totalorder %s180, %s181
    %p190 = scmp.eq.s32.totalorder %s23, 0
    %p191 = por %p189, %p190
    %p192 = scmp.ne.s32.totalorder %s180, %s181
    %p193 = scmp.eq.s32.totalorder %s24, 1
    %p194 = por %p192, %p193
    %p196 = scmp.ne.s32.totalorder %s181, %s195
    %p197 = scmp.eq.s32.totalorder %s24, 0
    %p198 = por %p196, %p197
    %s200 = sadd.s32 %s199, 1
    %p203 = scmp.eq.s32.totalorder %s18, 1
    %p204 = scmp.ne.s32.totalorder %s199, %s201
    %p205 = scmp.eq.s32.totalorder %s18, 0
    %p206 = por %p204, %p205
    %p207 = scmp.ne.s32.totalorder %s199, %s201
    %p208 = scmp.eq.s32.totalorder %s23, 1
    %p209 = por %p207, %p208
    %p210 = scmp.ne.s32.totalorder %s201, %s202
    %p211 = scmp.eq.s32.totalorder %s23, 0
    %p212 = por %p210, %p211
    %p213 = scmp.ne.s32.totalorder %s201, %s202
    %p214 = scmp.eq.s32.totalorder %s24, 1
    %p215 = por %p213, %p214
    %p217 = scmp.ne.s32.totalorder %s202, %s216
    %p218 = scmp.eq.s32.totalorder %s24, 0
    %p219 = por %p217, %p218
    %s221 = sadd.s32 %s220, 1
    %p224 = scmp.eq.s32.totalorder %s18, 1
    %p225 = scmp.ne.s32.totalorder %s220, %s222
    %p226 = scmp.eq.s32.totalorder %s18, 0
    %p227 = por %p225, %p226
    %p228 = scmp.ne.s32.totalorder %s220, %s222
    %p229 = scmp.eq.s32.totalorder %s23, 1
    %p230 = por %p228, %p229
    %p231 = scmp.ne.s32.totalorder %s222, %s223
    %p232 = scmp.eq.s32.totalorder %s23, 0
    %p233 = por %p231, %p232
    %p234 = scmp.ne.s32.totalorder %s222, %s223
    %p235 = scmp.eq.s32.totalorder %s24, 1
    %p236 = por %p234, %p235
    %p238 = scmp.ne.s32.totalorder %s223, %s237
    %p239 = scmp.eq.s32.totalorder %s24, 0
    %p240 = por %p238, %p239
    %s242 = sadd.s32 %s241, 1
    %p245 = scmp.eq.s32.totalorder %s18, 1
    %p246 = scmp.ne.s32.totalorder %s241, %s243
    %p247 = scmp.eq.s32.totalorder %s18, 0
    %p248 = por %p246, %p247
    %p249 = scmp.ne.s32.totalorder %s241, %s243
    %p250 = scmp.eq.s32.totalorder %s23, 1
    %p251 = por %p249, %p250
    %p252 = scmp.ne.s32.totalorder %s243, %s244
    %p253 = scmp.eq.s32.totalorder %s23, 0
    %p254 = por %p252, %p253
    %p255 = scmp.ne.s32.totalorder %s243, %s244
    %p256 = scmp.eq.s32.totalorder %s24, 1
    %p257 = por %p255, %p256
    %p259 = scmp.ne.s32.totalorder %s244, %s258
    %p260 = scmp.eq.s32.totalorder %s24, 0
    %p261 = por %p259, %p260
    %s263 = sadd.s32 %s262, 1
    %p266 = scmp.eq.s32.totalorder %s18, 1
    %p267 = scmp.ne.s32.totalorder %s262, %s264
    %p268 = scmp.eq.s32.totalorder %s18, 0
    %p269 = por %p267, %p268
    %p270 = scmp.ne.s32.totalorder %s262, %s264
    %p271 = scmp.eq.s32.totalorder %s23, 1
    %p272 = por %p270, %p271
    %p273 = scmp.ne.s32.totalorder %s264, %s265
    %p274 = scmp.eq.s32.totalorder %s23, 0
    %p275 = por %p273, %p274
    %p276 = scmp.ne.s32.totalorder %s264, %s265
    %p277 = scmp.eq.s32.totalorder %s24, 1
    %p278 = por %p276, %p277
    %p280 = scmp.ne.s32.totalorder %s265, %s279
    %p281 = scmp.eq.s32.totalorder %s24, 0
    %p282 = por %p280, %p281
    %s283 = ssub.s32 %s18, %s25
    %p284 = scmp.eq.s32.totalorder %s283, 0
    %s286 = sadd.s32 %s285, 1
    %s287 = scalar_select %p284, %s285, %s286
    %p290 = pneg %p284
    %p291 = scmp.eq.s32.totalorder %s18, 1
    %p292 = por %p290, %p291
    %p293 = scmp.ne.s32.totalorder %s285, %s288
    %p294 = scmp.eq.s32.totalorder %s18, 0
    %p295 = por %p293, %p294
    %p296 = scmp.ne.s32.totalorder %s285, %s288
    %p297 = scmp.eq.s32.totalorder %s23, 1
    %p298 = por %p296, %p297
    %p299 = scmp.ne.s32.totalorder %s288, %s289
    %p300 = scmp.eq.s32.totalorder %s23, 0
    %p301 = por %p299, %p300
    %p302 = scmp.ne.s32.totalorder %s288, %s289
    %p303 = scmp.eq.s32.totalorder %s24, 1
    %p304 = por %p302, %p303
    %p306 = scmp.ne.s32.totalorder %s289, %s305
    %p307 = scmp.eq.s32.totalorder %s24, 0
    %p308 = por %p306, %p307
    %p309 = scmp.le.s32.totalorder 1, %s18
    %p310 = scmp.lt.s32.totalorder %s18, 3
    %p311 = pnand %p309, %p310
    %p312 = pneg %p311
    // Predicated region
    $region9: #{tsmix_block.1} parent=5 // pred_check
      _
    $region10: #{tsmix_block.1} parent=5 // pred_check_branch
      %314 = sbr.rel (%p311) target = $region12
    $region11: #{tsmix_block.1} parent=5 // pred_region
      %s315 = ssub.s32 %s18, 1
      // Predicated region
      $region13: #{tsmix_block.1} parent=11 // pred_check
        %p316 = pneg %p65
      $region14: #{tsmix_block.1} parent=11 // pred_check_branch
        %318 = sbr.rel (%p316) target = $region16
      $region15: #{tsmix_block.1} parent=11 // pred_region
        _
      $region16: #{tsmix_block.1} parent=11 // pred_fallthru
        _
      // Predicated region
      $region17: #{tsmix_block.1} parent=11 // pred_check
        %p319 = pneg %p86
      $region18: #{tsmix_block.1} parent=11 // pred_check_branch
        %321 = sbr.rel (%p319) target = $region20
      $region19: #{tsmix_block.1} parent=11 // pred_region
        _
      $region20: #{tsmix_block.1} parent=11 // pred_fallthru
        _
      // Predicated region
      $region21: #{tsmix_block.1} parent=11 // pred_check
        %p322 = pneg %p107
      $region22: #{tsmix_block.1} parent=11 // pred_check_branch
        %324 = sbr.rel (%p322) target = $region24
      $region23: #{tsmix_block.1} parent=11 // pred_region
        _
      $region24: #{tsmix_block.1} parent=11 // pred_fallthru
        _
      // Predicated region
      $region25: #{tsmix_block.1} parent=11 // pred_check
        %p325 = pneg %p128
      $region26: #{tsmix_block.1} parent=11 // pred_check_branch
        %327 = sbr.rel (%p325) target = $region28
      $region27: #{tsmix_block.1} parent=11 // pred_region
        _
      $region28: #{tsmix_block.1} parent=11 // pred_fallthru
        _
      // Predicated region
      $region29: #{tsmix_block.1} parent=11 // pred_check
        %p328 = pneg %p149
      $region30: #{tsmix_block.1} parent=11 // pred_check_branch
        %330 = sbr.rel (%p328) target = $region32
      $region31: #{tsmix_block.1} parent=11 // pred_region
        _
      $region32: #{tsmix_block.1} parent=11 // pred_fallthru
        _
      // Predicated region
      $region33: #{tsmix_block.1} parent=11 // pred_check
        %p331 = pneg %p170
      $region34: #{tsmix_block.1} parent=11 // pred_check_branch
        %333 = sbr.rel (%p331) target = $region36
      $region35: #{tsmix_block.1} parent=11 // pred_region
        _
      $region36: #{tsmix_block.1} parent=11 // pred_fallthru
        _
      // Predicated region
      $region37: #{tsmix_block.1} parent=11 // pred_check
        %p334 = pneg %p191
      $region38: #{tsmix_block.1} parent=11 // pred_check_branch
        %336 = sbr.rel (%p334) target = $region40
      $region39: #{tsmix_block.1} parent=11 // pred_region
        _
      $region40: #{tsmix_block.1} parent=11 // pred_fallthru
        _
      // Predicated region
      $region41: #{tsmix_block.1} parent=11 // pred_check
        %p337 = pneg %p212
      $region42: #{tsmix_block.1} parent=11 // pred_check_branch
        %339 = sbr.rel (%p337) target = $region44
      $region43: #{tsmix_block.1} parent=11 // pred_region
        _
      $region44: #{tsmix_block.1} parent=11 // pred_fallthru
        _
      // Predicated region
      $region45: #{tsmix_block.1} parent=11 // pred_check
        %p340 = pneg %p233
      $region46: #{tsmix_block.1} parent=11 // pred_check_branch
        %342 = sbr.rel (%p340) target = $region48
      $region47: #{tsmix_block.1} parent=11 // pred_region
        _
      $region48: #{tsmix_block.1} parent=11 // pred_fallthru
        _
      // Predicated region
      $region49: #{tsmix_block.1} parent=11 // pred_check
        %p343 = pneg %p254
      $region50: #{tsmix_block.1} parent=11 // pred_check_branch
        %345 = sbr.rel (%p343) target = $region52
      $region51: #{tsmix_block.1} parent=11 // pred_region
        _
      $region52: #{tsmix_block.1} parent=11 // pred_fallthru
        _
      // Predicated region
      $region53: #{tsmix_block.1} parent=11 // pred_check
        %p346 = pneg %p275
      $region54: #{tsmix_block.1} parent=11 // pred_check_branch
        %348 = sbr.rel (%p346) target = $region56
      $region55: #{tsmix_block.1} parent=11 // pred_region
        _
      $region56: #{tsmix_block.1} parent=11 // pred_fallthru
        _
    $region12: #{tsmix_block.1} parent=5 // pred_fallthru
      _
    %p349 = scmp.lt.s32.totalorder %s18, 2
    // Predicated region
    $region57: #{tsmix_block.1} parent=5 // pred_check
      %p350 = pneg %p349
    $region58: #{tsmix_block.1} parent=5 // pred_check_branch
      %352 = sbr.rel (%p350) target = $region60
    $region59: #{tsmix_block.1} parent=5 // pred_region
      // Predicated region
      $region61: #{tsmix_block.1} parent=59 // pred_check
        %p353 = pneg %p38
      $region62: #{tsmix_block.1} parent=59 // pred_check_branch
        %355 = sbr.rel (%p353) target = $region64
      $region63: #{tsmix_block.1} parent=59 // pred_region
        %s356 = smul.u32 16, %s18
        %p357 = scmp.lt.s32.totalorder %s356, 31
        %s358 = scalar_select %p357, %s356, 31
        %s359 = smul.addr %s358, 8
        %s360 = scalar_lea.vmem %s0, %s359
        %s361 = smul.u32 16, %s18
      $region64: #{tsmix_block.1} parent=59 // pred_fallthru
        _
    $region60: #{tsmix_block.1} parent=5 // pred_fallthru
      _
    %p362 = scmp.le.s32.totalorder 1, %s18
    %p363 = scmp.lt.s32.totalorder %s18, 3
    %p364 = pnand %p362, %p363
    %p365 = pneg %p364
    // Predicated region
    $region65: #{tsmix_block.1} parent=5 // pred_check
      _
    $region66: #{tsmix_block.1} parent=5 // pred_check_branch
      %367 = sbr.rel (%p364) target = $region68
    $region67: #{tsmix_block.1} parent=5 // pred_region
      %s368 = ssub.s32 %s18, 1
      %s369 = smul.u32 16, %s23
      %p370 = scmp.lt.s32.totalorder %s369, 31
      %s371 = scalar_select %p370, %s369, 31
      %s372 = smul.addr %s371, 8
      %s373 = scalar_lea.vmem %s0, %s372
      %p374 = pneg %p44
      %p375 = pneg %p41
      %p376 = pneg %p65
      %p377 = pneg %p62
      %p378 = pneg %p86
      %p379 = pneg %p83
      %p380 = pneg %p107
      %p381 = pneg %p104
      %p382 = pneg %p128
      %p383 = pneg %p125
      %p384 = pneg %p149
      %p385 = pneg %p146
      %p386 = pneg %p170
      %p387 = pneg %p167
      %p388 = pneg %p191
      %p389 = pneg %p188
      %p390 = pneg %p212
      %p391 = pneg %p209
      %p392 = pneg %p233
      %p393 = pneg %p230
      %p394 = pneg %p254
      %p395 = pneg %p251
      %p396 = pneg %p275
      %p397 = pneg %p272
      %p398 = pneg %p301
      %p399 = pneg %p298
      %s400 = smul.u32 16, %s23
      %p401 = scmp.lt.s32.totalorder %s400, 31
      %s402 = scalar_select %p401, %s400, 31
      %s403 = smul.addr %s402, 8
      %s404 = scalar_lea.vmem %s12, %s403
      %s405 = smul.u32 16, %s23
      %p406 = scmp.lt.s32.totalorder %s405, 31
      %s407 = scalar_select %p406, %s405, 31
      %s408 = smul.addr %s407, 8
      %s409 = scalar_lea.vmem %s0, %s408
      %s410 = smul.u32 16, %s23
      %s411 = smul.u32 16, %s23
      %p412 = scmp.lt.s32.totalorder %s411, 31
      %s413 = scalar_select %p412, %s411, 31
      %s414 = smul.addr %s413, 8
      %s415 = scalar_lea.vmem %s12, %s414
      %s416 = smul.u32 16, %s23
      %v417 = vld [vmem:[%s409] sm:$0xff]
      %v418 = vld [vmem:[%s409 + $0x8] sm:$0xff]
      %v419 = vld [vmem:[%s409 + $0x10] sm:$0xff]
      %v420 = vld [vmem:[%s409 + $0x18] sm:$0xff]
      %v421 = vld [vmem:[%s409 + $0x20] sm:$0xff]
      %v422 = vld [vmem:[%s409 + $0x28] sm:$0xff]
      %v423 = vld [vmem:[%s409 + $0x30] sm:$0xff]
      %v424 = vld [vmem:[%s409 + $0x38] sm:$0xff]
      %v425 = vld [vmem:[%s409 + $0x40] sm:$0xff]
      %v426 = vld [vmem:[%s409 + $0x48] sm:$0xff]
      %v427 = vld [vmem:[%s409 + $0x50] sm:$0xff]
      %v428 = vld [vmem:[%s409 + $0x58] sm:$0xff]
      %v429 = vld [vmem:[%s409 + $0x60] sm:$0xff]
      %v430 = vld [vmem:[%s409 + $0x68] sm:$0xff]
      %v431 = vld [vmem:[%s409 + $0x70] sm:$0xff]
      %v432 = vld [vmem:[%s409 + $0x78] sm:$0xff]
      %v433 = vld [vmem:[%s11] sm:$0xf]
      %v434 = vld [vmem:[%s11 + $0x4] sm:$0xf]
      %v435 = vld [vmem:[%s11 + $0x8] sm:$0xf]
      %v436 = vld [vmem:[%s11 + $0xc] sm:$0xf]
      %v437 = vld [vmem:[%s11 + $0x10] sm:$0xf]
      %v438 = vld [vmem:[%s11 + $0x14] sm:$0xf]
      %v439 = vld [vmem:[%s11 + $0x18] sm:$0xf]
      %v440 = vld [vmem:[%s11 + $0x1c] sm:$0xf]
      %v441 = vld [vmem:[%s11 + $0x20] sm:$0xf]
      %v442 = vld [vmem:[%s11 + $0x24] sm:$0xf]
      %v443 = vld [vmem:[%s11 + $0x28] sm:$0xf]
      %v444 = vld [vmem:[%s11 + $0x2c] sm:$0xf]
      %v445 = vld [vmem:[%s11 + $0x30] sm:$0xf]
      %v446 = vld [vmem:[%s11 + $0x34] sm:$0xf]
      %v447 = vld [vmem:[%s11 + $0x38] sm:$0xf]
      %v448 = vld [vmem:[%s11 + $0x3c] sm:$0xf]
      %v449 = vmul.f32 %v417, %v417
      %v450 = vmul.f32 %v418, %v418
      %v451 = vmul.f32 %v419, %v419
      %v452 = vmul.f32 %v420, %v420
      %v453 = vmul.f32 %v421, %v421
      %v454 = vmul.f32 %v422, %v422
      %v455 = vmul.f32 %v423, %v423
      %v456 = vmul.f32 %v424, %v424
      %v457 = vmul.f32 %v425, %v425
      %v458 = vmul.f32 %v426, %v426
      %v459 = vmul.f32 %v427, %v427
      %v460 = vmul.f32 %v428, %v428
      %v461 = vmul.f32 %v429, %v429
      %v462 = vmul.f32 %v430, %v430
      %v463 = vmul.f32 %v431, %v431
      %v464 = vmul.f32 %v432, %v432
      %v465 = vpack.c.bf16 %v418, %v417
      %v466 = vpack.c.bf16 %v420, %v419
      %v467 = vpack.c.bf16 %v422, %v421
      %v468 = vpack.c.bf16 %v424, %v423
      %v469 = vpack.c.bf16 %v426, %v425
      %v470 = vpack.c.bf16 %v428, %v427
      %v471 = vpack.c.bf16 %v430, %v429
      %v472 = vpack.c.bf16 %v432, %v431
      %v473 = vpack.c.bf16 %v450, %v449
      %v474 = vpack.c.bf16 %v452, %v451
      %v475 = vpack.c.bf16 %v454, %v453
      %v476 = vpack.c.bf16 %v456, %v455
      %v477 = vpack.c.bf16 %v458, %v457
      %v478 = vpack.c.bf16 %v460, %v459
      %v479 = vpack.c.bf16 %v462, %v461
      %v480 = vpack.c.bf16 %v464, %v463
      %v497 = vunpack.c.l.b16 %v433
      %v498 = vunpack.c.l.b16 %v434
      %v499 = vunpack.c.l.b16 %v435
      %v500 = vunpack.c.l.b16 %v436
      %v501 = vunpack.c.l.b16 %v437
      %v502 = vunpack.c.l.b16 %v438
      %v503 = vunpack.c.l.b16 %v439
      %v504 = vunpack.c.l.b16 %v440
      %v505 = vunpack.c.l.b16 %v441
      %v506 = vunpack.c.l.b16 %v442
      %v507 = vunpack.c.l.b16 %v443
      %v508 = vunpack.c.l.b16 %v444
      %v509 = vunpack.c.l.b16 %v445
      %v510 = vunpack.c.l.b16 %v446
      %v511 = vunpack.c.l.b16 %v447
      %v512 = vunpack.c.l.b16 %v448
      %v513 = vpack.c.b16 %v498, %v497
      %v514 = vpack.c.b16 %v500, %v499
      %v515 = vpack.c.b16 %v502, %v501
      %v516 = vpack.c.b16 %v504, %v503
      %v517 = vpack.c.b16 %v506, %v505
      %v518 = vpack.c.b16 %v508, %v507
      %v519 = vpack.c.b16 %v510, %v509
      %v520 = vpack.c.b16 %v512, %v511
      %529 = vmatpush.bf16.msra.mxu0 %v520
      %530 = vmatpush.bf16.msra.mxu0 %v519
      %531 = vmatpush.bf16.msra.mxu0 %v518
      %532 = vmatpush.bf16.msra.mxu0 %v517
      %533 = vmatpush.bf16.msra.mxu0 %v516
      %534 = vmatpush.bf16.msra.mxu0 %v515
      %535 = vmatpush.bf16.msra.mxu0 %v514
      %536 = vmatpush.bf16.msra.mxu0 %v513
      %537 = vmatmul.bf16.gmra.mxu0 %v465
      %v538 = vpop.f32.mrf.mxu0
      %v539 = vadd.f32 0.0, %v538
      %v540 = vpop.f32.mrf.mxu0
      %v541 = vadd.f32 0.0, %v540
      %542 = vmatmul.bf16.gmra.mxu0 %v466
      %v543 = vpop.f32.mrf.mxu0
      %v544 = vadd.f32 0.0, %v543
      %v545 = vpop.f32.mrf.mxu0
      %v546 = vadd.f32 0.0, %v545
      %547 = vmatmul.bf16.gmra.mxu0 %v467
      %v548 = vpop.f32.mrf.mxu0
      %v549 = vadd.f32 0.0, %v548
      %v550 = vpop.f32.mrf.mxu0
      %v551 = vadd.f32 0.0, %v550
      %552 = vmatmul.bf16.gmra.mxu0 %v468
      %v553 = vpop.f32.mrf.mxu0
      %v554 = vadd.f32 0.0, %v553
      %v555 = vpop.f32.mrf.mxu0
      %v556 = vadd.f32 0.0, %v555
      %557 = vmatmul.bf16.gmra.mxu0 %v469
      %v558 = vpop.f32.mrf.mxu0
      %v559 = vadd.f32 0.0, %v558
      %v560 = vpop.f32.mrf.mxu0
      %v561 = vadd.f32 0.0, %v560
      %562 = vmatmul.bf16.gmra.mxu0 %v470
      %v563 = vpop.f32.mrf.mxu0
      %v564 = vadd.f32 0.0, %v563
      %v565 = vpop.f32.mrf.mxu0
      %v566 = vadd.f32 0.0, %v565
      %567 = vmatmul.bf16.gmra.mxu0 %v471
      %v568 = vpop.f32.mrf.mxu0
      %v569 = vadd.f32 0.0, %v568
      %v570 = vpop.f32.mrf.mxu0
      %v571 = vadd.f32 0.0, %v570
      %572 = vmatmul.bf16.gmra.mxu0 %v472
      %v573 = vpop.f32.mrf.mxu0
      %v574 = vadd.f32 0.0, %v573
      %v575 = vpop.f32.mrf.mxu0
      %v576 = vadd.f32 0.0, %v575
      %577 = vmatmul.bf16.gmra.mxu0 %v473
      %v578 = vpop.f32.mrf.mxu0
      %v579 = vadd.f32 0.0, %v578
      %v580 = vpop.f32.mrf.mxu0
      %v581 = vadd.f32 0.0, %v580
      %582 = vmatmul.bf16.gmra.mxu0 %v474
      %v583 = vpop.f32.mrf.mxu0
      %v584 = vadd.f32 0.0, %v583
      %v585 = vpop.f32.mrf.mxu0
      %v586 = vadd.f32 0.0, %v585
      %587 = vmatmul.bf16.gmra.mxu0 %v475
      %v588 = vpop.f32.mrf.mxu0
      %v589 = vadd.f32 0.0, %v588
      %v590 = vpop.f32.mrf.mxu0
      %v591 = vadd.f32 0.0, %v590
      %592 = vmatmul.bf16.gmra.mxu0 %v476
      %v593 = vpop.f32.mrf.mxu0
      %v594 = vadd.f32 0.0, %v593
      %v595 = vpop.f32.mrf.mxu0
      %v596 = vadd.f32 0.0, %v595
      %597 = vmatmul.bf16.gmra.mxu0 %v477
      %v598 = vpop.f32.mrf.mxu0
      %v599 = vadd.f32 0.0, %v598
      %v600 = vpop.f32.mrf.mxu0
      %v601 = vadd.f32 0.0, %v600
      %602 = vmatmul.bf16.gmra.mxu0 %v478
      %v603 = vpop.f32.mrf.mxu0
      %v604 = vadd.f32 0.0, %v603
      %v605 = vpop.f32.mrf.mxu0
      %v606 = vadd.f32 0.0, %v605
      %607 = vmatmul.bf16.gmra.mxu0 %v479
      %v608 = vpop.f32.mrf.mxu0
      %v609 = vadd.f32 0.0, %v608
      %v610 = vpop.f32.mrf.mxu0
      %v611 = vadd.f32 0.0, %v610
      %612 = vmatmul.bf16.gmra.mxu0 %v480
      %v613 = vpop.f32.mrf.mxu0
      %v614 = vadd.f32 0.0, %v613
      %v615 = vpop.f32.mrf.mxu0
      %v616 = vadd.f32 0.0, %v615
      %617 = vdwg.mxu0
      %v618 = vrot.slane %v539, 4
      %v619 = vadd.f32 %v539, %v618
      %v620 = vrot.slane %v619, 2
      %v621 = vadd.f32 %v619, %v620
      %v622 = vrot.slane %v621, 1
      %v623 = vadd.f32 %v621, %v622
      %v624 = vrot.slane %v541, 4
      %v625 = vadd.f32 %v541, %v624
      %v626 = vrot.slane %v625, 2
      %v627 = vadd.f32 %v625, %v626
      %v628 = vrot.slane %v627, 1
      %v629 = vadd.f32 %v627, %v628
      %v630 = vrot.slane %v544, 4
      %v631 = vadd.f32 %v544, %v630
      %v632 = vrot.slane %v631, 2
      %v633 = vadd.f32 %v631, %v632
      %v634 = vrot.slane %v633, 1
      %v635 = vadd.f32 %v633, %v634
      %v636 = vrot.slane %v546, 4
      %v637 = vadd.f32 %v546, %v636
      %v638 = vrot.slane %v637, 2
      %v639 = vadd.f32 %v637, %v638
      %v640 = vrot.slane %v639, 1
      %v641 = vadd.f32 %v639, %v640
      %v642 = vrot.slane %v549, 4
      %v643 = vadd.f32 %v549, %v642
      %v644 = vrot.slane %v643, 2
      %v645 = vadd.f32 %v643, %v644
      %v646 = vrot.slane %v645, 1
      %v647 = vadd.f32 %v645, %v646
      %v648 = vrot.slane %v551, 4
      %v649 = vadd.f32 %v551, %v648
      %v650 = vrot.slane %v649, 2
      %v651 = vadd.f32 %v649, %v650
      %v652 = vrot.slane %v651, 1
      %v653 = vadd.f32 %v651, %v652
      %v654 = vrot.slane %v554, 4
      %v655 = vadd.f32 %v554, %v654
      %v656 = vrot.slane %v655, 2
      %v657 = vadd.f32 %v655, %v656
      %v658 = vrot.slane %v657, 1
      %v659 = vadd.f32 %v657, %v658
      %v660 = vrot.slane %v556, 4
      %v661 = vadd.f32 %v556, %v660
      %v662 = vrot.slane %v661, 2
      %v663 = vadd.f32 %v661, %v662
      %v664 = vrot.slane %v663, 1
      %v665 = vadd.f32 %v663, %v664
      %v666 = vrot.slane %v559, 4
      %v667 = vadd.f32 %v559, %v666
      %v668 = vrot.slane %v667, 2
      %v669 = vadd.f32 %v667, %v668
      %v670 = vrot.slane %v669, 1
      %v671 = vadd.f32 %v669, %v670
      %v672 = vrot.slane %v561, 4
      %v673 = vadd.f32 %v561, %v672
      %v674 = vrot.slane %v673, 2
      %v675 = vadd.f32 %v673, %v674
      %v676 = vrot.slane %v675, 1
      %v677 = vadd.f32 %v675, %v676
      %v678 = vrot.slane %v564, 4
      %v679 = vadd.f32 %v564, %v678
      %v680 = vrot.slane %v679, 2
      %v681 = vadd.f32 %v679, %v680
      %v682 = vrot.slane %v681, 1
      %v683 = vadd.f32 %v681, %v682
      %v684 = vrot.slane %v566, 4
      %v685 = vadd.f32 %v566, %v684
      %v686 = vrot.slane %v685, 2
      %v687 = vadd.f32 %v685, %v686
      %v688 = vrot.slane %v687, 1
      %v689 = vadd.f32 %v687, %v688
      %v690 = vrot.slane %v569, 4
      %v691 = vadd.f32 %v569, %v690
      %v692 = vrot.slane %v691, 2
      %v693 = vadd.f32 %v691, %v692
      %v694 = vrot.slane %v693, 1
      %v695 = vadd.f32 %v693, %v694
      %v696 = vrot.slane %v571, 4
      %v697 = vadd.f32 %v571, %v696
      %v698 = vrot.slane %v697, 2
      %v699 = vadd.f32 %v697, %v698
      %v700 = vrot.slane %v699, 1
      %v701 = vadd.f32 %v699, %v700
      %v702 = vrot.slane %v574, 4
      %v703 = vadd.f32 %v574, %v702
      %v704 = vrot.slane %v703, 2
      %v705 = vadd.f32 %v703, %v704
      %v706 = vrot.slane %v705, 1
      %v707 = vadd.f32 %v705, %v706
      %v708 = vrot.slane %v576, 4
      %v709 = vadd.f32 %v576, %v708
      %v710 = vrot.slane %v709, 2
      %v711 = vadd.f32 %v709, %v710
      %v712 = vrot.slane %v711, 1
      %v713 = vadd.f32 %v711, %v712
      %v714 = vmul.f32 %v623, 0.03125
      %v715 = vmul.f32 %v629, 0.03125
      %v716 = vmul.f32 %v635, 0.03125
      %v717 = vmul.f32 %v641, 0.03125
      %v718 = vmul.f32 %v647, 0.03125
      %v719 = vmul.f32 %v653, 0.03125
      %v720 = vmul.f32 %v659, 0.03125
      %v721 = vmul.f32 %v665, 0.03125
      %v722 = vmul.f32 %v671, 0.03125
      %v723 = vmul.f32 %v677, 0.03125
      %v724 = vmul.f32 %v683, 0.03125
      %v725 = vmul.f32 %v689, 0.03125
      %v726 = vmul.f32 %v695, 0.03125
      %v727 = vmul.f32 %v701, 0.03125
      %v728 = vmul.f32 %v707, 0.03125
      %v729 = vmul.f32 %v713, 0.03125
      %v730 = vrot.slane %v579, 4
      %v731 = vadd.f32 %v579, %v730
      %v732 = vrot.slane %v731, 2
      %v733 = vadd.f32 %v731, %v732
      %v734 = vrot.slane %v733, 1
      %v735 = vadd.f32 %v733, %v734
      %v736 = vrot.slane %v581, 4
      %v737 = vadd.f32 %v581, %v736
      %v738 = vrot.slane %v737, 2
      %v739 = vadd.f32 %v737, %v738
      %v740 = vrot.slane %v739, 1
      %v741 = vadd.f32 %v739, %v740
      %v742 = vrot.slane %v584, 4
      %v743 = vadd.f32 %v584, %v742
      %v744 = vrot.slane %v743, 2
      %v745 = vadd.f32 %v743, %v744
      %v746 = vrot.slane %v745, 1
      %v747 = vadd.f32 %v745, %v746
      %v748 = vrot.slane %v586, 4
      %v749 = vadd.f32 %v586, %v748
      %v750 = vrot.slane %v749, 2
      %v751 = vadd.f32 %v749, %v750
      %v752 = vrot.slane %v751, 1
      %v753 = vadd.f32 %v751, %v752
      %v754 = vrot.slane %v589, 4
      %v755 = vadd.f32 %v589, %v754
      %v756 = vrot.slane %v755, 2
      %v757 = vadd.f32 %v755, %v756
      %v758 = vrot.slane %v757, 1
      %v759 = vadd.f32 %v757, %v758
      %v760 = vrot.slane %v591, 4
      %v761 = vadd.f32 %v591, %v760
      %v762 = vrot.slane %v761, 2
      %v763 = vadd.f32 %v761, %v762
      %v764 = vrot.slane %v763, 1
      %v765 = vadd.f32 %v763, %v764
      %v766 = vrot.slane %v594, 4
      %v767 = vadd.f32 %v594, %v766
      %v768 = vrot.slane %v767, 2
      %v769 = vadd.f32 %v767, %v768
      %v770 = vrot.slane %v769, 1
      %v771 = vadd.f32 %v769, %v770
      %v772 = vrot.slane %v596, 4
      %v773 = vadd.f32 %v596, %v772
      %v774 = vrot.slane %v773, 2
      %v775 = vadd.f32 %v773, %v774
      %v776 = vrot.slane %v775, 1
      %v777 = vadd.f32 %v775, %v776
      %v778 = vrot.slane %v599, 4
      %v779 = vadd.f32 %v599, %v778
      %v780 = vrot.slane %v779, 2
      %v781 = vadd.f32 %v779, %v780
      %v782 = vrot.slane %v781, 1
      %v783 = vadd.f32 %v781, %v782
      %v784 = vrot.slane %v601, 4
      %v785 = vadd.f32 %v601, %v784
      %v786 = vrot.slane %v785, 2
      %v787 = vadd.f32 %v785, %v786
      %v788 = vrot.slane %v787, 1
      %v789 = vadd.f32 %v787, %v788
      %v790 = vrot.slane %v604, 4
      %v791 = vadd.f32 %v604, %v790
      %v792 = vrot.slane %v791, 2
      %v793 = vadd.f32 %v791, %v792
      %v794 = vrot.slane %v793, 1
      %v795 = vadd.f32 %v793, %v794
      %v796 = vrot.slane %v606, 4
      %v797 = vadd.f32 %v606, %v796
      %v798 = vrot.slane %v797, 2
      %v799 = vadd.f32 %v797, %v798
      %v800 = vrot.slane %v799, 1
      %v801 = vadd.f32 %v799, %v800
      %v802 = vrot.slane %v609, 4
      %v803 = vadd.f32 %v609, %v802
      %v804 = vrot.slane %v803, 2
      %v805 = vadd.f32 %v803, %v804
      %v806 = vrot.slane %v805, 1
      %v807 = vadd.f32 %v805, %v806
      %v808 = vrot.slane %v611, 4
      %v809 = vadd.f32 %v611, %v808
      %v810 = vrot.slane %v809, 2
      %v811 = vadd.f32 %v809, %v810
      %v812 = vrot.slane %v811, 1
      %v813 = vadd.f32 %v811, %v812
      %v814 = vrot.slane %v614, 4
      %v815 = vadd.f32 %v614, %v814
      %v816 = vrot.slane %v815, 2
      %v817 = vadd.f32 %v815, %v816
      %v818 = vrot.slane %v817, 1
      %v819 = vadd.f32 %v817, %v818
      %v820 = vrot.slane %v616, 4
      %v821 = vadd.f32 %v616, %v820
      %v822 = vrot.slane %v821, 2
      %v823 = vadd.f32 %v821, %v822
      %v824 = vrot.slane %v823, 1
      %v825 = vadd.f32 %v823, %v824
      %v826 = vmul.f32 %v735, 0.03125
      %v827 = vmul.f32 %v741, 0.03125
      %v828 = vmul.f32 %v747, 0.03125
      %v829 = vmul.f32 %v753, 0.03125
      %v830 = vmul.f32 %v759, 0.03125
      %v831 = vmul.f32 %v765, 0.03125
      %v832 = vmul.f32 %v771, 0.03125
      %v833 = vmul.f32 %v777, 0.03125
      %v834 = vmul.f32 %v783, 0.03125
      %v835 = vmul.f32 %v789, 0.03125
      %v836 = vmul.f32 %v795, 0.03125
      %v837 = vmul.f32 %v801, 0.03125
      %v838 = vmul.f32 %v807, 0.03125
      %v839 = vmul.f32 %v813, 0.03125
      %v840 = vmul.f32 %v819, 0.03125
      %v841 = vmul.f32 %v825, 0.03125
      %v842 = vmul.f32 %v714, %v714
      %v843 = vmul.f32 %v715, %v715
      %v844 = vmul.f32 %v716, %v716
      %v845 = vmul.f32 %v717, %v717
      %v846 = vmul.f32 %v718, %v718
      %v847 = vmul.f32 %v719, %v719
      %v848 = vmul.f32 %v720, %v720
      %v849 = vmul.f32 %v721, %v721
      %v850 = vmul.f32 %v722, %v722
      %v851 = vmul.f32 %v723, %v723
      %v852 = vmul.f32 %v724, %v724
      %v853 = vmul.f32 %v725, %v725
      %v854 = vmul.f32 %v726, %v726
      %v855 = vmul.f32 %v727, %v727
      %v856 = vmul.f32 %v728, %v728
      %v857 = vmul.f32 %v729, %v729
      %v858 = vsub.f32 %v826, %v842
      %v859 = vsub.f32 %v827, %v843
      %v860 = vsub.f32 %v828, %v844
      %v861 = vsub.f32 %v829, %v845
      %v862 = vsub.f32 %v830, %v846
      %v863 = vsub.f32 %v831, %v847
      %v864 = vsub.f32 %v832, %v848
      %v865 = vsub.f32 %v833, %v849
      %v866 = vsub.f32 %v834, %v850
      %v867 = vsub.f32 %v835, %v851
      %v868 = vsub.f32 %v836, %v852
      %v869 = vsub.f32 %v837, %v853
      %v870 = vsub.f32 %v838, %v854
      %v871 = vsub.f32 %v839, %v855
      %v872 = vsub.f32 %v840, %v856
      %v873 = vsub.f32 %v841, %v857
      %v874 = vmax.f32 %v858, 0.0
      %v875 = vmax.f32 %v859, 0.0
      %v876 = vmax.f32 %v860, 0.0
      %v877 = vmax.f32 %v861, 0.0
      %v878 = vmax.f32 %v862, 0.0
      %v879 = vmax.f32 %v863, 0.0
      %v880 = vmax.f32 %v864, 0.0
      %v881 = vmax.f32 %v865, 0.0
      %v882 = vmax.f32 %v866, 0.0
      %v883 = vmax.f32 %v867, 0.0
      %v884 = vmax.f32 %v868, 0.0
      %v885 = vmax.f32 %v869, 0.0
      %v886 = vmax.f32 %v870, 0.0
      %v887 = vmax.f32 %v871, 0.0
      %v888 = vmax.f32 %v872, 0.0
      %v889 = vmax.f32 %v873, 0.0
      %v890 = vsub.f32 %v417, %v714
      %v891 = vsub.f32 %v418, %v715
      %v892 = vsub.f32 %v419, %v716
      %v893 = vsub.f32 %v420, %v717
      %v894 = vsub.f32 %v421, %v718
      %v895 = vsub.f32 %v422, %v719
      %v896 = vsub.f32 %v423, %v720
      %v897 = vsub.f32 %v424, %v721
      %v898 = vsub.f32 %v425, %v722
      %v899 = vsub.f32 %v426, %v723
      %v900 = vsub.f32 %v427, %v724
      %v901 = vsub.f32 %v428, %v725
      %v902 = vsub.f32 %v429, %v726
      %v903 = vsub.f32 %v430, %v727
      %v904 = vsub.f32 %v431, %v728
      %v905 = vsub.f32 %v432, %v729
      %v906 = vadd.f32 %v874, 1e-05
      %v907 = vadd.f32 %v875, 1e-05
      %v908 = vadd.f32 %v876, 1e-05
      %v909 = vadd.f32 %v877, 1e-05
      %v910 = vadd.f32 %v878, 1e-05
      %v911 = vadd.f32 %v879, 1e-05
      %v912 = vadd.f32 %v880, 1e-05
      %v913 = vadd.f32 %v881, 1e-05
      %v914 = vadd.f32 %v882, 1e-05
      %v915 = vadd.f32 %v883, 1e-05
      %v916 = vadd.f32 %v884, 1e-05
      %v917 = vadd.f32 %v885, 1e-05
      %v918 = vadd.f32 %v886, 1e-05
      %v919 = vadd.f32 %v887, 1e-05
      %v920 = vadd.f32 %v888, 1e-05
      %v921 = vadd.f32 %v889, 1e-05
      %v922 = vrsqrt.pop %v906
      %v923 = vmul.f32 %v922, %v906
      %v924 = vmul.f32 %v923, %v922
      %v925 = vmul.f32 0.5, %v924
      %v926 = vsub.f32 1.5, %v925
      %v927 = vmul.f32 %v922, %v926
      %vm928 = vweird.f32 %v906
      %vm929 = vweird.f32 %v922
      %vm930 = vmor %vm928, %vm929
      %v931 = vsel %vm930, %v922, %v927
      %v932 = vrsqrt.pop %v907
      %v933 = vmul.f32 %v932, %v907
      %v934 = vmul.f32 %v933, %v932
      %v935 = vmul.f32 0.5, %v934
      %v936 = vsub.f32 1.5, %v935
      %v937 = vmul.f32 %v932, %v936
      %vm938 = vweird.f32 %v907
      %vm939 = vweird.f32 %v932
      %vm940 = vmor %vm938, %vm939
      %v941 = vsel %vm940, %v932, %v937
      %v942 = vrsqrt.pop %v908
      %v943 = vmul.f32 %v942, %v908
      %v944 = vmul.f32 %v943, %v942
      %v945 = vmul.f32 0.5, %v944
      %v946 = vsub.f32 1.5, %v945
      %v947 = vmul.f32 %v942, %v946
      %vm948 = vweird.f32 %v908
      %vm949 = vweird.f32 %v942
      %vm950 = vmor %vm948, %vm949
      %v951 = vsel %vm950, %v942, %v947
      %v952 = vrsqrt.pop %v909
      %v953 = vmul.f32 %v952, %v909
      %v954 = vmul.f32 %v953, %v952
      %v955 = vmul.f32 0.5, %v954
      %v956 = vsub.f32 1.5, %v955
      %v957 = vmul.f32 %v952, %v956
      %vm958 = vweird.f32 %v909
      %vm959 = vweird.f32 %v952
      %vm960 = vmor %vm958, %vm959
      %v961 = vsel %vm960, %v952, %v957
      %v962 = vrsqrt.pop %v910
      %v963 = vmul.f32 %v962, %v910
      %v964 = vmul.f32 %v963, %v962
      %v965 = vmul.f32 0.5, %v964
      %v966 = vsub.f32 1.5, %v965
      %v967 = vmul.f32 %v962, %v966
      %vm968 = vweird.f32 %v910
      %vm969 = vweird.f32 %v962
      %vm970 = vmor %vm968, %vm969
      %v971 = vsel %vm970, %v962, %v967
      %v972 = vrsqrt.pop %v911
      %v973 = vmul.f32 %v972, %v911
      %v974 = vmul.f32 %v973, %v972
      %v975 = vmul.f32 0.5, %v974
      %v976 = vsub.f32 1.5, %v975
      %v977 = vmul.f32 %v972, %v976
      %vm978 = vweird.f32 %v911
      %vm979 = vweird.f32 %v972
      %vm980 = vmor %vm978, %vm979
      %v981 = vsel %vm980, %v972, %v977
      %v982 = vrsqrt.pop %v912
      %v983 = vmul.f32 %v982, %v912
      %v984 = vmul.f32 %v983, %v982
      %v985 = vmul.f32 0.5, %v984
      %v986 = vsub.f32 1.5, %v985
      %v987 = vmul.f32 %v982, %v986
      %vm988 = vweird.f32 %v912
      %vm989 = vweird.f32 %v982
      %vm990 = vmor %vm988, %vm989
      %v991 = vsel %vm990, %v982, %v987
      %v992 = vrsqrt.pop %v913
      %v993 = vmul.f32 %v992, %v913
      %v994 = vmul.f32 %v993, %v992
      %v995 = vmul.f32 0.5, %v994
      %v996 = vsub.f32 1.5, %v995
      %v997 = vmul.f32 %v992, %v996
      %vm998 = vweird.f32 %v913
      %vm999 = vweird.f32 %v992
      %vm1000 = vmor %vm998, %vm999
      %v1001 = vsel %vm1000, %v992, %v997
      %v1002 = vrsqrt.pop %v914
      %v1003 = vmul.f32 %v1002, %v914
      %v1004 = vmul.f32 %v1003, %v1002
      %v1005 = vmul.f32 0.5, %v1004
      %v1006 = vsub.f32 1.5, %v1005
      %v1007 = vmul.f32 %v1002, %v1006
      %vm1008 = vweird.f32 %v914
      %vm1009 = vweird.f32 %v1002
      %vm1010 = vmor %vm1008, %vm1009
      %v1011 = vsel %vm1010, %v1002, %v1007
      %v1012 = vrsqrt.pop %v915
      %v1013 = vmul.f32 %v1012, %v915
      %v1014 = vmul.f32 %v1013, %v1012
      %v1015 = vmul.f32 0.5, %v1014
      %v1016 = vsub.f32 1.5, %v1015
      %v1017 = vmul.f32 %v1012, %v1016
      %vm1018 = vweird.f32 %v915
      %vm1019 = vweird.f32 %v1012
      %vm1020 = vmor %vm1018, %vm1019
      %v1021 = vsel %vm1020, %v1012, %v1017
      %v1022 = vrsqrt.pop %v916
      %v1023 = vmul.f32 %v1022, %v916
      %v1024 = vmul.f32 %v1023, %v1022
      %v1025 = vmul.f32 0.5, %v1024
      %v1026 = vsub.f32 1.5, %v1025
      %v1027 = vmul.f32 %v1022, %v1026
      %vm1028 = vweird.f32 %v916
      %vm1029 = vweird.f32 %v1022
      %vm1030 = vmor %vm1028, %vm1029
      %v1031 = vsel %vm1030, %v1022, %v1027
      %v1032 = vrsqrt.pop %v917
      %v1033 = vmul.f32 %v1032, %v917
      %v1034 = vmul.f32 %v1033, %v1032
      %v1035 = vmul.f32 0.5, %v1034
      %v1036 = vsub.f32 1.5, %v1035
      %v1037 = vmul.f32 %v1032, %v1036
      %vm1038 = vweird.f32 %v917
      %vm1039 = vweird.f32 %v1032
      %vm1040 = vmor %vm1038, %vm1039
      %v1041 = vsel %vm1040, %v1032, %v1037
      %v1042 = vrsqrt.pop %v918
      %v1043 = vmul.f32 %v1042, %v918
      %v1044 = vmul.f32 %v1043, %v1042
      %v1045 = vmul.f32 0.5, %v1044
      %v1046 = vsub.f32 1.5, %v1045
      %v1047 = vmul.f32 %v1042, %v1046
      %vm1048 = vweird.f32 %v918
      %vm1049 = vweird.f32 %v1042
      %vm1050 = vmor %vm1048, %vm1049
      %v1051 = vsel %vm1050, %v1042, %v1047
      %v1052 = vrsqrt.pop %v919
      %v1053 = vmul.f32 %v1052, %v919
      %v1054 = vmul.f32 %v1053, %v1052
      %v1055 = vmul.f32 0.5, %v1054
      %v1056 = vsub.f32 1.5, %v1055
      %v1057 = vmul.f32 %v1052, %v1056
      %vm1058 = vweird.f32 %v919
      %vm1059 = vweird.f32 %v1052
      %vm1060 = vmor %vm1058, %vm1059
      %v1061 = vsel %vm1060, %v1052, %v1057
      %v1062 = vrsqrt.pop %v920
      %v1063 = vmul.f32 %v1062, %v920
      %v1064 = vmul.f32 %v1063, %v1062
      %v1065 = vmul.f32 0.5, %v1064
      %v1066 = vsub.f32 1.5, %v1065
      %v1067 = vmul.f32 %v1062, %v1066
      %vm1068 = vweird.f32 %v920
      %vm1069 = vweird.f32 %v1062
      %vm1070 = vmor %vm1068, %vm1069
      %v1071 = vsel %vm1070, %v1062, %v1067
      %v1072 = vrsqrt.pop %v921
      %v1073 = vmul.f32 %v1072, %v921
      %v1074 = vmul.f32 %v1073, %v1072
      %v1075 = vmul.f32 0.5, %v1074
      %v1076 = vsub.f32 1.5, %v1075
      %v1077 = vmul.f32 %v1072, %v1076
      %vm1078 = vweird.f32 %v921
      %vm1079 = vweird.f32 %v1072
      %vm1080 = vmor %vm1078, %vm1079
      %v1081 = vsel %vm1080, %v1072, %v1077
      %v1082 = vmul.f32 %v890, %v931
      %v1083 = vmul.f32 %v891, %v941
      %v1084 = vmul.f32 %v892, %v951
      %v1085 = vmul.f32 %v893, %v961
      %v1086 = vmul.f32 %v894, %v971
      %v1087 = vmul.f32 %v895, %v981
      %v1088 = vmul.f32 %v896, %v991
      %v1089 = vmul.f32 %v897, %v1001
      %v1090 = vmul.f32 %v898, %v1011
      %v1091 = vmul.f32 %v899, %v1021
      %v1092 = vmul.f32 %v900, %v1031
      %v1093 = vmul.f32 %v901, %v1041
      %v1094 = vmul.f32 %v902, %v1051
      %v1095 = vmul.f32 %v903, %v1061
      %v1096 = vmul.f32 %v904, %v1071
      %v1097 = vmul.f32 %v905, %v1081
      %v1098 = vld [vmem:[%s1] sm:$0xff]
      %v1099 = vmul.f32 %v1082, %v1098
      %v1100 = vmul.f32 %v1083, %v1098
      %v1101 = vmul.f32 %v1084, %v1098
      %v1102 = vmul.f32 %v1085, %v1098
      %v1103 = vmul.f32 %v1086, %v1098
      %v1104 = vmul.f32 %v1087, %v1098
      %v1105 = vmul.f32 %v1088, %v1098
      %v1106 = vmul.f32 %v1089, %v1098
      %v1107 = vmul.f32 %v1090, %v1098
      %v1108 = vmul.f32 %v1091, %v1098
      %v1109 = vmul.f32 %v1092, %v1098
      %v1110 = vmul.f32 %v1093, %v1098
      %v1111 = vmul.f32 %v1094, %v1098
      %v1112 = vmul.f32 %v1095, %v1098
      %v1113 = vmul.f32 %v1096, %v1098
      %v1114 = vmul.f32 %v1097, %v1098
      %v1115 = vld [vmem:[%s2] sm:$0xff]
      %v1116 = vadd.f32 %v1099, %v1115
      %v1117 = vadd.f32 %v1100, %v1115
      %v1118 = vadd.f32 %v1101, %v1115
      %v1119 = vadd.f32 %v1102, %v1115
      %v1120 = vadd.f32 %v1103, %v1115
      %v1121 = vadd.f32 %v1104, %v1115
      %v1122 = vadd.f32 %v1105, %v1115
      %v1123 = vadd.f32 %v1106, %v1115
      %v1124 = vadd.f32 %v1107, %v1115
      %v1125 = vadd.f32 %v1108, %v1115
      %v1126 = vadd.f32 %v1109, %v1115
      %v1127 = vadd.f32 %v1110, %v1115
      %v1128 = vadd.f32 %v1111, %v1115
      %v1129 = vadd.f32 %v1112, %v1115
      %v1130 = vadd.f32 %v1113, %v1115
      %v1131 = vadd.f32 %v1114, %v1115
      %v1132 = vld [vmem:[%s3] sm:$0xf]
      %v1133 = vld [vmem:[%s3 + $0x4] sm:$0xf]
      %v1134 = vld [vmem:[%s3 + $0x8] sm:$0xf]
      %v1135 = vld [vmem:[%s3 + $0xc] sm:$0xf]
      %v1136 = vld [vmem:[%s3 + $0x10] sm:$0xf]
      %v1137 = vld [vmem:[%s3 + $0x14] sm:$0xf]
      %v1138 = vld [vmem:[%s3 + $0x18] sm:$0xf]
      %v1139 = vld [vmem:[%s3 + $0x1c] sm:$0xf]
      %v1140 = vld [vmem:[%s3 + $0x20] sm:$0xf]
      %v1141 = vld [vmem:[%s3 + $0x24] sm:$0xf]
      %v1142 = vld [vmem:[%s3 + $0x28] sm:$0xf]
      %v1143 = vld [vmem:[%s3 + $0x2c] sm:$0xf]
      %v1144 = vld [vmem:[%s3 + $0x30] sm:$0xf]
      %v1145 = vld [vmem:[%s3 + $0x34] sm:$0xf]
      %v1146 = vld [vmem:[%s3 + $0x38] sm:$0xf]
      %v1147 = vld [vmem:[%s3 + $0x3c] sm:$0xf]
      %v1148 = vpack.c.bf16 %v1117, %v1116
      %v1149 = vpack.c.bf16 %v1119, %v1118
      %v1150 = vpack.c.bf16 %v1121, %v1120
      %v1151 = vpack.c.bf16 %v1123, %v1122
      %v1152 = vpack.c.bf16 %v1125, %v1124
      %v1153 = vpack.c.bf16 %v1127, %v1126
      %v1154 = vpack.c.bf16 %v1129, %v1128
      %v1155 = vpack.c.bf16 %v1131, %v1130
      %v1172 = vunpack.c.l.b16 %v1132
      %v1173 = vunpack.c.l.b16 %v1133
      %v1174 = vunpack.c.l.b16 %v1134
      %v1175 = vunpack.c.l.b16 %v1135
      %v1176 = vunpack.c.l.b16 %v1136
      %v1177 = vunpack.c.l.b16 %v1137
      %v1178 = vunpack.c.l.b16 %v1138
      %v1179 = vunpack.c.l.b16 %v1139
      %v1180 = vunpack.c.l.b16 %v1140
      %v1181 = vunpack.c.l.b16 %v1141
      %v1182 = vunpack.c.l.b16 %v1142
      %v1183 = vunpack.c.l.b16 %v1143
      %v1184 = vunpack.c.l.b16 %v1144
      %v1185 = vunpack.c.l.b16 %v1145
      %v1186 = vunpack.c.l.b16 %v1146
      %v1187 = vunpack.c.l.b16 %v1147
      %v1188 = vpack.c.b16 %v1173, %v1172
      %v1189 = vpack.c.b16 %v1175, %v1174
      %v1190 = vpack.c.b16 %v1177, %v1176
      %v1191 = vpack.c.b16 %v1179, %v1178
      %v1192 = vpack.c.b16 %v1181, %v1180
      %v1193 = vpack.c.b16 %v1183, %v1182
      %v1194 = vpack.c.b16 %v1185, %v1184
      %v1195 = vpack.c.b16 %v1187, %v1186
      %1204 = vmatpush.bf16.msra.mxu0 %v1155
      %1205 = vmatpush.bf16.msra.mxu0 %v1154
      %1206 = vmatpush.bf16.msra.mxu0 %v1153
      %1207 = vmatpush.bf16.msra.mxu0 %v1152
      %1208 = vmatpush.bf16.msra.mxu0 %v1151
      %1209 = vmatpush.bf16.msra.mxu0 %v1150
      %1210 = vmatpush.bf16.msra.mxu0 %v1149
      %1211 = vmatpush.bf16.msra.mxu0 %v1148
      %1212 = vmatmul.bf16.gmra.mxu0 %v1188
      %v1213 = vpop.f32.mrf.mxu0
      %v1214 = vadd.f32 0.0, %v1213
      %v1215 = vpop.f32.mrf.mxu0
      %v1216 = vadd.f32 0.0, %v1215
      %1217 = vmatmul.bf16.gmra.mxu0 %v1189
      %v1218 = vpop.f32.mrf.mxu0
      %v1219 = vadd.f32 0.0, %v1218
      %v1220 = vpop.f32.mrf.mxu0
      %v1221 = vadd.f32 0.0, %v1220
      %1222 = vmatmul.bf16.gmra.mxu0 %v1190
      %v1223 = vpop.f32.mrf.mxu0
      %v1224 = vadd.f32 0.0, %v1223
      %v1225 = vpop.f32.mrf.mxu0
      %v1226 = vadd.f32 0.0, %v1225
      %1227 = vmatmul.bf16.gmra.mxu0 %v1191
      %v1228 = vpop.f32.mrf.mxu0
      %v1229 = vadd.f32 0.0, %v1228
      %v1230 = vpop.f32.mrf.mxu0
      %v1231 = vadd.f32 0.0, %v1230
      %1232 = vmatmul.bf16.gmra.mxu0 %v1192
      %v1233 = vpop.f32.mrf.mxu0
      %v1234 = vadd.f32 0.0, %v1233
      %v1235 = vpop.f32.mrf.mxu0
      %v1236 = vadd.f32 0.0, %v1235
      %1237 = vmatmul.bf16.gmra.mxu0 %v1193
      %v1238 = vpop.f32.mrf.mxu0
      %v1239 = vadd.f32 0.0, %v1238
      %v1240 = vpop.f32.mrf.mxu0
      %v1241 = vadd.f32 0.0, %v1240
      %1242 = vmatmul.bf16.gmra.mxu0 %v1194
      %v1243 = vpop.f32.mrf.mxu0
      %v1244 = vadd.f32 0.0, %v1243
      %v1245 = vpop.f32.mrf.mxu0
      %v1246 = vadd.f32 0.0, %v1245
      %1247 = vmatmul.bf16.gmra.mxu0 %v1195
      %v1248 = vpop.f32.mrf.mxu0
      %v1249 = vadd.f32 0.0, %v1248
      %v1250 = vpop.f32.mrf.mxu0
      %v1251 = vadd.f32 0.0, %v1250
      %1252 = vdwg.mxu0
      %v1253 = vld [vmem:[%s4] sm:$0xff]
      %v1254 = vadd.f32 %v1214, %v1253
      %v1255 = vadd.f32 %v1216, %v1253
      %v1256 = vadd.f32 %v1219, %v1253
      %v1257 = vadd.f32 %v1221, %v1253
      %v1258 = vadd.f32 %v1224, %v1253
      %v1259 = vadd.f32 %v1226, %v1253
      %v1260 = vadd.f32 %v1229, %v1253
      %v1261 = vadd.f32 %v1231, %v1253
      %v1262 = vadd.f32 %v1234, %v1253
      %v1263 = vadd.f32 %v1236, %v1253
      %v1264 = vadd.f32 %v1239, %v1253
      %v1265 = vadd.f32 %v1241, %v1253
      %v1266 = vadd.f32 %v1244, %v1253
      %v1267 = vadd.f32 %v1246, %v1253
      %v1268 = vadd.f32 %v1249, %v1253
      %v1269 = vadd.f32 %v1251, %v1253
      %v1270 = vmax.f32 %v1254, 0.0
      %v1271 = vmax.f32 %v1255, 0.0
      %v1272 = vmax.f32 %v1256, 0.0
      %v1273 = vmax.f32 %v1257, 0.0
      %v1274 = vmax.f32 %v1258, 0.0
      %v1275 = vmax.f32 %v1259, 0.0
      %v1276 = vmax.f32 %v1260, 0.0
      %v1277 = vmax.f32 %v1261, 0.0
      %v1278 = vmax.f32 %v1262, 0.0
      %v1279 = vmax.f32 %v1263, 0.0
      %v1280 = vmax.f32 %v1264, 0.0
      %v1281 = vmax.f32 %v1265, 0.0
      %v1282 = vmax.f32 %v1266, 0.0
      %v1283 = vmax.f32 %v1267, 0.0
      %v1284 = vmax.f32 %v1268, 0.0
      %v1285 = vmax.f32 %v1269, 0.0
      %v1286 = vadd.f32 %v417, %v1270
      %v1287 = vadd.f32 %v418, %v1271
      %v1288 = vadd.f32 %v419, %v1272
      %v1289 = vadd.f32 %v420, %v1273
      %v1290 = vadd.f32 %v421, %v1274
      %v1291 = vadd.f32 %v422, %v1275
      %v1292 = vadd.f32 %v423, %v1276
      %v1293 = vadd.f32 %v424, %v1277
      %v1294 = vadd.f32 %v425, %v1278
      %v1295 = vadd.f32 %v426, %v1279
      %v1296 = vadd.f32 %v427, %v1280
      %v1297 = vadd.f32 %v428, %v1281
      %v1298 = vadd.f32 %v429, %v1282
      %v1299 = vadd.f32 %v430, %v1283
      %v1300 = vadd.f32 %v431, %v1284
      %v1301 = vadd.f32 %v432, %v1285
      %v1302 = vmul.f32 %v1286, %v1286
      %v1303 = vmul.f32 %v1287, %v1287
      %v1304 = vmul.f32 %v1288, %v1288
      %v1305 = vmul.f32 %v1289, %v1289
      %v1306 = vmul.f32 %v1290, %v1290
      %v1307 = vmul.f32 %v1291, %v1291
      %v1308 = vmul.f32 %v1292, %v1292
      %v1309 = vmul.f32 %v1293, %v1293
      %v1310 = vmul.f32 %v1294, %v1294
      %v1311 = vmul.f32 %v1295, %v1295
      %v1312 = vmul.f32 %v1296, %v1296
      %v1313 = vmul.f32 %v1297, %v1297
      %v1314 = vmul.f32 %v1298, %v1298
      %v1315 = vmul.f32 %v1299, %v1299
      %v1316 = vmul.f32 %v1300, %v1300
      %v1317 = vmul.f32 %v1301, %v1301
      %v1318 = vpack.c.bf16 %v1287, %v1286
      %v1319 = vpack.c.bf16 %v1289, %v1288
      %v1320 = vpack.c.bf16 %v1291, %v1290
      %v1321 = vpack.c.bf16 %v1293, %v1292
      %v1322 = vpack.c.bf16 %v1295, %v1294
      %v1323 = vpack.c.bf16 %v1297, %v1296
      %v1324 = vpack.c.bf16 %v1299, %v1298
      %v1325 = vpack.c.bf16 %v1301, %v1300
      %v1326 = vpack.c.bf16 %v1303, %v1302
      %v1327 = vpack.c.bf16 %v1305, %v1304
      %v1328 = vpack.c.bf16 %v1307, %v1306
      %v1329 = vpack.c.bf16 %v1309, %v1308
      %v1330 = vpack.c.bf16 %v1311, %v1310
      %v1331 = vpack.c.bf16 %v1313, %v1312
      %v1332 = vpack.c.bf16 %v1315, %v1314
      %v1333 = vpack.c.bf16 %v1317, %v1316
      %1334 = vmatpush.bf16.msra.mxu0 %v520
      %1335 = vmatpush.bf16.msra.mxu0 %v519
      %1336 = vmatpush.bf16.msra.mxu0 %v518
      %1337 = vmatpush.bf16.msra.mxu0 %v517
      %1338 = vmatpush.bf16.msra.mxu0 %v516
      %1339 = vmatpush.bf16.msra.mxu0 %v515
      %1340 = vmatpush.bf16.msra.mxu0 %v514
      %1341 = vmatpush.bf16.msra.mxu0 %v513
      %1342 = vmatmul.bf16.gmra.mxu0 %v1318
      %v1343 = vpop.f32.mrf.mxu0
      %v1344 = vadd.f32 0.0, %v1343
      %v1345 = vpop.f32.mrf.mxu0
      %v1346 = vadd.f32 0.0, %v1345
      %1347 = vmatmul.bf16.gmra.mxu0 %v1319
      %v1348 = vpop.f32.mrf.mxu0
      %v1349 = vadd.f32 0.0, %v1348
      %v1350 = vpop.f32.mrf.mxu0
      %v1351 = vadd.f32 0.0, %v1350
      %1352 = vmatmul.bf16.gmra.mxu0 %v1320
      %v1353 = vpop.f32.mrf.mxu0
      %v1354 = vadd.f32 0.0, %v1353
      %v1355 = vpop.f32.mrf.mxu0
      %v1356 = vadd.f32 0.0, %v1355
      %1357 = vmatmul.bf16.gmra.mxu0 %v1321
      %v1358 = vpop.f32.mrf.mxu0
      %v1359 = vadd.f32 0.0, %v1358
      %v1360 = vpop.f32.mrf.mxu0
      %v1361 = vadd.f32 0.0, %v1360
      %1362 = vmatmul.bf16.gmra.mxu0 %v1322
      %v1363 = vpop.f32.mrf.mxu0
      %v1364 = vadd.f32 0.0, %v1363
      %v1365 = vpop.f32.mrf.mxu0
      %v1366 = vadd.f32 0.0, %v1365
      %1367 = vmatmul.bf16.gmra.mxu0 %v1323
      %v1368 = vpop.f32.mrf.mxu0
      %v1369 = vadd.f32 0.0, %v1368
      %v1370 = vpop.f32.mrf.mxu0
      %v1371 = vadd.f32 0.0, %v1370
      %1372 = vmatmul.bf16.gmra.mxu0 %v1324
      %v1373 = vpop.f32.mrf.mxu0
      %v1374 = vadd.f32 0.0, %v1373
      %v1375 = vpop.f32.mrf.mxu0
      %v1376 = vadd.f32 0.0, %v1375
      %1377 = vmatmul.bf16.gmra.mxu0 %v1325
      %v1378 = vpop.f32.mrf.mxu0
      %v1379 = vadd.f32 0.0, %v1378
      %v1380 = vpop.f32.mrf.mxu0
      %v1381 = vadd.f32 0.0, %v1380
      %1382 = vmatmul.bf16.gmra.mxu0 %v1326
      %v1383 = vpop.f32.mrf.mxu0
      %v1384 = vadd.f32 0.0, %v1383
      %v1385 = vpop.f32.mrf.mxu0
      %v1386 = vadd.f32 0.0, %v1385
      %1387 = vmatmul.bf16.gmra.mxu0 %v1327
      %v1388 = vpop.f32.mrf.mxu0
      %v1389 = vadd.f32 0.0, %v1388
      %v1390 = vpop.f32.mrf.mxu0
      %v1391 = vadd.f32 0.0, %v1390
      %1392 = vmatmul.bf16.gmra.mxu0 %v1328
      %v1393 = vpop.f32.mrf.mxu0
      %v1394 = vadd.f32 0.0, %v1393
      %v1395 = vpop.f32.mrf.mxu0
      %v1396 = vadd.f32 0.0, %v1395
      %1397 = vmatmul.bf16.gmra.mxu0 %v1329
      %v1398 = vpop.f32.mrf.mxu0
      %v1399 = vadd.f32 0.0, %v1398
      %v1400 = vpop.f32.mrf.mxu0
      %v1401 = vadd.f32 0.0, %v1400
      %1402 = vmatmul.bf16.gmra.mxu0 %v1330
      %v1403 = vpop.f32.mrf.mxu0
      %v1404 = vadd.f32 0.0, %v1403
      %v1405 = vpop.f32.mrf.mxu0
      %v1406 = vadd.f32 0.0, %v1405
      %1407 = vmatmul.bf16.gmra.mxu0 %v1331
      %v1408 = vpop.f32.mrf.mxu0
      %v1409 = vadd.f32 0.0, %v1408
      %v1410 = vpop.f32.mrf.mxu0
      %v1411 = vadd.f32 0.0, %v1410
      %1412 = vmatmul.bf16.gmra.mxu0 %v1332
      %v1413 = vpop.f32.mrf.mxu0
      %v1414 = vadd.f32 0.0, %v1413
      %v1415 = vpop.f32.mrf.mxu0
      %v1416 = vadd.f32 0.0, %v1415
      %1417 = vmatmul.bf16.gmra.mxu0 %v1333
      %v1418 = vpop.f32.mrf.mxu0
      %v1419 = vadd.f32 0.0, %v1418
      %v1420 = vpop.f32.mrf.mxu0
      %v1421 = vadd.f32 0.0, %v1420
      %1422 = vdwg.mxu0
      %v1423 = vrot.slane %v1344, 4
      %v1424 = vadd.f32 %v1344, %v1423
      %v1425 = vrot.slane %v1424, 2
      %v1426 = vadd.f32 %v1424, %v1425
      %v1427 = vrot.slane %v1426, 1
      %v1428 = vadd.f32 %v1426, %v1427
      %v1429 = vrot.slane %v1346, 4
      %v1430 = vadd.f32 %v1346, %v1429
      %v1431 = vrot.slane %v1430, 2
      %v1432 = vadd.f32 %v1430, %v1431
      %v1433 = vrot.slane %v1432, 1
      %v1434 = vadd.f32 %v1432, %v1433
      %v1435 = vrot.slane %v1349, 4
      %v1436 = vadd.f32 %v1349, %v1435
      %v1437 = vrot.slane %v1436, 2
      %v1438 = vadd.f32 %v1436, %v1437
      %v1439 = vrot.slane %v1438, 1
      %v1440 = vadd.f32 %v1438, %v1439
      %v1441 = vrot.slane %v1351, 4
      %v1442 = vadd.f32 %v1351, %v1441
      %v1443 = vrot.slane %v1442, 2
      %v1444 = vadd.f32 %v1442, %v1443
      %v1445 = vrot.slane %v1444, 1
      %v1446 = vadd.f32 %v1444, %v1445
      %v1447 = vrot.slane %v1354, 4
      %v1448 = vadd.f32 %v1354, %v1447
      %v1449 = vrot.slane %v1448, 2
      %v1450 = vadd.f32 %v1448, %v1449
      %v1451 = vrot.slane %v1450, 1
      %v1452 = vadd.f32 %v1450, %v1451
      %v1453 = vrot.slane %v1356, 4
      %v1454 = vadd.f32 %v1356, %v1453
      %v1455 = vrot.slane %v1454, 2
      %v1456 = vadd.f32 %v1454, %v1455
      %v1457 = vrot.slane %v1456, 1
      %v1458 = vadd.f32 %v1456, %v1457
      %v1459 = vrot.slane %v1359, 4
      %v1460 = vadd.f32 %v1359, %v1459
      %v1461 = vrot.slane %v1460, 2
      %v1462 = vadd.f32 %v1460, %v1461
      %v1463 = vrot.slane %v1462, 1
      %v1464 = vadd.f32 %v1462, %v1463
      %v1465 = vrot.slane %v1361, 4
      %v1466 = vadd.f32 %v1361, %v1465
      %v1467 = vrot.slane %v1466, 2
      %v1468 = vadd.f32 %v1466, %v1467
      %v1469 = vrot.slane %v1468, 1
      %v1470 = vadd.f32 %v1468, %v1469
      %v1471 = vrot.slane %v1364, 4
      %v1472 = vadd.f32 %v1364, %v1471
      %v1473 = vrot.slane %v1472, 2
      %v1474 = vadd.f32 %v1472, %v1473
      %v1475 = vrot.slane %v1474, 1
      %v1476 = vadd.f32 %v1474, %v1475
      %v1477 = vrot.slane %v1366, 4
      %v1478 = vadd.f32 %v1366, %v1477
      %v1479 = vrot.slane %v1478, 2
      %v1480 = vadd.f32 %v1478, %v1479
      %v1481 = vrot.slane %v1480, 1
      %v1482 = vadd.f32 %v1480, %v1481
      %v1483 = vrot.slane %v1369, 4
      %v1484 = vadd.f32 %v1369, %v1483
      %v1485 = vrot.slane %v1484, 2
      %v1486 = vadd.f32 %v1484, %v1485
      %v1487 = vrot.slane %v1486, 1
      %v1488 = vadd.f32 %v1486, %v1487
      %v1489 = vrot.slane %v1371, 4
      %v1490 = vadd.f32 %v1371, %v1489
      %v1491 = vrot.slane %v1490, 2
      %v1492 = vadd.f32 %v1490, %v1491
      %v1493 = vrot.slane %v1492, 1
      %v1494 = vadd.f32 %v1492, %v1493
      %v1495 = vrot.slane %v1374, 4
      %v1496 = vadd.f32 %v1374, %v1495
      %v1497 = vrot.slane %v1496, 2
      %v1498 = vadd.f32 %v1496, %v1497
      %v1499 = vrot.slane %v1498, 1
      %v1500 = vadd.f32 %v1498, %v1499
      %v1501 = vrot.slane %v1376, 4
      %v1502 = vadd.f32 %v1376, %v1501
      %v1503 = vrot.slane %v1502, 2
      %v1504 = vadd.f32 %v1502, %v1503
      %v1505 = vrot.slane %v1504, 1
      %v1506 = vadd.f32 %v1504, %v1505
      %v1507 = vrot.slane %v1379, 4
      %v1508 = vadd.f32 %v1379, %v1507
      %v1509 = vrot.slane %v1508, 2
      %v1510 = vadd.f32 %v1508, %v1509
      %v1511 = vrot.slane %v1510, 1
      %v1512 = vadd.f32 %v1510, %v1511
      %v1513 = vrot.slane %v1381, 4
      %v1514 = vadd.f32 %v1381, %v1513
      %v1515 = vrot.slane %v1514, 2
      %v1516 = vadd.f32 %v1514, %v1515
      %v1517 = vrot.slane %v1516, 1
      %v1518 = vadd.f32 %v1516, %v1517
      %v1519 = vmul.f32 %v1428, 0.03125
      %v1520 = vmul.f32 %v1434, 0.03125
      %v1521 = vmul.f32 %v1440, 0.03125
      %v1522 = vmul.f32 %v1446, 0.03125
      %v1523 = vmul.f32 %v1452, 0.03125
      %v1524 = vmul.f32 %v1458, 0.03125
      %v1525 = vmul.f32 %v1464, 0.03125
      %v1526 = vmul.f32 %v1470, 0.03125
      %v1527 = vmul.f32 %v1476, 0.03125
      %v1528 = vmul.f32 %v1482, 0.03125
      %v1529 = vmul.f32 %v1488, 0.03125
      %v1530 = vmul.f32 %v1494, 0.03125
      %v1531 = vmul.f32 %v1500, 0.03125
      %v1532 = vmul.f32 %v1506, 0.03125
      %v1533 = vmul.f32 %v1512, 0.03125
      %v1534 = vmul.f32 %v1518, 0.03125
      %v1535 = vrot.slane %v1384, 4
      %v1536 = vadd.f32 %v1384, %v1535
      %v1537 = vrot.slane %v1536, 2
      %v1538 = vadd.f32 %v1536, %v1537
      %v1539 = vrot.slane %v1538, 1
      %v1540 = vadd.f32 %v1538, %v1539
      %v1541 = vrot.slane %v1386, 4
      %v1542 = vadd.f32 %v1386, %v1541
      %v1543 = vrot.slane %v1542, 2
      %v1544 = vadd.f32 %v1542, %v1543
      %v1545 = vrot.slane %v1544, 1
      %v1546 = vadd.f32 %v1544, %v1545
      %v1547 = vrot.slane %v1389, 4
      %v1548 = vadd.f32 %v1389, %v1547
      %v1549 = vrot.slane %v1548, 2
      %v1550 = vadd.f32 %v1548, %v1549
      %v1551 = vrot.slane %v1550, 1
      %v1552 = vadd.f32 %v1550, %v1551
      %v1553 = vrot.slane %v1391, 4
      %v1554 = vadd.f32 %v1391, %v1553
      %v1555 = vrot.slane %v1554, 2
      %v1556 = vadd.f32 %v1554, %v1555
      %v1557 = vrot.slane %v1556, 1
      %v1558 = vadd.f32 %v1556, %v1557
      %v1559 = vrot.slane %v1394, 4
      %v1560 = vadd.f32 %v1394, %v1559
      %v1561 = vrot.slane %v1560, 2
      %v1562 = vadd.f32 %v1560, %v1561
      %v1563 = vrot.slane %v1562, 1
      %v1564 = vadd.f32 %v1562, %v1563
      %v1565 = vrot.slane %v1396, 4
      %v1566 = vadd.f32 %v1396, %v1565
      %v1567 = vrot.slane %v1566, 2
      %v1568 = vadd.f32 %v1566, %v1567
      %v1569 = vrot.slane %v1568, 1
      %v1570 = vadd.f32 %v1568, %v1569
      %v1571 = vrot.slane %v1399, 4
      %v1572 = vadd.f32 %v1399, %v1571
      %v1573 = vrot.slane %v1572, 2
      %v1574 = vadd.f32 %v1572, %v1573
      %v1575 = vrot.slane %v1574, 1
      %v1576 = vadd.f32 %v1574, %v1575
      %v1577 = vrot.slane %v1401, 4
      %v1578 = vadd.f32 %v1401, %v1577
      %v1579 = vrot.slane %v1578, 2
      %v1580 = vadd.f32 %v1578, %v1579
      %v1581 = vrot.slane %v1580, 1
      %v1582 = vadd.f32 %v1580, %v1581
      %v1583 = vrot.slane %v1404, 4
      %v1584 = vadd.f32 %v1404, %v1583
      %v1585 = vrot.slane %v1584, 2
      %v1586 = vadd.f32 %v1584, %v1585
      %v1587 = vrot.slane %v1586, 1
      %v1588 = vadd.f32 %v1586, %v1587
      %v1589 = vrot.slane %v1406, 4
      %v1590 = vadd.f32 %v1406, %v1589
      %v1591 = vrot.slane %v1590, 2
      %v1592 = vadd.f32 %v1590, %v1591
      %v1593 = vrot.slane %v1592, 1
      %v1594 = vadd.f32 %v1592, %v1593
      %v1595 = vrot.slane %v1409, 4
      %v1596 = vadd.f32 %v1409, %v1595
      %v1597 = vrot.slane %v1596, 2
      %v1598 = vadd.f32 %v1596, %v1597
      %v1599 = vrot.slane %v1598, 1
      %v1600 = vadd.f32 %v1598, %v1599
      %v1601 = vrot.slane %v1411, 4
      %v1602 = vadd.f32 %v1411, %v1601
      %v1603 = vrot.slane %v1602, 2
      %v1604 = vadd.f32 %v1602, %v1603
      %v1605 = vrot.slane %v1604, 1
      %v1606 = vadd.f32 %v1604, %v1605
      %v1607 = vrot.slane %v1414, 4
      %v1608 = vadd.f32 %v1414, %v1607
      %v1609 = vrot.slane %v1608, 2
      %v1610 = vadd.f32 %v1608, %v1609
      %v1611 = vrot.slane %v1610, 1
      %v1612 = vadd.f32 %v1610, %v1611
      %v1613 = vrot.slane %v1416, 4
      %v1614 = vadd.f32 %v1416, %v1613
      %v1615 = vrot.slane %v1614, 2
      %v1616 = vadd.f32 %v1614, %v1615
      %v1617 = vrot.slane %v1616, 1
      %v1618 = vadd.f32 %v1616, %v1617
      %v1619 = vrot.slane %v1419, 4
      %v1620 = vadd.f32 %v1419, %v1619
      %v1621 = vrot.slane %v1620, 2
      %v1622 = vadd.f32 %v1620, %v1621
      %v1623 = vrot.slane %v1622, 1
      %v1624 = vadd.f32 %v1622, %v1623
      %v1625 = vrot.slane %v1421, 4
      %v1626 = vadd.f32 %v1421, %v1625
      %v1627 = vrot.slane %v1626, 2
      %v1628 = vadd.f32 %v1626, %v1627
      %v1629 = vrot.slane %v1628, 1
      %v1630 = vadd.f32 %v1628, %v1629
      %v1631 = vmul.f32 %v1540, 0.03125
      %v1632 = vmul.f32 %v1546, 0.03125
      %v1633 = vmul.f32 %v1552, 0.03125
      %v1634 = vmul.f32 %v1558, 0.03125
      %v1635 = vmul.f32 %v1564, 0.03125
      %v1636 = vmul.f32 %v1570, 0.03125
      %v1637 = vmul.f32 %v1576, 0.03125
      %v1638 = vmul.f32 %v1582, 0.03125
      %v1639 = vmul.f32 %v1588, 0.03125
      %v1640 = vmul.f32 %v1594, 0.03125
      %v1641 = vmul.f32 %v1600, 0.03125
      %v1642 = vmul.f32 %v1606, 0.03125
      %v1643 = vmul.f32 %v1612, 0.03125
      %v1644 = vmul.f32 %v1618, 0.03125
      %v1645 = vmul.f32 %v1624, 0.03125
      %v1646 = vmul.f32 %v1630, 0.03125
      %v1647 = vmul.f32 %v1519, %v1519
      %v1648 = vmul.f32 %v1520, %v1520
      %v1649 = vmul.f32 %v1521, %v1521
      %v1650 = vmul.f32 %v1522, %v1522
      %v1651 = vmul.f32 %v1523, %v1523
      %v1652 = vmul.f32 %v1524, %v1524
      %v1653 = vmul.f32 %v1525, %v1525
      %v1654 = vmul.f32 %v1526, %v1526
      %v1655 = vmul.f32 %v1527, %v1527
      %v1656 = vmul.f32 %v1528, %v1528
      %v1657 = vmul.f32 %v1529, %v1529
      %v1658 = vmul.f32 %v1530, %v1530
      %v1659 = vmul.f32 %v1531, %v1531
      %v1660 = vmul.f32 %v1532, %v1532
      %v1661 = vmul.f32 %v1533, %v1533
      %v1662 = vmul.f32 %v1534, %v1534
      %v1663 = vsub.f32 %v1631, %v1647
      %v1664 = vsub.f32 %v1632, %v1648
      %v1665 = vsub.f32 %v1633, %v1649
      %v1666 = vsub.f32 %v1634, %v1650
      %v1667 = vsub.f32 %v1635, %v1651
      %v1668 = vsub.f32 %v1636, %v1652
      %v1669 = vsub.f32 %v1637, %v1653
      %v1670 = vsub.f32 %v1638, %v1654
      %v1671 = vsub.f32 %v1639, %v1655
      %v1672 = vsub.f32 %v1640, %v1656
      %v1673 = vsub.f32 %v1641, %v1657
      %v1674 = vsub.f32 %v1642, %v1658
      %v1675 = vsub.f32 %v1643, %v1659
      %v1676 = vsub.f32 %v1644, %v1660
      %v1677 = vsub.f32 %v1645, %v1661
      %v1678 = vsub.f32 %v1646, %v1662
      %v1679 = vmax.f32 %v1663, 0.0
      %v1680 = vmax.f32 %v1664, 0.0
      %v1681 = vmax.f32 %v1665, 0.0
      %v1682 = vmax.f32 %v1666, 0.0
      %v1683 = vmax.f32 %v1667, 0.0
      %v1684 = vmax.f32 %v1668, 0.0
      %v1685 = vmax.f32 %v1669, 0.0
      %v1686 = vmax.f32 %v1670, 0.0
      %v1687 = vmax.f32 %v1671, 0.0
      %v1688 = vmax.f32 %v1672, 0.0
      %v1689 = vmax.f32 %v1673, 0.0
      %v1690 = vmax.f32 %v1674, 0.0
      %v1691 = vmax.f32 %v1675, 0.0
      %v1692 = vmax.f32 %v1676, 0.0
      %v1693 = vmax.f32 %v1677, 0.0
      %v1694 = vmax.f32 %v1678, 0.0
      %v1695 = vsub.f32 %v1286, %v1519
      %v1696 = vsub.f32 %v1287, %v1520
      %v1697 = vsub.f32 %v1288, %v1521
      %v1698 = vsub.f32 %v1289, %v1522
      %v1699 = vsub.f32 %v1290, %v1523
      %v1700 = vsub.f32 %v1291, %v1524
      %v1701 = vsub.f32 %v1292, %v1525
      %v1702 = vsub.f32 %v1293, %v1526
      %v1703 = vsub.f32 %v1294, %v1527
      %v1704 = vsub.f32 %v1295, %v1528
      %v1705 = vsub.f32 %v1296, %v1529
      %v1706 = vsub.f32 %v1297, %v1530
      %v1707 = vsub.f32 %v1298, %v1531
      %v1708 = vsub.f32 %v1299, %v1532
      %v1709 = vsub.f32 %v1300, %v1533
      %v1710 = vsub.f32 %v1301, %v1534
      %v1711 = vadd.f32 %v1679, 1e-05
      %v1712 = vadd.f32 %v1680, 1e-05
      %v1713 = vadd.f32 %v1681, 1e-05
      %v1714 = vadd.f32 %v1682, 1e-05
      %v1715 = vadd.f32 %v1683, 1e-05
      %v1716 = vadd.f32 %v1684, 1e-05
      %v1717 = vadd.f32 %v1685, 1e-05
      %v1718 = vadd.f32 %v1686, 1e-05
      %v1719 = vadd.f32 %v1687, 1e-05
      %v1720 = vadd.f32 %v1688, 1e-05
      %v1721 = vadd.f32 %v1689, 1e-05
      %v1722 = vadd.f32 %v1690, 1e-05
      %v1723 = vadd.f32 %v1691, 1e-05
      %v1724 = vadd.f32 %v1692, 1e-05
      %v1725 = vadd.f32 %v1693, 1e-05
      %v1726 = vadd.f32 %v1694, 1e-05
      %v1727 = vrsqrt.pop %v1711
      %v1728 = vmul.f32 %v1727, %v1711
      %v1729 = vmul.f32 %v1728, %v1727
      %v1730 = vmul.f32 0.5, %v1729
      %v1731 = vsub.f32 1.5, %v1730
      %v1732 = vmul.f32 %v1727, %v1731
      %vm1733 = vweird.f32 %v1711
      %vm1734 = vweird.f32 %v1727
      %vm1735 = vmor %vm1733, %vm1734
      %v1736 = vsel %vm1735, %v1727, %v1732
      %v1737 = vrsqrt.pop %v1712
      %v1738 = vmul.f32 %v1737, %v1712
      %v1739 = vmul.f32 %v1738, %v1737
      %v1740 = vmul.f32 0.5, %v1739
      %v1741 = vsub.f32 1.5, %v1740
      %v1742 = vmul.f32 %v1737, %v1741
      %vm1743 = vweird.f32 %v1712
      %vm1744 = vweird.f32 %v1737
      %vm1745 = vmor %vm1743, %vm1744
      %v1746 = vsel %vm1745, %v1737, %v1742
      %v1747 = vrsqrt.pop %v1713
      %v1748 = vmul.f32 %v1747, %v1713
      %v1749 = vmul.f32 %v1748, %v1747
      %v1750 = vmul.f32 0.5, %v1749
      %v1751 = vsub.f32 1.5, %v1750
      %v1752 = vmul.f32 %v1747, %v1751
      %vm1753 = vweird.f32 %v1713
      %vm1754 = vweird.f32 %v1747
      %vm1755 = vmor %vm1753, %vm1754
      %v1756 = vsel %vm1755, %v1747, %v1752
      %v1757 = vrsqrt.pop %v1714
      %v1758 = vmul.f32 %v1757, %v1714
      %v1759 = vmul.f32 %v1758, %v1757
      %v1760 = vmul.f32 0.5, %v1759
      %v1761 = vsub.f32 1.5, %v1760
      %v1762 = vmul.f32 %v1757, %v1761
      %vm1763 = vweird.f32 %v1714
      %vm1764 = vweird.f32 %v1757
      %vm1765 = vmor %vm1763, %vm1764
      %v1766 = vsel %vm1765, %v1757, %v1762
      %v1767 = vrsqrt.pop %v1715
      %v1768 = vmul.f32 %v1767, %v1715
      %v1769 = vmul.f32 %v1768, %v1767
      %v1770 = vmul.f32 0.5, %v1769
      %v1771 = vsub.f32 1.5, %v1770
      %v1772 = vmul.f32 %v1767, %v1771
      %vm1773 = vweird.f32 %v1715
      %vm1774 = vweird.f32 %v1767
      %vm1775 = vmor %vm1773, %vm1774
      %v1776 = vsel %vm1775, %v1767, %v1772
      %v1777 = vrsqrt.pop %v1716
      %v1778 = vmul.f32 %v1777, %v1716
      %v1779 = vmul.f32 %v1778, %v1777
      %v1780 = vmul.f32 0.5, %v1779
      %v1781 = vsub.f32 1.5, %v1780
      %v1782 = vmul.f32 %v1777, %v1781
      %vm1783 = vweird.f32 %v1716
      %vm1784 = vweird.f32 %v1777
      %vm1785 = vmor %vm1783, %vm1784
      %v1786 = vsel %vm1785, %v1777, %v1782
      %v1787 = vrsqrt.pop %v1717
      %v1788 = vmul.f32 %v1787, %v1717
      %v1789 = vmul.f32 %v1788, %v1787
      %v1790 = vmul.f32 0.5, %v1789
      %v1791 = vsub.f32 1.5, %v1790
      %v1792 = vmul.f32 %v1787, %v1791
      %vm1793 = vweird.f32 %v1717
      %vm1794 = vweird.f32 %v1787
      %vm1795 = vmor %vm1793, %vm1794
      %v1796 = vsel %vm1795, %v1787, %v1792
      %v1797 = vrsqrt.pop %v1718
      %v1798 = vmul.f32 %v1797, %v1718
      %v1799 = vmul.f32 %v1798, %v1797
      %v1800 = vmul.f32 0.5, %v1799
      %v1801 = vsub.f32 1.5, %v1800
      %v1802 = vmul.f32 %v1797, %v1801
      %vm1803 = vweird.f32 %v1718
      %vm1804 = vweird.f32 %v1797
      %vm1805 = vmor %vm1803, %vm1804
      %v1806 = vsel %vm1805, %v1797, %v1802
      %v1807 = vrsqrt.pop %v1719
      %v1808 = vmul.f32 %v1807, %v1719
      %v1809 = vmul.f32 %v1808, %v1807
      %v1810 = vmul.f32 0.5, %v1809
      %v1811 = vsub.f32 1.5, %v1810
      %v1812 = vmul.f32 %v1807, %v1811
      %vm1813 = vweird.f32 %v1719
      %vm1814 = vweird.f32 %v1807
      %vm1815 = vmor %vm1813, %vm1814
      %v1816 = vsel %vm1815, %v1807, %v1812
      %v1817 = vrsqrt.pop %v1720
      %v1818 = vmul.f32 %v1817, %v1720
      %v1819 = vmul.f32 %v1818, %v1817
      %v1820 = vmul.f32 0.5, %v1819
      %v1821 = vsub.f32 1.5, %v1820
      %v1822 = vmul.f32 %v1817, %v1821
      %vm1823 = vweird.f32 %v1720
      %vm1824 = vweird.f32 %v1817
      %vm1825 = vmor %vm1823, %vm1824
      %v1826 = vsel %vm1825, %v1817, %v1822
      %v1827 = vrsqrt.pop %v1721
      %v1828 = vmul.f32 %v1827, %v1721
      %v1829 = vmul.f32 %v1828, %v1827
      %v1830 = vmul.f32 0.5, %v1829
      %v1831 = vsub.f32 1.5, %v1830
      %v1832 = vmul.f32 %v1827, %v1831
      %vm1833 = vweird.f32 %v1721
      %vm1834 = vweird.f32 %v1827
      %vm1835 = vmor %vm1833, %vm1834
      %v1836 = vsel %vm1835, %v1827, %v1832
      %v1837 = vrsqrt.pop %v1722
      %v1838 = vmul.f32 %v1837, %v1722
      %v1839 = vmul.f32 %v1838, %v1837
      %v1840 = vmul.f32 0.5, %v1839
      %v1841 = vsub.f32 1.5, %v1840
      %v1842 = vmul.f32 %v1837, %v1841
      %vm1843 = vweird.f32 %v1722
      %vm1844 = vweird.f32 %v1837
      %vm1845 = vmor %vm1843, %vm1844
      %v1846 = vsel %vm1845, %v1837, %v1842
      %v1847 = vrsqrt.pop %v1723
      %v1848 = vmul.f32 %v1847, %v1723
      %v1849 = vmul.f32 %v1848, %v1847
      %v1850 = vmul.f32 0.5, %v1849
      %v1851 = vsub.f32 1.5, %v1850
      %v1852 = vmul.f32 %v1847, %v1851
      %vm1853 = vweird.f32 %v1723
      %vm1854 = vweird.f32 %v1847
      %vm1855 = vmor %vm1853, %vm1854
      %v1856 = vsel %vm1855, %v1847, %v1852
      %v1857 = vrsqrt.pop %v1724
      %v1858 = vmul.f32 %v1857, %v1724
      %v1859 = vmul.f32 %v1858, %v1857
      %v1860 = vmul.f32 0.5, %v1859
      %v1861 = vsub.f32 1.5, %v1860
      %v1862 = vmul.f32 %v1857, %v1861
      %vm1863 = vweird.f32 %v1724
      %vm1864 = vweird.f32 %v1857
      %vm1865 = vmor %vm1863, %vm1864
      %v1866 = vsel %vm1865, %v1857, %v1862
      %v1867 = vrsqrt.pop %v1725
      %v1868 = vmul.f32 %v1867, %v1725
      %v1869 = vmul.f32 %v1868, %v1867
      %v1870 = vmul.f32 0.5, %v1869
      %v1871 = vsub.f32 1.5, %v1870
      %v1872 = vmul.f32 %v1867, %v1871
      %vm1873 = vweird.f32 %v1725
      %vm1874 = vweird.f32 %v1867
      %vm1875 = vmor %vm1873, %vm1874
      %v1876 = vsel %vm1875, %v1867, %v1872
      %v1877 = vrsqrt.pop %v1726
      %v1878 = vmul.f32 %v1877, %v1726
      %v1879 = vmul.f32 %v1878, %v1877
      %v1880 = vmul.f32 0.5, %v1879
      %v1881 = vsub.f32 1.5, %v1880
      %v1882 = vmul.f32 %v1877, %v1881
      %vm1883 = vweird.f32 %v1726
      %vm1884 = vweird.f32 %v1877
      %vm1885 = vmor %vm1883, %vm1884
      %v1886 = vsel %vm1885, %v1877, %v1882
      %v1887 = vmul.f32 %v1695, %v1736
      %v1888 = vmul.f32 %v1696, %v1746
      %v1889 = vmul.f32 %v1697, %v1756
      %v1890 = vmul.f32 %v1698, %v1766
      %v1891 = vmul.f32 %v1699, %v1776
      %v1892 = vmul.f32 %v1700, %v1786
      %v1893 = vmul.f32 %v1701, %v1796
      %v1894 = vmul.f32 %v1702, %v1806
      %v1895 = vmul.f32 %v1703, %v1816
      %v1896 = vmul.f32 %v1704, %v1826
      %v1897 = vmul.f32 %v1705, %v1836
      %v1898 = vmul.f32 %v1706, %v1846
      %v1899 = vmul.f32 %v1707, %v1856
      %v1900 = vmul.f32 %v1708, %v1866
      %v1901 = vmul.f32 %v1709, %v1876
      %v1902 = vmul.f32 %v1710, %v1886
      %v1903 = vld [vmem:[%s5] sm:$0xff]
      %v1904 = vmul.f32 %v1887, %v1903
      %v1905 = vmul.f32 %v1888, %v1903
      %v1906 = vmul.f32 %v1889, %v1903
      %v1907 = vmul.f32 %v1890, %v1903
      %v1908 = vmul.f32 %v1891, %v1903
      %v1909 = vmul.f32 %v1892, %v1903
      %v1910 = vmul.f32 %v1893, %v1903
      %v1911 = vmul.f32 %v1894, %v1903
      %v1912 = vmul.f32 %v1895, %v1903
      %v1913 = vmul.f32 %v1896, %v1903
      %v1914 = vmul.f32 %v1897, %v1903
      %v1915 = vmul.f32 %v1898, %v1903
      %v1916 = vmul.f32 %v1899, %v1903
      %v1917 = vmul.f32 %v1900, %v1903
      %v1918 = vmul.f32 %v1901, %v1903
      %v1919 = vmul.f32 %v1902, %v1903
      %v1920 = vld [vmem:[%s6] sm:$0xff]
      %v1921 = vadd.f32 %v1904, %v1920
      %v1922 = vadd.f32 %v1905, %v1920
      %v1923 = vadd.f32 %v1906, %v1920
      %v1924 = vadd.f32 %v1907, %v1920
      %v1925 = vadd.f32 %v1908, %v1920
      %v1926 = vadd.f32 %v1909, %v1920
      %v1927 = vadd.f32 %v1910, %v1920
      %v1928 = vadd.f32 %v1911, %v1920
      %v1929 = vadd.f32 %v1912, %v1920
      %v1930 = vadd.f32 %v1913, %v1920
      %v1931 = vadd.f32 %v1914, %v1920
      %v1932 = vadd.f32 %v1915, %v1920
      %v1933 = vadd.f32 %v1916, %v1920
      %v1934 = vadd.f32 %v1917, %v1920
      %v1935 = vadd.f32 %v1918, %v1920
      %v1936 = vadd.f32 %v1919, %v1920
      %v1937 = vpack.c.bf16 %v1922, %v1921
      %v1938 = vpack.c.bf16 %v1924, %v1923
      %v1939 = vpack.c.bf16 %v1926, %v1925
      %v1940 = vpack.c.bf16 %v1928, %v1927
      %v1941 = vpack.c.bf16 %v1930, %v1929
      %v1942 = vpack.c.bf16 %v1932, %v1931
      %v1943 = vpack.c.bf16 %v1934, %v1933
      %v1944 = vpack.c.bf16 %v1936, %v1935
      %v1945 = vld [vmem:[%s7] sm:$0xff]
      %v1946 = vld [vmem:[%s7 + $0x8] sm:$0xff]
      %v1947 = vld [vmem:[%s7 + $0x10] sm:$0xff]
      %v1948 = vld [vmem:[%s7 + $0x18] sm:$0xff]
      %v1949 = vld [vmem:[%s7 + $0x20] sm:$0xff]
      %v1950 = vld [vmem:[%s7 + $0x28] sm:$0xff]
      %v1951 = vld [vmem:[%s7 + $0x30] sm:$0xff]
      %v1952 = vld [vmem:[%s7 + $0x38] sm:$0xff]
      %v1953 = vld [vmem:[%s7 + $0x40] sm:$0xff]
      %v1954 = vld [vmem:[%s7 + $0x48] sm:$0xff]
      %v1955 = vld [vmem:[%s7 + $0x50] sm:$0xff]
      %v1956 = vld [vmem:[%s7 + $0x58] sm:$0xff]
      %v1957 = vld [vmem:[%s7 + $0x60] sm:$0xff]
      %v1958 = vld [vmem:[%s7 + $0x68] sm:$0xff]
      %v1959 = vld [vmem:[%s7 + $0x70] sm:$0xff]
      %v1960 = vld [vmem:[%s7 + $0x78] sm:$0xff]
      %v1961 = vld [vmem:[%s7 + $0x80] sm:$0xff]
      %v1962 = vld [vmem:[%s7 + $0x88] sm:$0xff]
      %v1963 = vld [vmem:[%s7 + $0x90] sm:$0xff]
      %v1964 = vld [vmem:[%s7 + $0x98] sm:$0xff]
      %v1965 = vld [vmem:[%s7 + $0xa0] sm:$0xff]
      %v1966 = vld [vmem:[%s7 + $0xa8] sm:$0xff]
      %v1967 = vld [vmem:[%s7 + $0xb0] sm:$0xff]
      %v1968 = vld [vmem:[%s7 + $0xb8] sm:$0xff]
      %v1969 = vld [vmem:[%s7 + $0xc0] sm:$0xff]
      %v1970 = vld [vmem:[%s7 + $0xc8] sm:$0xff]
      %v1971 = vld [vmem:[%s7 + $0xd0] sm:$0xff]
      %v1972 = vld [vmem:[%s7 + $0xd8] sm:$0xff]
      %v1973 = vld [vmem:[%s7 + $0xe0] sm:$0xff]
      %v1974 = vld [vmem:[%s7 + $0xe8] sm:$0xff]
      %v1975 = vld [vmem:[%s7 + $0xf0] sm:$0xff]
      %v1976 = vld [vmem:[%s7 + $0xf8] sm:$0xff]
      %v1977 = vld [vmem:[%s7 + $0x100] sm:$0xff]
      %v1978 = vld [vmem:[%s7 + $0x108] sm:$0xff]
      %v1979 = vld [vmem:[%s7 + $0x110] sm:$0xff]
      %v1980 = vld [vmem:[%s7 + $0x118] sm:$0xff]
      %v1981 = vld [vmem:[%s7 + $0x120] sm:$0xff]
      %v1982 = vld [vmem:[%s7 + $0x128] sm:$0xff]
      %v1983 = vld [vmem:[%s7 + $0x130] sm:$0xff]
      %v1984 = vld [vmem:[%s7 + $0x138] sm:$0xff]
      %v1985 = vld [vmem:[%s7 + $0x140] sm:$0xff]
      %v1986 = vld [vmem:[%s7 + $0x148] sm:$0xff]
      %v1987 = vld [vmem:[%s7 + $0x150] sm:$0xff]
      %v1988 = vld [vmem:[%s7 + $0x158] sm:$0xff]
      %v1989 = vld [vmem:[%s7 + $0x160] sm:$0xff]
      %v1990 = vld [vmem:[%s7 + $0x168] sm:$0xff]
      %v1991 = vld [vmem:[%s7 + $0x170] sm:$0xff]
      %v1992 = vld [vmem:[%s7 + $0x178] sm:$0xff]
      %v1993 = vld [vmem:[%s7 + $0x180] sm:$0xff]
      %v1994 = vld [vmem:[%s7 + $0x188] sm:$0xff]
      %v1995 = vld [vmem:[%s7 + $0x190] sm:$0xff]
      %v1996 = vld [vmem:[%s7 + $0x198] sm:$0xff]
      %v1997 = vld [vmem:[%s7 + $0x1a0] sm:$0xff]
      %v1998 = vld [vmem:[%s7 + $0x1a8] sm:$0xff]
      %v1999 = vld [vmem:[%s7 + $0x1b0] sm:$0xff]
      %v2000 = vld [vmem:[%s7 + $0x1b8] sm:$0xff]
      %v2001 = vld [vmem:[%s7 + $0x1c0] sm:$0xff]
      %v2002 = vld [vmem:[%s7 + $0x1c8] sm:$0xff]
      %v2003 = vld [vmem:[%s7 + $0x1d0] sm:$0xff]
      %v2004 = vld [vmem:[%s7 + $0x1d8] sm:$0xff]
      %v2005 = vld [vmem:[%s7 + $0x1e0] sm:$0xff]
      %v2006 = vld [vmem:[%s7 + $0x1e8] sm:$0xff]
      %v2007 = vld [vmem:[%s7 + $0x1f0] sm:$0xff]
      %v2008 = vld [vmem:[%s7 + $0x1f8] sm:$0xff]
      %v2009 = vld [vmem:[%s8] sm:$0xff]
      %v2011 = vperm.slane %v2009, 0
      %v2012 = vperm.slane %v2009, 1
      %v2013 = vperm.slane %v2009, 2
      %v2014 = vperm.slane %v2009, 3
      %v2015 = vperm.slane %v2009, 4
      %v2016 = vperm.slane %v2009, 5
      %v2017 = vperm.slane %v2009, 6
      %v2018 = vperm.slane %v2009, 7
      %v2091 = vunpack.c.l.b16 %v1945
      %v2092 = vunpack.c.h.b16 %v1945
      %v2093 = vunpack.c.l.b16 %v1946
      %v2094 = vunpack.c.h.b16 %v1946
      %v2095 = vunpack.c.l.b16 %v1947
      %v2096 = vunpack.c.h.b16 %v1947
      %v2097 = vunpack.c.l.b16 %v1948
      %v2098 = vunpack.c.h.b16 %v1948
      %v2099 = vunpack.c.l.b16 %v1949
      %v2100 = vunpack.c.h.b16 %v1949
      %v2101 = vunpack.c.l.b16 %v1950
      %v2102 = vunpack.c.h.b16 %v1950
      %v2103 = vunpack.c.l.b16 %v1951
      %v2104 = vunpack.c.h.b16 %v1951
      %v2105 = vunpack.c.l.b16 %v1952
      %v2106 = vunpack.c.h.b16 %v1952
      %v2107 = vunpack.c.l.b16 %v1953
      %v2108 = vunpack.c.h.b16 %v1953
      %v2109 = vunpack.c.l.b16 %v1954
      %v2110 = vunpack.c.h.b16 %v1954
      %v2111 = vunpack.c.l.b16 %v1955
      %v2112 = vunpack.c.h.b16 %v1955
      %v2113 = vunpack.c.l.b16 %v1956
      %v2114 = vunpack.c.h.b16 %v1956
      %v2115 = vunpack.c.l.b16 %v1957
      %v2116 = vunpack.c.h.b16 %v1957
      %v2117 = vunpack.c.l.b16 %v1958
      %v2118 = vunpack.c.h.b16 %v1958
      %v2119 = vunpack.c.l.b16 %v1959
      %v2120 = vunpack.c.h.b16 %v1959
      %v2121 = vunpack.c.l.b16 %v1960
      %v2122 = vunpack.c.h.b16 %v1960
      %v2123 = vunpack.c.l.b16 %v1961
      %v2124 = vunpack.c.h.b16 %v1961
      %v2125 = vunpack.c.l.b16 %v1962
      %v2126 = vunpack.c.h.b16 %v1962
      %v2127 = vunpack.c.l.b16 %v1963
      %v2128 = vunpack.c.h.b16 %v1963
      %v2129 = vunpack.c.l.b16 %v1964
      %v2130 = vunpack.c.h.b16 %v1964
      %v2131 = vunpack.c.l.b16 %v1965
      %v2132 = vunpack.c.h.b16 %v1965
      %v2133 = vunpack.c.l.b16 %v1966
      %v2134 = vunpack.c.h.b16 %v1966
      %v2135 = vunpack.c.l.b16 %v1967
      %v2136 = vunpack.c.h.b16 %v1967
      %v2137 = vunpack.c.l.b16 %v1968
      %v2138 = vunpack.c.h.b16 %v1968
      %v2139 = vunpack.c.l.b16 %v1969
      %v2140 = vunpack.c.h.b16 %v1969
      %v2141 = vunpack.c.l.b16 %v1970
      %v2142 = vunpack.c.h.b16 %v1970
      %v2143 = vunpack.c.l.b16 %v1971
      %v2144 = vunpack.c.h.b16 %v1971
      %v2145 = vunpack.c.l.b16 %v1972
      %v2146 = vunpack.c.h.b16 %v1972
      %v2147 = vunpack.c.l.b16 %v1973
      %v2148 = vunpack.c.h.b16 %v1973
      %v2149 = vunpack.c.l.b16 %v1974
      %v2150 = vunpack.c.h.b16 %v1974
      %v2151 = vunpack.c.l.b16 %v1975
      %v2152 = vunpack.c.h.b16 %v1975
      %v2153 = vunpack.c.l.b16 %v1976
      %v2154 = vunpack.c.h.b16 %v1976
      %v2155 = vunpack.c.l.b16 %v1977
      %v2156 = vunpack.c.h.b16 %v1977
      %v2157 = vunpack.c.l.b16 %v1978
      %v2158 = vunpack.c.h.b16 %v1978
      %v2159 = vunpack.c.l.b16 %v1979
      %v2160 = vunpack.c.h.b16 %v1979
      %v2161 = vunpack.c.l.b16 %v1980
      %v2162 = vunpack.c.h.b16 %v1980
      %v2163 = vunpack.c.l.b16 %v1981
      %v2164 = vunpack.c.h.b16 %v1981
      %v2165 = vunpack.c.l.b16 %v1982
      %v2166 = vunpack.c.h.b16 %v1982
      %v2167 = vunpack.c.l.b16 %v1983
      %v2168 = vunpack.c.h.b16 %v1983
      %v2169 = vunpack.c.l.b16 %v1984
      %v2170 = vunpack.c.h.b16 %v1984
      %v2171 = vunpack.c.l.b16 %v1985
      %v2172 = vunpack.c.h.b16 %v1985
      %v2173 = vunpack.c.l.b16 %v1986
      %v2174 = vunpack.c.h.b16 %v1986
      %v2175 = vunpack.c.l.b16 %v1987
      %v2176 = vunpack.c.h.b16 %v1987
      %v2177 = vunpack.c.l.b16 %v1988
      %v2178 = vunpack.c.h.b16 %v1988
      %v2179 = vunpack.c.l.b16 %v1989
      %v2180 = vunpack.c.h.b16 %v1989
      %v2181 = vunpack.c.l.b16 %v1990
      %v2182 = vunpack.c.h.b16 %v1990
      %v2183 = vunpack.c.l.b16 %v1991
      %v2184 = vunpack.c.h.b16 %v1991
      %v2185 = vunpack.c.l.b16 %v1992
      %v2186 = vunpack.c.h.b16 %v1992
      %v2187 = vunpack.c.l.b16 %v1993
      %v2188 = vunpack.c.h.b16 %v1993
      %v2189 = vunpack.c.l.b16 %v1994
      %v2190 = vunpack.c.h.b16 %v1994
      %v2191 = vunpack.c.l.b16 %v1995
      %v2192 = vunpack.c.h.b16 %v1995
      %v2193 = vunpack.c.l.b16 %v1996
      %v2194 = vunpack.c.h.b16 %v1996
      %v2195 = vunpack.c.l.b16 %v1997
      %v2196 = vunpack.c.h.b16 %v1997
      %v2197 = vunpack.c.l.b16 %v1998
      %v2198 = vunpack.c.h.b16 %v1998
      %v2199 = vunpack.c.l.b16 %v1999
      %v2200 = vunpack.c.h.b16 %v1999
      %v2201 = vunpack.c.l.b16 %v2000
      %v2202 = vunpack.c.h.b16 %v2000
      %v2203 = vunpack.c.l.b16 %v2001
      %v2204 = vunpack.c.h.b16 %v2001
      %v2205 = vunpack.c.l.b16 %v2002
      %v2206 = vunpack.c.h.b16 %v2002
      %v2207 = vunpack.c.l.b16 %v2003
      %v2208 = vunpack.c.h.b16 %v2003
      %v2209 = vunpack.c.l.b16 %v2004
      %v2210 = vunpack.c.h.b16 %v2004
      %v2211 = vunpack.c.l.b16 %v2005
      %v2212 = vunpack.c.h.b16 %v2005
      %v2213 = vunpack.c.l.b16 %v2006
      %v2214 = vunpack.c.h.b16 %v2006
      %v2215 = vunpack.c.l.b16 %v2007
      %v2216 = vunpack.c.h.b16 %v2007
      %v2217 = vunpack.c.l.b16 %v2008
      %v2218 = vunpack.c.h.b16 %v2008
      %v2219 = vpack.c.b16 %v2099, %v2091
      %v2220 = vpack.c.b16 %v2100, %v2092
      %v2221 = vpack.c.b16 %v2101, %v2093
      %v2222 = vpack.c.b16 %v2102, %v2094
      %v2223 = vpack.c.b16 %v2103, %v2095
      %v2224 = vpack.c.b16 %v2104, %v2096
      %v2225 = vpack.c.b16 %v2105, %v2097
      %v2226 = vpack.c.b16 %v2106, %v2098
      %v2227 = vpack.c.b16 %v2115, %v2107
      %v2228 = vpack.c.b16 %v2116, %v2108
      %v2229 = vpack.c.b16 %v2117, %v2109
      %v2230 = vpack.c.b16 %v2118, %v2110
      %v2231 = vpack.c.b16 %v2119, %v2111
      %v2232 = vpack.c.b16 %v2120, %v2112
      %v2233 = vpack.c.b16 %v2121, %v2113
      %v2234 = vpack.c.b16 %v2122, %v2114
      %v2235 = vpack.c.b16 %v2131, %v2123
      %v2236 = vpack.c.b16 %v2132, %v2124
      %v2237 = vpack.c.b16 %v2133, %v2125
      %v2238 = vpack.c.b16 %v2134, %v2126
      %v2239 = vpack.c.b16 %v2135, %v2127
      %v2240 = vpack.c.b16 %v2136, %v2128
      %v2241 = vpack.c.b16 %v2137, %v2129
      %v2242 = vpack.c.b16 %v2138, %v2130
      %v2243 = vpack.c.b16 %v2147, %v2139
      %v2244 = vpack.c.b16 %v2148, %v2140
      %v2245 = vpack.c.b16 %v2149, %v2141
      %v2246 = vpack.c.b16 %v2150, %v2142
      %v2247 = vpack.c.b16 %v2151, %v2143
      %v2248 = vpack.c.b16 %v2152, %v2144
      %v2249 = vpack.c.b16 %v2153, %v2145
      %v2250 = vpack.c.b16 %v2154, %v2146
      %v2251 = vpack.c.b16 %v2163, %v2155
      %v2252 = vpack.c.b16 %v2164, %v2156
      %v2253 = vpack.c.b16 %v2165, %v2157
      %v2254 = vpack.c.b16 %v2166, %v2158
      %v2255 = vpack.c.b16 %v2167, %v2159
      %v2256 = vpack.c.b16 %v2168, %v2160
      %v2257 = vpack.c.b16 %v2169, %v2161
      %v2258 = vpack.c.b16 %v2170, %v2162
      %v2259 = vpack.c.b16 %v2179, %v2171
      %v2260 = vpack.c.b16 %v2180, %v2172
      %v2261 = vpack.c.b16 %v2181, %v2173
      %v2262 = vpack.c.b16 %v2182, %v2174
      %v2263 = vpack.c.b16 %v2183, %v2175
      %v2264 = vpack.c.b16 %v2184, %v2176
      %v2265 = vpack.c.b16 %v2185, %v2177
      %v2266 = vpack.c.b16 %v2186, %v2178
      %v2267 = vpack.c.b16 %v2195, %v2187
      %v2268 = vpack.c.b16 %v2196, %v2188
      %v2269 = vpack.c.b16 %v2197, %v2189
      %v2270 = vpack.c.b16 %v2198, %v2190
      %v2271 = vpack.c.b16 %v2199, %v2191
      %v2272 = vpack.c.b16 %v2200, %v2192
      %v2273 = vpack.c.b16 %v2201, %v2193
      %v2274 = vpack.c.b16 %v2202, %v2194
      %v2275 = vpack.c.b16 %v2211, %v2203
      %v2276 = vpack.c.b16 %v2212, %v2204
      %v2277 = vpack.c.b16 %v2213, %v2205
      %v2278 = vpack.c.b16 %v2214, %v2206
      %v2279 = vpack.c.b16 %v2215, %v2207
      %v2280 = vpack.c.b16 %v2216, %v2208
      %v2281 = vpack.c.b16 %v2217, %v2209
      %v2282 = vpack.c.b16 %v2218, %v2210
      %2347 = vmatpush.bf16.msra.mxu0 %v2275
      %2348 = vmatpush.bf16.msra.mxu0 %v2267
      %2349 = vmatpush.bf16.msra.mxu0 %v2259
      %2350 = vmatpush.bf16.msra.mxu0 %v2251
      %2351 = vmatpush.bf16.msra.mxu0 %v2243
      %2352 = vmatpush.bf16.msra.mxu0 %v2235
      %2353 = vmatpush.bf16.msra.mxu0 %v2227
      %2354 = vmatpush.bf16.msra.mxu0 %v2219
      %2355 = vmatmul.bf16.gmra.mxu0 %v1937
      %v2356 = vpop.f32.mrf.mxu0
      %v2357 = vadd.f32 %v2011, %v2356
      %v2358 = vpop.f32.mrf.mxu0
      %v2359 = vadd.f32 %v2011, %v2358
      %2360 = vmatmul.bf16.gmra.mxu0 %v1938
      %v2361 = vpop.f32.mrf.mxu0
      %v2362 = vadd.f32 %v2011, %v2361
      %v2363 = vpop.f32.mrf.mxu0
      %v2364 = vadd.f32 %v2011, %v2363
      %2365 = vmatmul.bf16.gmra.mxu0 %v1939
      %v2366 = vpop.f32.mrf.mxu0
      %v2367 = vadd.f32 %v2011, %v2366
      %v2368 = vpop.f32.mrf.mxu0
      %v2369 = vadd.f32 %v2011, %v2368
      %2370 = vmatmul.bf16.gmra.mxu0 %v1940
      %v2371 = vpop.f32.mrf.mxu0
      %v2372 = vadd.f32 %v2011, %v2371
      %v2373 = vpop.f32.mrf.mxu0
      %v2374 = vadd.f32 %v2011, %v2373
      %2375 = vmatmul.bf16.gmra.mxu0 %v1941
      %v2376 = vpop.f32.mrf.mxu0
      %v2377 = vadd.f32 %v2011, %v2376
      %v2378 = vpop.f32.mrf.mxu0
      %v2379 = vadd.f32 %v2011, %v2378
      %2380 = vmatmul.bf16.gmra.mxu0 %v1942
      %v2381 = vpop.f32.mrf.mxu0
      %v2382 = vadd.f32 %v2011, %v2381
      %v2383 = vpop.f32.mrf.mxu0
      %v2384 = vadd.f32 %v2011, %v2383
      %2385 = vmatmul.bf16.gmra.mxu0 %v1943
      %v2386 = vpop.f32.mrf.mxu0
      %v2387 = vadd.f32 %v2011, %v2386
      %v2388 = vpop.f32.mrf.mxu0
      %v2389 = vadd.f32 %v2011, %v2388
      %2390 = vmatmul.bf16.gmra.mxu0 %v1944
      %v2391 = vpop.f32.mrf.mxu0
      %v2392 = vadd.f32 %v2011, %v2391
      %v2393 = vpop.f32.mrf.mxu0
      %v2394 = vadd.f32 %v2011, %v2393
      %2395 = vdwg.mxu0
      %2396 = vmatpush.bf16.msra.mxu0 %v2276
      %2397 = vmatpush.bf16.msra.mxu0 %v2268
      %2398 = vmatpush.bf16.msra.mxu0 %v2260
      %2399 = vmatpush.bf16.msra.mxu0 %v2252
      %2400 = vmatpush.bf16.msra.mxu0 %v2244
      %2401 = vmatpush.bf16.msra.mxu0 %v2236
      %2402 = vmatpush.bf16.msra.mxu0 %v2228
      %2403 = vmatpush.bf16.msra.mxu0 %v2220
      %2404 = vmatmul.bf16.gmra.mxu0 %v1937
      %v2405 = vpop.f32.mrf.mxu0
      %v2406 = vadd.f32 %v2012, %v2405
      %v2407 = vpop.f32.mrf.mxu0
      %v2408 = vadd.f32 %v2012, %v2407
      %2409 = vmatmul.bf16.gmra.mxu0 %v1938
      %v2410 = vpop.f32.mrf.mxu0
      %v2411 = vadd.f32 %v2012, %v2410
      %v2412 = vpop.f32.mrf.mxu0
      %v2413 = vadd.f32 %v2012, %v2412
      %2414 = vmatmul.bf16.gmra.mxu0 %v1939
      %v2415 = vpop.f32.mrf.mxu0
      %v2416 = vadd.f32 %v2012, %v2415
      %v2417 = vpop.f32.mrf.mxu0
      %v2418 = vadd.f32 %v2012, %v2417
      %2419 = vmatmul.bf16.gmra.mxu0 %v1940
      %v2420 = vpop.f32.mrf.mxu0
      %v2421 = vadd.f32 %v2012, %v2420
      %v2422 = vpop.f32.mrf.mxu0
      %v2423 = vadd.f32 %v2012, %v2422
      %2424 = vmatmul.bf16.gmra.mxu0 %v1941
      %v2425 = vpop.f32.mrf.mxu0
      %v2426 = vadd.f32 %v2012, %v2425
      %v2427 = vpop.f32.mrf.mxu0
      %v2428 = vadd.f32 %v2012, %v2427
      %2429 = vmatmul.bf16.gmra.mxu0 %v1942
      %v2430 = vpop.f32.mrf.mxu0
      %v2431 = vadd.f32 %v2012, %v2430
      %v2432 = vpop.f32.mrf.mxu0
      %v2433 = vadd.f32 %v2012, %v2432
      %2434 = vmatmul.bf16.gmra.mxu0 %v1943
      %v2435 = vpop.f32.mrf.mxu0
      %v2436 = vadd.f32 %v2012, %v2435
      %v2437 = vpop.f32.mrf.mxu0
      %v2438 = vadd.f32 %v2012, %v2437
      %2439 = vmatmul.bf16.gmra.mxu0 %v1944
      %v2440 = vpop.f32.mrf.mxu0
      %v2441 = vadd.f32 %v2012, %v2440
      %v2442 = vpop.f32.mrf.mxu0
      %v2443 = vadd.f32 %v2012, %v2442
      %2444 = vdwg.mxu0
      %2445 = vmatpush.bf16.msra.mxu0 %v2277
      %2446 = vmatpush.bf16.msra.mxu0 %v2269
      %2447 = vmatpush.bf16.msra.mxu0 %v2261
      %2448 = vmatpush.bf16.msra.mxu0 %v2253
      %2449 = vmatpush.bf16.msra.mxu0 %v2245
      %2450 = vmatpush.bf16.msra.mxu0 %v2237
      %2451 = vmatpush.bf16.msra.mxu0 %v2229
      %2452 = vmatpush.bf16.msra.mxu0 %v2221
      %2453 = vmatmul.bf16.gmra.mxu0 %v1937
      %v2454 = vpop.f32.mrf.mxu0
      %v2455 = vadd.f32 %v2013, %v2454
      %v2456 = vpop.f32.mrf.mxu0
      %v2457 = vadd.f32 %v2013, %v2456
      %2458 = vmatmul.bf16.gmra.mxu0 %v1938
      %v2459 = vpop.f32.mrf.mxu0
      %v2460 = vadd.f32 %v2013, %v2459
      %v2461 = vpop.f32.mrf.mxu0
      %v2462 = vadd.f32 %v2013, %v2461
      %2463 = vmatmul.bf16.gmra.mxu0 %v1939
      %v2464 = vpop.f32.mrf.mxu0
      %v2465 = vadd.f32 %v2013, %v2464
      %v2466 = vpop.f32.mrf.mxu0
      %v2467 = vadd.f32 %v2013, %v2466
      %2468 = vmatmul.bf16.gmra.mxu0 %v1940
      %v2469 = vpop.f32.mrf.mxu0
      %v2470 = vadd.f32 %v2013, %v2469
      %v2471 = vpop.f32.mrf.mxu0
      %v2472 = vadd.f32 %v2013, %v2471
      %2473 = vmatmul.bf16.gmra.mxu0 %v1941
      %v2474 = vpop.f32.mrf.mxu0
      %v2475 = vadd.f32 %v2013, %v2474
      %v2476 = vpop.f32.mrf.mxu0
      %v2477 = vadd.f32 %v2013, %v2476
      %2478 = vmatmul.bf16.gmra.mxu0 %v1942
      %v2479 = vpop.f32.mrf.mxu0
      %v2480 = vadd.f32 %v2013, %v2479
      %v2481 = vpop.f32.mrf.mxu0
      %v2482 = vadd.f32 %v2013, %v2481
      %2483 = vmatmul.bf16.gmra.mxu0 %v1943
      %v2484 = vpop.f32.mrf.mxu0
      %v2485 = vadd.f32 %v2013, %v2484
      %v2486 = vpop.f32.mrf.mxu0
      %v2487 = vadd.f32 %v2013, %v2486
      %2488 = vmatmul.bf16.gmra.mxu0 %v1944
      %v2489 = vpop.f32.mrf.mxu0
      %v2490 = vadd.f32 %v2013, %v2489
      %v2491 = vpop.f32.mrf.mxu0
      %v2492 = vadd.f32 %v2013, %v2491
      %2493 = vdwg.mxu0
      %2494 = vmatpush.bf16.msra.mxu0 %v2278
      %2495 = vmatpush.bf16.msra.mxu0 %v2270
      %2496 = vmatpush.bf16.msra.mxu0 %v2262
      %2497 = vmatpush.bf16.msra.mxu0 %v2254
      %2498 = vmatpush.bf16.msra.mxu0 %v2246
      %2499 = vmatpush.bf16.msra.mxu0 %v2238
      %2500 = vmatpush.bf16.msra.mxu0 %v2230
      %2501 = vmatpush.bf16.msra.mxu0 %v2222
      %2502 = vmatmul.bf16.gmra.mxu0 %v1937
      %v2503 = vpop.f32.mrf.mxu0
      %v2504 = vadd.f32 %v2014, %v2503
      %v2505 = vpop.f32.mrf.mxu0
      %v2506 = vadd.f32 %v2014, %v2505
      %2507 = vmatmul.bf16.gmra.mxu0 %v1938
      %v2508 = vpop.f32.mrf.mxu0
      %v2509 = vadd.f32 %v2014, %v2508
      %v2510 = vpop.f32.mrf.mxu0
      %v2511 = vadd.f32 %v2014, %v2510
      %2512 = vmatmul.bf16.gmra.mxu0 %v1939
      %v2513 = vpop.f32.mrf.mxu0
      %v2514 = vadd.f32 %v2014, %v2513
      %v2515 = vpop.f32.mrf.mxu0
      %v2516 = vadd.f32 %v2014, %v2515
      %2517 = vmatmul.bf16.gmra.mxu0 %v1940
      %v2518 = vpop.f32.mrf.mxu0
      %v2519 = vadd.f32 %v2014, %v2518
      %v2520 = vpop.f32.mrf.mxu0
      %v2521 = vadd.f32 %v2014, %v2520
      %2522 = vmatmul.bf16.gmra.mxu0 %v1941
      %v2523 = vpop.f32.mrf.mxu0
      %v2524 = vadd.f32 %v2014, %v2523
      %v2525 = vpop.f32.mrf.mxu0
      %v2526 = vadd.f32 %v2014, %v2525
      %2527 = vmatmul.bf16.gmra.mxu0 %v1942
      %v2528 = vpop.f32.mrf.mxu0
      %v2529 = vadd.f32 %v2014, %v2528
      %v2530 = vpop.f32.mrf.mxu0
      %v2531 = vadd.f32 %v2014, %v2530
      %2532 = vmatmul.bf16.gmra.mxu0 %v1943
      %v2533 = vpop.f32.mrf.mxu0
      %v2534 = vadd.f32 %v2014, %v2533
      %v2535 = vpop.f32.mrf.mxu0
      %v2536 = vadd.f32 %v2014, %v2535
      %2537 = vmatmul.bf16.gmra.mxu0 %v1944
      %v2538 = vpop.f32.mrf.mxu0
      %v2539 = vadd.f32 %v2014, %v2538
      %v2540 = vpop.f32.mrf.mxu0
      %v2541 = vadd.f32 %v2014, %v2540
      %2542 = vdwg.mxu0
      %2543 = vmatpush.bf16.msra.mxu0 %v2279
      %2544 = vmatpush.bf16.msra.mxu0 %v2271
      %2545 = vmatpush.bf16.msra.mxu0 %v2263
      %2546 = vmatpush.bf16.msra.mxu0 %v2255
      %2547 = vmatpush.bf16.msra.mxu0 %v2247
      %2548 = vmatpush.bf16.msra.mxu0 %v2239
      %2549 = vmatpush.bf16.msra.mxu0 %v2231
      %2550 = vmatpush.bf16.msra.mxu0 %v2223
      %2551 = vmatmul.bf16.gmra.mxu0 %v1937
      %v2552 = vpop.f32.mrf.mxu0
      %v2553 = vadd.f32 %v2015, %v2552
      %v2554 = vpop.f32.mrf.mxu0
      %v2555 = vadd.f32 %v2015, %v2554
      %2556 = vmatmul.bf16.gmra.mxu0 %v1938
      %v2557 = vpop.f32.mrf.mxu0
      %v2558 = vadd.f32 %v2015, %v2557
      %v2559 = vpop.f32.mrf.mxu0
      %v2560 = vadd.f32 %v2015, %v2559
      %2561 = vmatmul.bf16.gmra.mxu0 %v1939
      %v2562 = vpop.f32.mrf.mxu0
      %v2563 = vadd.f32 %v2015, %v2562
      %v2564 = vpop.f32.mrf.mxu0
      %v2565 = vadd.f32 %v2015, %v2564
      %2566 = vmatmul.bf16.gmra.mxu0 %v1940
      %v2567 = vpop.f32.mrf.mxu0
      %v2568 = vadd.f32 %v2015, %v2567
      %v2569 = vpop.f32.mrf.mxu0
      %v2570 = vadd.f32 %v2015, %v2569
      %2571 = vmatmul.bf16.gmra.mxu0 %v1941
      %v2572 = vpop.f32.mrf.mxu0
      %v2573 = vadd.f32 %v2015, %v2572
      %v2574 = vpop.f32.mrf.mxu0
      %v2575 = vadd.f32 %v2015, %v2574
      %2576 = vmatmul.bf16.gmra.mxu0 %v1942
      %v2577 = vpop.f32.mrf.mxu0
      %v2578 = vadd.f32 %v2015, %v2577
      %v2579 = vpop.f32.mrf.mxu0
      %v2580 = vadd.f32 %v2015, %v2579
      %2581 = vmatmul.bf16.gmra.mxu0 %v1943
      %v2582 = vpop.f32.mrf.mxu0
      %v2583 = vadd.f32 %v2015, %v2582
      %v2584 = vpop.f32.mrf.mxu0
      %v2585 = vadd.f32 %v2015, %v2584
      %2586 = vmatmul.bf16.gmra.mxu0 %v1944
      %v2587 = vpop.f32.mrf.mxu0
      %v2588 = vadd.f32 %v2015, %v2587
      %v2589 = vpop.f32.mrf.mxu0
      %v2590 = vadd.f32 %v2015, %v2589
      %2591 = vdwg.mxu0
      %2592 = vmatpush.bf16.msra.mxu0 %v2280
      %2593 = vmatpush.bf16.msra.mxu0 %v2272
      %2594 = vmatpush.bf16.msra.mxu0 %v2264
      %2595 = vmatpush.bf16.msra.mxu0 %v2256
      %2596 = vmatpush.bf16.msra.mxu0 %v2248
      %2597 = vmatpush.bf16.msra.mxu0 %v2240
      %2598 = vmatpush.bf16.msra.mxu0 %v2232
      %2599 = vmatpush.bf16.msra.mxu0 %v2224
      %2600 = vmatmul.bf16.gmra.mxu0 %v1937
      %v2601 = vpop.f32.mrf.mxu0
      %v2602 = vadd.f32 %v2016, %v2601
      %v2603 = vpop.f32.mrf.mxu0
      %v2604 = vadd.f32 %v2016, %v2603
      %2605 = vmatmul.bf16.gmra.mxu0 %v1938
      %v2606 = vpop.f32.mrf.mxu0
      %v2607 = vadd.f32 %v2016, %v2606
      %v2608 = vpop.f32.mrf.mxu0
      %v2609 = vadd.f32 %v2016, %v2608
      %2610 = vmatmul.bf16.gmra.mxu0 %v1939
      %v2611 = vpop.f32.mrf.mxu0
      %v2612 = vadd.f32 %v2016, %v2611
      %v2613 = vpop.f32.mrf.mxu0
      %v2614 = vadd.f32 %v2016, %v2613
      %2615 = vmatmul.bf16.gmra.mxu0 %v1940
      %v2616 = vpop.f32.mrf.mxu0
      %v2617 = vadd.f32 %v2016, %v2616
      %v2618 = vpop.f32.mrf.mxu0
      %v2619 = vadd.f32 %v2016, %v2618
      %2620 = vmatmul.bf16.gmra.mxu0 %v1941
      %v2621 = vpop.f32.mrf.mxu0
      %v2622 = vadd.f32 %v2016, %v2621
      %v2623 = vpop.f32.mrf.mxu0
      %v2624 = vadd.f32 %v2016, %v2623
      %2625 = vmatmul.bf16.gmra.mxu0 %v1942
      %v2626 = vpop.f32.mrf.mxu0
      %v2627 = vadd.f32 %v2016, %v2626
      %v2628 = vpop.f32.mrf.mxu0
      %v2629 = vadd.f32 %v2016, %v2628
      %2630 = vmatmul.bf16.gmra.mxu0 %v1943
      %v2631 = vpop.f32.mrf.mxu0
      %v2632 = vadd.f32 %v2016, %v2631
      %v2633 = vpop.f32.mrf.mxu0
      %v2634 = vadd.f32 %v2016, %v2633
      %2635 = vmatmul.bf16.gmra.mxu0 %v1944
      %v2636 = vpop.f32.mrf.mxu0
      %v2637 = vadd.f32 %v2016, %v2636
      %v2638 = vpop.f32.mrf.mxu0
      %v2639 = vadd.f32 %v2016, %v2638
      %2640 = vdwg.mxu0
      %2641 = vmatpush.bf16.msra.mxu0 %v2281
      %2642 = vmatpush.bf16.msra.mxu0 %v2273
      %2643 = vmatpush.bf16.msra.mxu0 %v2265
      %2644 = vmatpush.bf16.msra.mxu0 %v2257
      %2645 = vmatpush.bf16.msra.mxu0 %v2249
      %2646 = vmatpush.bf16.msra.mxu0 %v2241
      %2647 = vmatpush.bf16.msra.mxu0 %v2233
      %2648 = vmatpush.bf16.msra.mxu0 %v2225
      %2649 = vmatmul.bf16.gmra.mxu0 %v1937
      %v2650 = vpop.f32.mrf.mxu0
      %v2651 = vadd.f32 %v2017, %v2650
      %v2652 = vpop.f32.mrf.mxu0
      %v2653 = vadd.f32 %v2017, %v2652
      %2654 = vmatmul.bf16.gmra.mxu0 %v1938
      %v2655 = vpop.f32.mrf.mxu0
      %v2656 = vadd.f32 %v2017, %v2655
      %v2657 = vpop.f32.mrf.mxu0
      %v2658 = vadd.f32 %v2017, %v2657
      %2659 = vmatmul.bf16.gmra.mxu0 %v1939
      %v2660 = vpop.f32.mrf.mxu0
      %v2661 = vadd.f32 %v2017, %v2660
      %v2662 = vpop.f32.mrf.mxu0
      %v2663 = vadd.f32 %v2017, %v2662
      %2664 = vmatmul.bf16.gmra.mxu0 %v1940
      %v2665 = vpop.f32.mrf.mxu0
      %v2666 = vadd.f32 %v2017, %v2665
      %v2667 = vpop.f32.mrf.mxu0
      %v2668 = vadd.f32 %v2017, %v2667
      %2669 = vmatmul.bf16.gmra.mxu0 %v1941
      %v2670 = vpop.f32.mrf.mxu0
      %v2671 = vadd.f32 %v2017, %v2670
      %v2672 = vpop.f32.mrf.mxu0
      %v2673 = vadd.f32 %v2017, %v2672
      %2674 = vmatmul.bf16.gmra.mxu0 %v1942
      %v2675 = vpop.f32.mrf.mxu0
      %v2676 = vadd.f32 %v2017, %v2675
      %v2677 = vpop.f32.mrf.mxu0
      %v2678 = vadd.f32 %v2017, %v2677
      %2679 = vmatmul.bf16.gmra.mxu0 %v1943
      %v2680 = vpop.f32.mrf.mxu0
      %v2681 = vadd.f32 %v2017, %v2680
      %v2682 = vpop.f32.mrf.mxu0
      %v2683 = vadd.f32 %v2017, %v2682
      %2684 = vmatmul.bf16.gmra.mxu0 %v1944
      %v2685 = vpop.f32.mrf.mxu0
      %v2686 = vadd.f32 %v2017, %v2685
      %v2687 = vpop.f32.mrf.mxu0
      %v2688 = vadd.f32 %v2017, %v2687
      %2689 = vdwg.mxu0
      %2690 = vmatpush.bf16.msra.mxu0 %v2282
      %2691 = vmatpush.bf16.msra.mxu0 %v2274
      %2692 = vmatpush.bf16.msra.mxu0 %v2266
      %2693 = vmatpush.bf16.msra.mxu0 %v2258
      %2694 = vmatpush.bf16.msra.mxu0 %v2250
      %2695 = vmatpush.bf16.msra.mxu0 %v2242
      %2696 = vmatpush.bf16.msra.mxu0 %v2234
      %2697 = vmatpush.bf16.msra.mxu0 %v2226
      %2698 = vmatmul.bf16.gmra.mxu0 %v1937
      %v2699 = vpop.f32.mrf.mxu0
      %v2700 = vadd.f32 %v2018, %v2699
      %v2701 = vpop.f32.mrf.mxu0
      %v2702 = vadd.f32 %v2018, %v2701
      %2703 = vmatmul.bf16.gmra.mxu0 %v1938
      %v2704 = vpop.f32.mrf.mxu0
      %v2705 = vadd.f32 %v2018, %v2704
      %v2706 = vpop.f32.mrf.mxu0
      %v2707 = vadd.f32 %v2018, %v2706
      %2708 = vmatmul.bf16.gmra.mxu0 %v1939
      %v2709 = vpop.f32.mrf.mxu0
      %v2710 = vadd.f32 %v2018, %v2709
      %v2711 = vpop.f32.mrf.mxu0
      %v2712 = vadd.f32 %v2018, %v2711
      %2713 = vmatmul.bf16.gmra.mxu0 %v1940
      %v2714 = vpop.f32.mrf.mxu0
      %v2715 = vadd.f32 %v2018, %v2714
      %v2716 = vpop.f32.mrf.mxu0
      %v2717 = vadd.f32 %v2018, %v2716
      %2718 = vmatmul.bf16.gmra.mxu0 %v1941
      %v2719 = vpop.f32.mrf.mxu0
      %v2720 = vadd.f32 %v2018, %v2719
      %v2721 = vpop.f32.mrf.mxu0
      %v2722 = vadd.f32 %v2018, %v2721
      %2723 = vmatmul.bf16.gmra.mxu0 %v1942
      %v2724 = vpop.f32.mrf.mxu0
      %v2725 = vadd.f32 %v2018, %v2724
      %v2726 = vpop.f32.mrf.mxu0
      %v2727 = vadd.f32 %v2018, %v2726
      %2728 = vmatmul.bf16.gmra.mxu0 %v1943
      %v2729 = vpop.f32.mrf.mxu0
      %v2730 = vadd.f32 %v2018, %v2729
      %v2731 = vpop.f32.mrf.mxu0
      %v2732 = vadd.f32 %v2018, %v2731
      %2733 = vmatmul.bf16.gmra.mxu0 %v1944
      %v2734 = vpop.f32.mrf.mxu0
      %v2735 = vadd.f32 %v2018, %v2734
      %v2736 = vpop.f32.mrf.mxu0
      %v2737 = vadd.f32 %v2018, %v2736
      %2738 = vdwg.mxu0
      %v2739 = vmax.f32 %v2357, 0.0
      %v2740 = vmax.f32 %v2406, 0.0
      %v2741 = vmax.f32 %v2455, 0.0
      %v2742 = vmax.f32 %v2504, 0.0
      %v2743 = vmax.f32 %v2553, 0.0
      %v2744 = vmax.f32 %v2602, 0.0
      %v2745 = vmax.f32 %v2651, 0.0
      %v2746 = vmax.f32 %v2700, 0.0
      %v2747 = vmax.f32 %v2359, 0.0
      %v2748 = vmax.f32 %v2408, 0.0
      %v2749 = vmax.f32 %v2457, 0.0
      %v2750 = vmax.f32 %v2506, 0.0
      %v2751 = vmax.f32 %v2555, 0.0
      %v2752 = vmax.f32 %v2604, 0.0
      %v2753 = vmax.f32 %v2653, 0.0
      %v2754 = vmax.f32 %v2702, 0.0
      %v2755 = vmax.f32 %v2362, 0.0
      %v2756 = vmax.f32 %v2411, 0.0
      %v2757 = vmax.f32 %v2460, 0.0
      %v2758 = vmax.f32 %v2509, 0.0
      %v2759 = vmax.f32 %v2558, 0.0
      %v2760 = vmax.f32 %v2607, 0.0
      %v2761 = vmax.f32 %v2656, 0.0
      %v2762 = vmax.f32 %v2705, 0.0
      %v2763 = vmax.f32 %v2364, 0.0
      %v2764 = vmax.f32 %v2413, 0.0
      %v2765 = vmax.f32 %v2462, 0.0
      %v2766 = vmax.f32 %v2511, 0.0
      %v2767 = vmax.f32 %v2560, 0.0
      %v2768 = vmax.f32 %v2609, 0.0
      %v2769 = vmax.f32 %v2658, 0.0
      %v2770 = vmax.f32 %v2707, 0.0
      %v2771 = vmax.f32 %v2367, 0.0
      %v2772 = vmax.f32 %v2416, 0.0
      %v2773 = vmax.f32 %v2465, 0.0
      %v2774 = vmax.f32 %v2514, 0.0
      %v2775 = vmax.f32 %v2563, 0.0
      %v2776 = vmax.f32 %v2612, 0.0
      %v2777 = vmax.f32 %v2661, 0.0
      %v2778 = vmax.f32 %v2710, 0.0
      %v2779 = vmax.f32 %v2369, 0.0
      %v2780 = vmax.f32 %v2418, 0.0
      %v2781 = vmax.f32 %v2467, 0.0
      %v2782 = vmax.f32 %v2516, 0.0
      %v2783 = vmax.f32 %v2565, 0.0
      %v2784 = vmax.f32 %v2614, 0.0
      %v2785 = vmax.f32 %v2663, 0.0
      %v2786 = vmax.f32 %v2712, 0.0
      %v2787 = vmax.f32 %v2372, 0.0
      %v2788 = vmax.f32 %v2421, 0.0
      %v2789 = vmax.f32 %v2470, 0.0
      %v2790 = vmax.f32 %v2519, 0.0
      %v2791 = vmax.f32 %v2568, 0.0
      %v2792 = vmax.f32 %v2617, 0.0
      %v2793 = vmax.f32 %v2666, 0.0
      %v2794 = vmax.f32 %v2715, 0.0
      %v2795 = vmax.f32 %v2374, 0.0
      %v2796 = vmax.f32 %v2423, 0.0
      %v2797 = vmax.f32 %v2472, 0.0
      %v2798 = vmax.f32 %v2521, 0.0
      %v2799 = vmax.f32 %v2570, 0.0
      %v2800 = vmax.f32 %v2619, 0.0
      %v2801 = vmax.f32 %v2668, 0.0
      %v2802 = vmax.f32 %v2717, 0.0
      %v2803 = vmax.f32 %v2377, 0.0
      %v2804 = vmax.f32 %v2426, 0.0
      %v2805 = vmax.f32 %v2475, 0.0
      %v2806 = vmax.f32 %v2524, 0.0
      %v2807 = vmax.f32 %v2573, 0.0
      %v2808 = vmax.f32 %v2622, 0.0
      %v2809 = vmax.f32 %v2671, 0.0
      %v2810 = vmax.f32 %v2720, 0.0
      %v2811 = vmax.f32 %v2379, 0.0
      %v2812 = vmax.f32 %v2428, 0.0
      %v2813 = vmax.f32 %v2477, 0.0
      %v2814 = vmax.f32 %v2526, 0.0
      %v2815 = vmax.f32 %v2575, 0.0
      %v2816 = vmax.f32 %v2624, 0.0
      %v2817 = vmax.f32 %v2673, 0.0
      %v2818 = vmax.f32 %v2722, 0.0
      %v2819 = vmax.f32 %v2382, 0.0
      %v2820 = vmax.f32 %v2431, 0.0
      %v2821 = vmax.f32 %v2480, 0.0
      %v2822 = vmax.f32 %v2529, 0.0
      %v2823 = vmax.f32 %v2578, 0.0
      %v2824 = vmax.f32 %v2627, 0.0
      %v2825 = vmax.f32 %v2676, 0.0
      %v2826 = vmax.f32 %v2725, 0.0
      %v2827 = vmax.f32 %v2384, 0.0
      %v2828 = vmax.f32 %v2433, 0.0
      %v2829 = vmax.f32 %v2482, 0.0
      %v2830 = vmax.f32 %v2531, 0.0
      %v2831 = vmax.f32 %v2580, 0.0
      %v2832 = vmax.f32 %v2629, 0.0
      %v2833 = vmax.f32 %v2678, 0.0
      %v2834 = vmax.f32 %v2727, 0.0
      %v2835 = vmax.f32 %v2387, 0.0
      %v2836 = vmax.f32 %v2436, 0.0
      %v2837 = vmax.f32 %v2485, 0.0
      %v2838 = vmax.f32 %v2534, 0.0
      %v2839 = vmax.f32 %v2583, 0.0
      %v2840 = vmax.f32 %v2632, 0.0
      %v2841 = vmax.f32 %v2681, 0.0
      %v2842 = vmax.f32 %v2730, 0.0
      %v2843 = vmax.f32 %v2389, 0.0
      %v2844 = vmax.f32 %v2438, 0.0
      %v2845 = vmax.f32 %v2487, 0.0
      %v2846 = vmax.f32 %v2536, 0.0
      %v2847 = vmax.f32 %v2585, 0.0
      %v2848 = vmax.f32 %v2634, 0.0
      %v2849 = vmax.f32 %v2683, 0.0
      %v2850 = vmax.f32 %v2732, 0.0
      %v2851 = vmax.f32 %v2392, 0.0
      %v2852 = vmax.f32 %v2441, 0.0
      %v2853 = vmax.f32 %v2490, 0.0
      %v2854 = vmax.f32 %v2539, 0.0
      %v2855 = vmax.f32 %v2588, 0.0
      %v2856 = vmax.f32 %v2637, 0.0
      %v2857 = vmax.f32 %v2686, 0.0
      %v2858 = vmax.f32 %v2735, 0.0
      %v2859 = vmax.f32 %v2394, 0.0
      %v2860 = vmax.f32 %v2443, 0.0
      %v2861 = vmax.f32 %v2492, 0.0
      %v2862 = vmax.f32 %v2541, 0.0
      %v2863 = vmax.f32 %v2590, 0.0
      %v2864 = vmax.f32 %v2639, 0.0
      %v2865 = vmax.f32 %v2688, 0.0
      %v2866 = vmax.f32 %v2737, 0.0
      %v2867 = vpack.c.bf16 %v2747, %v2739
      %v2868 = vpack.c.bf16 %v2748, %v2740
      %v2869 = vpack.c.bf16 %v2749, %v2741
      %v2870 = vpack.c.bf16 %v2750, %v2742
      %v2871 = vpack.c.bf16 %v2751, %v2743
      %v2872 = vpack.c.bf16 %v2752, %v2744
      %v2873 = vpack.c.bf16 %v2753, %v2745
      %v2874 = vpack.c.bf16 %v2754, %v2746
      %v2875 = vpack.c.bf16 %v2763, %v2755
      %v2876 = vpack.c.bf16 %v2764, %v2756
      %v2877 = vpack.c.bf16 %v2765, %v2757
      %v2878 = vpack.c.bf16 %v2766, %v2758
      %v2879 = vpack.c.bf16 %v2767, %v2759
      %v2880 = vpack.c.bf16 %v2768, %v2760
      %v2881 = vpack.c.bf16 %v2769, %v2761
      %v2882 = vpack.c.bf16 %v2770, %v2762
      %v2883 = vpack.c.bf16 %v2779, %v2771
      %v2884 = vpack.c.bf16 %v2780, %v2772
      %v2885 = vpack.c.bf16 %v2781, %v2773
      %v2886 = vpack.c.bf16 %v2782, %v2774
      %v2887 = vpack.c.bf16 %v2783, %v2775
      %v2888 = vpack.c.bf16 %v2784, %v2776
      %v2889 = vpack.c.bf16 %v2785, %v2777
      %v2890 = vpack.c.bf16 %v2786, %v2778
      %v2891 = vpack.c.bf16 %v2795, %v2787
      %v2892 = vpack.c.bf16 %v2796, %v2788
      %v2893 = vpack.c.bf16 %v2797, %v2789
      %v2894 = vpack.c.bf16 %v2798, %v2790
      %v2895 = vpack.c.bf16 %v2799, %v2791
      %v2896 = vpack.c.bf16 %v2800, %v2792
      %v2897 = vpack.c.bf16 %v2801, %v2793
      %v2898 = vpack.c.bf16 %v2802, %v2794
      %v2899 = vpack.c.bf16 %v2811, %v2803
      %v2900 = vpack.c.bf16 %v2812, %v2804
      %v2901 = vpack.c.bf16 %v2813, %v2805
      %v2902 = vpack.c.bf16 %v2814, %v2806
      %v2903 = vpack.c.bf16 %v2815, %v2807
      %v2904 = vpack.c.bf16 %v2816, %v2808
      %v2905 = vpack.c.bf16 %v2817, %v2809
      %v2906 = vpack.c.bf16 %v2818, %v2810
      %v2907 = vpack.c.bf16 %v2827, %v2819
      %v2908 = vpack.c.bf16 %v2828, %v2820
      %v2909 = vpack.c.bf16 %v2829, %v2821
      %v2910 = vpack.c.bf16 %v2830, %v2822
      %v2911 = vpack.c.bf16 %v2831, %v2823
      %v2912 = vpack.c.bf16 %v2832, %v2824
      %v2913 = vpack.c.bf16 %v2833, %v2825
      %v2914 = vpack.c.bf16 %v2834, %v2826
      %v2915 = vpack.c.bf16 %v2843, %v2835
      %v2916 = vpack.c.bf16 %v2844, %v2836
      %v2917 = vpack.c.bf16 %v2845, %v2837
      %v2918 = vpack.c.bf16 %v2846, %v2838
      %v2919 = vpack.c.bf16 %v2847, %v2839
      %v2920 = vpack.c.bf16 %v2848, %v2840
      %v2921 = vpack.c.bf16 %v2849, %v2841
      %v2922 = vpack.c.bf16 %v2850, %v2842
      %v2923 = vpack.c.bf16 %v2859, %v2851
      %v2924 = vpack.c.bf16 %v2860, %v2852
      %v2925 = vpack.c.bf16 %v2861, %v2853
      %v2926 = vpack.c.bf16 %v2862, %v2854
      %v2927 = vpack.c.bf16 %v2863, %v2855
      %v2928 = vpack.c.bf16 %v2864, %v2856
      %v2929 = vpack.c.bf16 %v2865, %v2857
      %v2930 = vpack.c.bf16 %v2866, %v2858
      %v2931 = vld [vmem:[%s9] sm:$0xf]
      %v2932 = vld [vmem:[%s9 + $0x4] sm:$0xf]
      %v2933 = vld [vmem:[%s9 + $0x8] sm:$0xf]
      %v2934 = vld [vmem:[%s9 + $0xc] sm:$0xf]
      %v2935 = vld [vmem:[%s9 + $0x10] sm:$0xf]
      %v2936 = vld [vmem:[%s9 + $0x14] sm:$0xf]
      %v2937 = vld [vmem:[%s9 + $0x18] sm:$0xf]
      %v2938 = vld [vmem:[%s9 + $0x1c] sm:$0xf]
      %v2939 = vld [vmem:[%s9 + $0x20] sm:$0xf]
      %v2940 = vld [vmem:[%s9 + $0x24] sm:$0xf]
      %v2941 = vld [vmem:[%s9 + $0x28] sm:$0xf]
      %v2942 = vld [vmem:[%s9 + $0x2c] sm:$0xf]
      %v2943 = vld [vmem:[%s9 + $0x30] sm:$0xf]
      %v2944 = vld [vmem:[%s9 + $0x34] sm:$0xf]
      %v2945 = vld [vmem:[%s9 + $0x38] sm:$0xf]
      %v2946 = vld [vmem:[%s9 + $0x3c] sm:$0xf]
      %v2947 = vld [vmem:[%s9 + $0x40] sm:$0xf]
      %v2948 = vld [vmem:[%s9 + $0x44] sm:$0xf]
      %v2949 = vld [vmem:[%s9 + $0x48] sm:$0xf]
      %v2950 = vld [vmem:[%s9 + $0x4c] sm:$0xf]
      %v2951 = vld [vmem:[%s9 + $0x50] sm:$0xf]
      %v2952 = vld [vmem:[%s9 + $0x54] sm:$0xf]
      %v2953 = vld [vmem:[%s9 + $0x58] sm:$0xf]
      %v2954 = vld [vmem:[%s9 + $0x5c] sm:$0xf]
      %v2955 = vld [vmem:[%s9 + $0x60] sm:$0xf]
      %v2956 = vld [vmem:[%s9 + $0x64] sm:$0xf]
      %v2957 = vld [vmem:[%s9 + $0x68] sm:$0xf]
      %v2958 = vld [vmem:[%s9 + $0x6c] sm:$0xf]
      %v2959 = vld [vmem:[%s9 + $0x70] sm:$0xf]
      %v2960 = vld [vmem:[%s9 + $0x74] sm:$0xf]
      %v2961 = vld [vmem:[%s9 + $0x78] sm:$0xf]
      %v2962 = vld [vmem:[%s9 + $0x7c] sm:$0xf]
      %v2963 = vld [vmem:[%s9 + $0x80] sm:$0xf]
      %v2964 = vld [vmem:[%s9 + $0x84] sm:$0xf]
      %v2965 = vld [vmem:[%s9 + $0x88] sm:$0xf]
      %v2966 = vld [vmem:[%s9 + $0x8c] sm:$0xf]
      %v2967 = vld [vmem:[%s9 + $0x90] sm:$0xf]
      %v2968 = vld [vmem:[%s9 + $0x94] sm:$0xf]
      %v2969 = vld [vmem:[%s9 + $0x98] sm:$0xf]
      %v2970 = vld [vmem:[%s9 + $0x9c] sm:$0xf]
      %v2971 = vld [vmem:[%s9 + $0xa0] sm:$0xf]
      %v2972 = vld [vmem:[%s9 + $0xa4] sm:$0xf]
      %v2973 = vld [vmem:[%s9 + $0xa8] sm:$0xf]
      %v2974 = vld [vmem:[%s9 + $0xac] sm:$0xf]
      %v2975 = vld [vmem:[%s9 + $0xb0] sm:$0xf]
      %v2976 = vld [vmem:[%s9 + $0xb4] sm:$0xf]
      %v2977 = vld [vmem:[%s9 + $0xb8] sm:$0xf]
      %v2978 = vld [vmem:[%s9 + $0xbc] sm:$0xf]
      %v2979 = vld [vmem:[%s9 + $0xc0] sm:$0xf]
      %v2980 = vld [vmem:[%s9 + $0xc4] sm:$0xf]
      %v2981 = vld [vmem:[%s9 + $0xc8] sm:$0xf]
      %v2982 = vld [vmem:[%s9 + $0xcc] sm:$0xf]
      %v2983 = vld [vmem:[%s9 + $0xd0] sm:$0xf]
      %v2984 = vld [vmem:[%s9 + $0xd4] sm:$0xf]
      %v2985 = vld [vmem:[%s9 + $0xd8] sm:$0xf]
      %v2986 = vld [vmem:[%s9 + $0xdc] sm:$0xf]
      %v2987 = vld [vmem:[%s9 + $0xe0] sm:$0xf]
      %v2988 = vld [vmem:[%s9 + $0xe4] sm:$0xf]
      %v2989 = vld [vmem:[%s9 + $0xe8] sm:$0xf]
      %v2990 = vld [vmem:[%s9 + $0xec] sm:$0xf]
      %v2991 = vld [vmem:[%s9 + $0xf0] sm:$0xf]
      %v2992 = vld [vmem:[%s9 + $0xf4] sm:$0xf]
      %v2993 = vld [vmem:[%s9 + $0xf8] sm:$0xf]
      %v2994 = vld [vmem:[%s9 + $0xfc] sm:$0xf]
      %v2995 = vld [vmem:[%s9 + $0x100] sm:$0xf]
      %v2996 = vld [vmem:[%s9 + $0x104] sm:$0xf]
      %v2997 = vld [vmem:[%s9 + $0x108] sm:$0xf]
      %v2998 = vld [vmem:[%s9 + $0x10c] sm:$0xf]
      %v2999 = vld [vmem:[%s9 + $0x110] sm:$0xf]
      %v3000 = vld [vmem:[%s9 + $0x114] sm:$0xf]
      %v3001 = vld [vmem:[%s9 + $0x118] sm:$0xf]
      %v3002 = vld [vmem:[%s9 + $0x11c] sm:$0xf]
      %v3003 = vld [vmem:[%s9 + $0x120] sm:$0xf]
      %v3004 = vld [vmem:[%s9 + $0x124] sm:$0xf]
      %v3005 = vld [vmem:[%s9 + $0x128] sm:$0xf]
      %v3006 = vld [vmem:[%s9 + $0x12c] sm:$0xf]
      %v3007 = vld [vmem:[%s9 + $0x130] sm:$0xf]
      %v3008 = vld [vmem:[%s9 + $0x134] sm:$0xf]
      %v3009 = vld [vmem:[%s9 + $0x138] sm:$0xf]
      %v3010 = vld [vmem:[%s9 + $0x13c] sm:$0xf]
      %v3011 = vld [vmem:[%s9 + $0x140] sm:$0xf]
      %v3012 = vld [vmem:[%s9 + $0x144] sm:$0xf]
      %v3013 = vld [vmem:[%s9 + $0x148] sm:$0xf]
      %v3014 = vld [vmem:[%s9 + $0x14c] sm:$0xf]
      %v3015 = vld [vmem:[%s9 + $0x150] sm:$0xf]
      %v3016 = vld [vmem:[%s9 + $0x154] sm:$0xf]
      %v3017 = vld [vmem:[%s9 + $0x158] sm:$0xf]
      %v3018 = vld [vmem:[%s9 + $0x15c] sm:$0xf]
      %v3019 = vld [vmem:[%s9 + $0x160] sm:$0xf]
      %v3020 = vld [vmem:[%s9 + $0x164] sm:$0xf]
      %v3021 = vld [vmem:[%s9 + $0x168] sm:$0xf]
      %v3022 = vld [vmem:[%s9 + $0x16c] sm:$0xf]
      %v3023 = vld [vmem:[%s9 + $0x170] sm:$0xf]
      %v3024 = vld [vmem:[%s9 + $0x174] sm:$0xf]
      %v3025 = vld [vmem:[%s9 + $0x178] sm:$0xf]
      %v3026 = vld [vmem:[%s9 + $0x17c] sm:$0xf]
      %v3027 = vld [vmem:[%s9 + $0x180] sm:$0xf]
      %v3028 = vld [vmem:[%s9 + $0x184] sm:$0xf]
      %v3029 = vld [vmem:[%s9 + $0x188] sm:$0xf]
      %v3030 = vld [vmem:[%s9 + $0x18c] sm:$0xf]
      %v3031 = vld [vmem:[%s9 + $0x190] sm:$0xf]
      %v3032 = vld [vmem:[%s9 + $0x194] sm:$0xf]
      %v3033 = vld [vmem:[%s9 + $0x198] sm:$0xf]
      %v3034 = vld [vmem:[%s9 + $0x19c] sm:$0xf]
      %v3035 = vld [vmem:[%s9 + $0x1a0] sm:$0xf]
      %v3036 = vld [vmem:[%s9 + $0x1a4] sm:$0xf]
      %v3037 = vld [vmem:[%s9 + $0x1a8] sm:$0xf]
      %v3038 = vld [vmem:[%s9 + $0x1ac] sm:$0xf]
      %v3039 = vld [vmem:[%s9 + $0x1b0] sm:$0xf]
      %v3040 = vld [vmem:[%s9 + $0x1b4] sm:$0xf]
      %v3041 = vld [vmem:[%s9 + $0x1b8] sm:$0xf]
      %v3042 = vld [vmem:[%s9 + $0x1bc] sm:$0xf]
      %v3043 = vld [vmem:[%s9 + $0x1c0] sm:$0xf]
      %v3044 = vld [vmem:[%s9 + $0x1c4] sm:$0xf]
      %v3045 = vld [vmem:[%s9 + $0x1c8] sm:$0xf]
      %v3046 = vld [vmem:[%s9 + $0x1cc] sm:$0xf]
      %v3047 = vld [vmem:[%s9 + $0x1d0] sm:$0xf]
      %v3048 = vld [vmem:[%s9 + $0x1d4] sm:$0xf]
      %v3049 = vld [vmem:[%s9 + $0x1d8] sm:$0xf]
      %v3050 = vld [vmem:[%s9 + $0x1dc] sm:$0xf]
      %v3051 = vld [vmem:[%s9 + $0x1e0] sm:$0xf]
      %v3052 = vld [vmem:[%s9 + $0x1e4] sm:$0xf]
      %v3053 = vld [vmem:[%s9 + $0x1e8] sm:$0xf]
      %v3054 = vld [vmem:[%s9 + $0x1ec] sm:$0xf]
      %v3055 = vld [vmem:[%s9 + $0x1f0] sm:$0xf]
      %v3056 = vld [vmem:[%s9 + $0x1f4] sm:$0xf]
      %v3057 = vld [vmem:[%s9 + $0x1f8] sm:$0xf]
      %v3058 = vld [vmem:[%s9 + $0x1fc] sm:$0xf]
      %v3059 = vld [vmem:[%s10] sm:$0x1]
      %v3061 = vperm.slane %v3059, 0
      %v3191 = vunpack.c.l.b16 %v2931
      %v3192 = vunpack.c.l.b16 %v2932
      %v3193 = vunpack.c.l.b16 %v2933
      %v3194 = vunpack.c.l.b16 %v2934
      %v3195 = vunpack.c.l.b16 %v2935
      %v3196 = vunpack.c.l.b16 %v2936
      %v3197 = vunpack.c.l.b16 %v2937
      %v3198 = vunpack.c.l.b16 %v2938
      %v3199 = vunpack.c.l.b16 %v2939
      %v3200 = vunpack.c.l.b16 %v2940
      %v3201 = vunpack.c.l.b16 %v2941
      %v3202 = vunpack.c.l.b16 %v2942
      %v3203 = vunpack.c.l.b16 %v2943
      %v3204 = vunpack.c.l.b16 %v2944
      %v3205 = vunpack.c.l.b16 %v2945
      %v3206 = vunpack.c.l.b16 %v2946
      %v3207 = vunpack.c.l.b16 %v2947
      %v3208 = vunpack.c.l.b16 %v2948
      %v3209 = vunpack.c.l.b16 %v2949
      %v3210 = vunpack.c.l.b16 %v2950
      %v3211 = vunpack.c.l.b16 %v2951
      %v3212 = vunpack.c.l.b16 %v2952
      %v3213 = vunpack.c.l.b16 %v2953
      %v3214 = vunpack.c.l.b16 %v2954
      %v3215 = vunpack.c.l.b16 %v2955
      %v3216 = vunpack.c.l.b16 %v2956
      %v3217 = vunpack.c.l.b16 %v2957
      %v3218 = vunpack.c.l.b16 %v2958
      %v3219 = vunpack.c.l.b16 %v2959
      %v3220 = vunpack.c.l.b16 %v2960
      %v3221 = vunpack.c.l.b16 %v2961
      %v3222 = vunpack.c.l.b16 %v2962
      %v3223 = vunpack.c.l.b16 %v2963
      %v3224 = vunpack.c.l.b16 %v2964
      %v3225 = vunpack.c.l.b16 %v2965
      %v3226 = vunpack.c.l.b16 %v2966
      %v3227 = vunpack.c.l.b16 %v2967
      %v3228 = vunpack.c.l.b16 %v2968
      %v3229 = vunpack.c.l.b16 %v2969
      %v3230 = vunpack.c.l.b16 %v2970
      %v3231 = vunpack.c.l.b16 %v2971
      %v3232 = vunpack.c.l.b16 %v2972
      %v3233 = vunpack.c.l.b16 %v2973
      %v3234 = vunpack.c.l.b16 %v2974
      %v3235 = vunpack.c.l.b16 %v2975
      %v3236 = vunpack.c.l.b16 %v2976
      %v3237 = vunpack.c.l.b16 %v2977
      %v3238 = vunpack.c.l.b16 %v2978
      %v3239 = vunpack.c.l.b16 %v2979
      %v3240 = vunpack.c.l.b16 %v2980
      %v3241 = vunpack.c.l.b16 %v2981
      %v3242 = vunpack.c.l.b16 %v2982
      %v3243 = vunpack.c.l.b16 %v2983
      %v3244 = vunpack.c.l.b16 %v2984
      %v3245 = vunpack.c.l.b16 %v2985
      %v3246 = vunpack.c.l.b16 %v2986
      %v3247 = vunpack.c.l.b16 %v2987
      %v3248 = vunpack.c.l.b16 %v2988
      %v3249 = vunpack.c.l.b16 %v2989
      %v3250 = vunpack.c.l.b16 %v2990
      %v3251 = vunpack.c.l.b16 %v2991
      %v3252 = vunpack.c.l.b16 %v2992
      %v3253 = vunpack.c.l.b16 %v2993
      %v3254 = vunpack.c.l.b16 %v2994
      %v3255 = vunpack.c.l.b16 %v2995
      %v3256 = vunpack.c.l.b16 %v2996
      %v3257 = vunpack.c.l.b16 %v2997
      %v3258 = vunpack.c.l.b16 %v2998
      %v3259 = vunpack.c.l.b16 %v2999
      %v3260 = vunpack.c.l.b16 %v3000
      %v3261 = vunpack.c.l.b16 %v3001
      %v3262 = vunpack.c.l.b16 %v3002
      %v3263 = vunpack.c.l.b16 %v3003
      %v3264 = vunpack.c.l.b16 %v3004
      %v3265 = vunpack.c.l.b16 %v3005
      %v3266 = vunpack.c.l.b16 %v3006
      %v3267 = vunpack.c.l.b16 %v3007
      %v3268 = vunpack.c.l.b16 %v3008
      %v3269 = vunpack.c.l.b16 %v3009
      %v3270 = vunpack.c.l.b16 %v3010
      %v3271 = vunpack.c.l.b16 %v3011
      %v3272 = vunpack.c.l.b16 %v3012
      %v3273 = vunpack.c.l.b16 %v3013
      %v3274 = vunpack.c.l.b16 %v3014
      %v3275 = vunpack.c.l.b16 %v3015
      %v3276 = vunpack.c.l.b16 %v3016
      %v3277 = vunpack.c.l.b16 %v3017
      %v3278 = vunpack.c.l.b16 %v3018
      %v3279 = vunpack.c.l.b16 %v3019
      %v3280 = vunpack.c.l.b16 %v3020
      %v3281 = vunpack.c.l.b16 %v3021
      %v3282 = vunpack.c.l.b16 %v3022
      %v3283 = vunpack.c.l.b16 %v3023
      %v3284 = vunpack.c.l.b16 %v3024
      %v3285 = vunpack.c.l.b16 %v3025
      %v3286 = vunpack.c.l.b16 %v3026
      %v3287 = vunpack.c.l.b16 %v3027
      %v3288 = vunpack.c.l.b16 %v3028
      %v3289 = vunpack.c.l.b16 %v3029
      %v3290 = vunpack.c.l.b16 %v3030
      %v3291 = vunpack.c.l.b16 %v3031
      %v3292 = vunpack.c.l.b16 %v3032
      %v3293 = vunpack.c.l.b16 %v3033
      %v3294 = vunpack.c.l.b16 %v3034
      %v3295 = vunpack.c.l.b16 %v3035
      %v3296 = vunpack.c.l.b16 %v3036
      %v3297 = vunpack.c.l.b16 %v3037
      %v3298 = vunpack.c.l.b16 %v3038
      %v3299 = vunpack.c.l.b16 %v3039
      %v3300 = vunpack.c.l.b16 %v3040
      %v3301 = vunpack.c.l.b16 %v3041
      %v3302 = vunpack.c.l.b16 %v3042
      %v3303 = vunpack.c.l.b16 %v3043
      %v3304 = vunpack.c.l.b16 %v3044
      %v3305 = vunpack.c.l.b16 %v3045
      %v3306 = vunpack.c.l.b16 %v3046
      %v3307 = vunpack.c.l.b16 %v3047
      %v3308 = vunpack.c.l.b16 %v3048
      %v3309 = vunpack.c.l.b16 %v3049
      %v3310 = vunpack.c.l.b16 %v3050
      %v3311 = vunpack.c.l.b16 %v3051
      %v3312 = vunpack.c.l.b16 %v3052
      %v3313 = vunpack.c.l.b16 %v3053
      %v3314 = vunpack.c.l.b16 %v3054
      %v3315 = vunpack.c.l.b16 %v3055
      %v3316 = vunpack.c.l.b16 %v3056
      %v3317 = vunpack.c.l.b16 %v3057
      %v3318 = vunpack.c.l.b16 %v3058
      %v3319 = vpack.c.b16 %v3192, %v3191
      %v3320 = vpack.c.b16 %v3194, %v3193
      %v3321 = vpack.c.b16 %v3196, %v3195
      %v3322 = vpack.c.b16 %v3198, %v3197
      %v3323 = vpack.c.b16 %v3200, %v3199
      %v3324 = vpack.c.b16 %v3202, %v3201
      %v3325 = vpack.c.b16 %v3204, %v3203
      %v3326 = vpack.c.b16 %v3206, %v3205
      %v3327 = vpack.c.b16 %v3208, %v3207
      %v3328 = vpack.c.b16 %v3210, %v3209
      %v3329 = vpack.c.b16 %v3212, %v3211
      %v3330 = vpack.c.b16 %v3214, %v3213
      %v3331 = vpack.c.b16 %v3216, %v3215
      %v3332 = vpack.c.b16 %v3218, %v3217
      %v3333 = vpack.c.b16 %v3220, %v3219
      %v3334 = vpack.c.b16 %v3222, %v3221
      %v3335 = vpack.c.b16 %v3224, %v3223
      %v3336 = vpack.c.b16 %v3226, %v3225
      %v3337 = vpack.c.b16 %v3228, %v3227
      %v3338 = vpack.c.b16 %v3230, %v3229
      %v3339 = vpack.c.b16 %v3232, %v3231
      %v3340 = vpack.c.b16 %v3234, %v3233
      %v3341 = vpack.c.b16 %v3236, %v3235
      %v3342 = vpack.c.b16 %v3238, %v3237
      %v3343 = vpack.c.b16 %v3240, %v3239
      %v3344 = vpack.c.b16 %v3242, %v3241
      %v3345 = vpack.c.b16 %v3244, %v3243
      %v3346 = vpack.c.b16 %v3246, %v3245
      %v3347 = vpack.c.b16 %v3248, %v3247
      %v3348 = vpack.c.b16 %v3250, %v3249
      %v3349 = vpack.c.b16 %v3252, %v3251
      %v3350 = vpack.c.b16 %v3254, %v3253
      %v3351 = vpack.c.b16 %v3256, %v3255
      %v3352 = vpack.c.b16 %v3258, %v3257
      %v3353 = vpack.c.b16 %v3260, %v3259
      %v3354 = vpack.c.b16 %v3262, %v3261
      %v3355 = vpack.c.b16 %v3264, %v3263
      %v3356 = vpack.c.b16 %v3266, %v3265
      %v3357 = vpack.c.b16 %v3268, %v3267
      %v3358 = vpack.c.b16 %v3270, %v3269
      %v3359 = vpack.c.b16 %v3272, %v3271
      %v3360 = vpack.c.b16 %v3274, %v3273
      %v3361 = vpack.c.b16 %v3276, %v3275
      %v3362 = vpack.c.b16 %v3278, %v3277
      %v3363 = vpack.c.b16 %v3280, %v3279
      %v3364 = vpack.c.b16 %v3282, %v3281
      %v3365 = vpack.c.b16 %v3284, %v3283
      %v3366 = vpack.c.b16 %v3286, %v3285
      %v3367 = vpack.c.b16 %v3288, %v3287
      %v3368 = vpack.c.b16 %v3290, %v3289
      %v3369 = vpack.c.b16 %v3292, %v3291
      %v3370 = vpack.c.b16 %v3294, %v3293
      %v3371 = vpack.c.b16 %v3296, %v3295
      %v3372 = vpack.c.b16 %v3298, %v3297
      %v3373 = vpack.c.b16 %v3300, %v3299
      %v3374 = vpack.c.b16 %v3302, %v3301
      %v3375 = vpack.c.b16 %v3304, %v3303
      %v3376 = vpack.c.b16 %v3306, %v3305
      %v3377 = vpack.c.b16 %v3308, %v3307
      %v3378 = vpack.c.b16 %v3310, %v3309
      %v3379 = vpack.c.b16 %v3312, %v3311
      %v3380 = vpack.c.b16 %v3314, %v3313
      %v3381 = vpack.c.b16 %v3316, %v3315
      %v3382 = vpack.c.b16 %v3318, %v3317
      %3447 = vmatpush.bf16.msra.mxu0 %v3326
      %3448 = vmatpush.bf16.msra.mxu0 %v3325
      %3449 = vmatpush.bf16.msra.mxu0 %v3324
      %3450 = vmatpush.bf16.msra.mxu0 %v3323
      %3451 = vmatpush.bf16.msra.mxu0 %v3322
      %3452 = vmatpush.bf16.msra.mxu0 %v3321
      %3453 = vmatpush.bf16.msra.mxu0 %v3320
      %3454 = vmatpush.bf16.msra.mxu0 %v3319
      %3455 = vmatmul.bf16.gmra.mxu0 %v2867
      %v3456 = vpop.f32.mrf.mxu0
      %v3457 = vadd.f32 %v3061, %v3456
      %v3458 = vpop.f32.mrf.mxu0
      %v3459 = vadd.f32 %v3061, %v3458
      %3460 = vmatmul.bf16.gmra.mxu0 %v2875
      %v3461 = vpop.f32.mrf.mxu0
      %v3462 = vadd.f32 %v3061, %v3461
      %v3463 = vpop.f32.mrf.mxu0
      %v3464 = vadd.f32 %v3061, %v3463
      %3465 = vmatmul.bf16.gmra.mxu0 %v2883
      %v3466 = vpop.f32.mrf.mxu0
      %v3467 = vadd.f32 %v3061, %v3466
      %v3468 = vpop.f32.mrf.mxu0
      %v3469 = vadd.f32 %v3061, %v3468
      %3470 = vmatmul.bf16.gmra.mxu0 %v2891
      %v3471 = vpop.f32.mrf.mxu0
      %v3472 = vadd.f32 %v3061, %v3471
      %v3473 = vpop.f32.mrf.mxu0
      %v3474 = vadd.f32 %v3061, %v3473
      %3475 = vmatmul.bf16.gmra.mxu0 %v2899
      %v3476 = vpop.f32.mrf.mxu0
      %v3477 = vadd.f32 %v3061, %v3476
      %v3478 = vpop.f32.mrf.mxu0
      %v3479 = vadd.f32 %v3061, %v3478
      %3480 = vmatmul.bf16.gmra.mxu0 %v2907
      %v3481 = vpop.f32.mrf.mxu0
      %v3482 = vadd.f32 %v3061, %v3481
      %v3483 = vpop.f32.mrf.mxu0
      %v3484 = vadd.f32 %v3061, %v3483
      %3485 = vmatmul.bf16.gmra.mxu0 %v2915
      %v3486 = vpop.f32.mrf.mxu0
      %v3487 = vadd.f32 %v3061, %v3486
      %v3488 = vpop.f32.mrf.mxu0
      %v3489 = vadd.f32 %v3061, %v3488
      %3490 = vmatmul.bf16.gmra.mxu0 %v2923
      %v3491 = vpop.f32.mrf.mxu0
      %v3492 = vadd.f32 %v3061, %v3491
      %v3493 = vpop.f32.mrf.mxu0
      %v3494 = vadd.f32 %v3061, %v3493
      %3495 = vdwg.mxu0
      %3496 = vmatpush.bf16.msra.mxu0 %v3334
      %3497 = vmatpush.bf16.msra.mxu0 %v3333
      %3498 = vmatpush.bf16.msra.mxu0 %v3332
      %3499 = vmatpush.bf16.msra.mxu0 %v3331
      %3500 = vmatpush.bf16.msra.mxu0 %v3330
      %3501 = vmatpush.bf16.msra.mxu0 %v3329
      %3502 = vmatpush.bf16.msra.mxu0 %v3328
      %3503 = vmatpush.bf16.msra.mxu0 %v3327
      %3504 = vmatmul.bf16.gmra.mxu0 %v2868
      %v3505 = vpop.f32.mrf.mxu0
      %v3506 = vadd.f32 %v3457, %v3505
      %v3507 = vpop.f32.mrf.mxu0
      %v3508 = vadd.f32 %v3459, %v3507
      %3509 = vmatmul.bf16.gmra.mxu0 %v2876
      %v3510 = vpop.f32.mrf.mxu0
      %v3511 = vadd.f32 %v3462, %v3510
      %v3512 = vpop.f32.mrf.mxu0
      %v3513 = vadd.f32 %v3464, %v3512
      %3514 = vmatmul.bf16.gmra.mxu0 %v2884
      %v3515 = vpop.f32.mrf.mxu0
      %v3516 = vadd.f32 %v3467, %v3515
      %v3517 = vpop.f32.mrf.mxu0
      %v3518 = vadd.f32 %v3469, %v3517
      %3519 = vmatmul.bf16.gmra.mxu0 %v2892
      %v3520 = vpop.f32.mrf.mxu0
      %v3521 = vadd.f32 %v3472, %v3520
      %v3522 = vpop.f32.mrf.mxu0
      %v3523 = vadd.f32 %v3474, %v3522
      %3524 = vmatmul.bf16.gmra.mxu0 %v2900
      %v3525 = vpop.f32.mrf.mxu0
      %v3526 = vadd.f32 %v3477, %v3525
      %v3527 = vpop.f32.mrf.mxu0
      %v3528 = vadd.f32 %v3479, %v3527
      %3529 = vmatmul.bf16.gmra.mxu0 %v2908
      %v3530 = vpop.f32.mrf.mxu0
      %v3531 = vadd.f32 %v3482, %v3530
      %v3532 = vpop.f32.mrf.mxu0
      %v3533 = vadd.f32 %v3484, %v3532
      %3534 = vmatmul.bf16.gmra.mxu0 %v2916
      %v3535 = vpop.f32.mrf.mxu0
      %v3536 = vadd.f32 %v3487, %v3535
      %v3537 = vpop.f32.mrf.mxu0
      %v3538 = vadd.f32 %v3489, %v3537
      %3539 = vmatmul.bf16.gmra.mxu0 %v2924
      %v3540 = vpop.f32.mrf.mxu0
      %v3541 = vadd.f32 %v3492, %v3540
      %v3542 = vpop.f32.mrf.mxu0
      %v3543 = vadd.f32 %v3494, %v3542
      %3544 = vdwg.mxu0
      %3545 = vmatpush.bf16.msra.mxu0 %v3342
      %3546 = vmatpush.bf16.msra.mxu0 %v3341
      %3547 = vmatpush.bf16.msra.mxu0 %v3340
      %3548 = vmatpush.bf16.msra.mxu0 %v3339
      %3549 = vmatpush.bf16.msra.mxu0 %v3338
      %3550 = vmatpush.bf16.msra.mxu0 %v3337
      %3551 = vmatpush.bf16.msra.mxu0 %v3336
      %3552 = vmatpush.bf16.msra.mxu0 %v3335
      %3553 = vmatmul.bf16.gmra.mxu0 %v2869
      %v3554 = vpop.f32.mrf.mxu0
      %v3555 = vadd.f32 %v3506, %v3554
      %v3556 = vpop.f32.mrf.mxu0
      %v3557 = vadd.f32 %v3508, %v3556
      %3558 = vmatmul.bf16.gmra.mxu0 %v2877
      %v3559 = vpop.f32.mrf.mxu0
      %v3560 = vadd.f32 %v3511, %v3559
      %v3561 = vpop.f32.mrf.mxu0
      %v3562 = vadd.f32 %v3513, %v3561
      %3563 = vmatmul.bf16.gmra.mxu0 %v2885
      %v3564 = vpop.f32.mrf.mxu0
      %v3565 = vadd.f32 %v3516, %v3564
      %v3566 = vpop.f32.mrf.mxu0
      %v3567 = vadd.f32 %v3518, %v3566
      %3568 = vmatmul.bf16.gmra.mxu0 %v2893
      %v3569 = vpop.f32.mrf.mxu0
      %v3570 = vadd.f32 %v3521, %v3569
      %v3571 = vpop.f32.mrf.mxu0
      %v3572 = vadd.f32 %v3523, %v3571
      %3573 = vmatmul.bf16.gmra.mxu0 %v2901
      %v3574 = vpop.f32.mrf.mxu0
      %v3575 = vadd.f32 %v3526, %v3574
      %v3576 = vpop.f32.mrf.mxu0
      %v3577 = vadd.f32 %v3528, %v3576
      %3578 = vmatmul.bf16.gmra.mxu0 %v2909
      %v3579 = vpop.f32.mrf.mxu0
      %v3580 = vadd.f32 %v3531, %v3579
      %v3581 = vpop.f32.mrf.mxu0
      %v3582 = vadd.f32 %v3533, %v3581
      %3583 = vmatmul.bf16.gmra.mxu0 %v2917
      %v3584 = vpop.f32.mrf.mxu0
      %v3585 = vadd.f32 %v3536, %v3584
      %v3586 = vpop.f32.mrf.mxu0
      %v3587 = vadd.f32 %v3538, %v3586
      %3588 = vmatmul.bf16.gmra.mxu0 %v2925
      %v3589 = vpop.f32.mrf.mxu0
      %v3590 = vadd.f32 %v3541, %v3589
      %v3591 = vpop.f32.mrf.mxu0
      %v3592 = vadd.f32 %v3543, %v3591
      %3593 = vdwg.mxu0
      %3594 = vmatpush.bf16.msra.mxu0 %v3350
      %3595 = vmatpush.bf16.msra.mxu0 %v3349
      %3596 = vmatpush.bf16.msra.mxu0 %v3348
      %3597 = vmatpush.bf16.msra.mxu0 %v3347
      %3598 = vmatpush.bf16.msra.mxu0 %v3346
      %3599 = vmatpush.bf16.msra.mxu0 %v3345
      %3600 = vmatpush.bf16.msra.mxu0 %v3344
      %3601 = vmatpush.bf16.msra.mxu0 %v3343
      %3602 = vmatmul.bf16.gmra.mxu0 %v2870
      %v3603 = vpop.f32.mrf.mxu0
      %v3604 = vadd.f32 %v3555, %v3603
      %v3605 = vpop.f32.mrf.mxu0
      %v3606 = vadd.f32 %v3557, %v3605
      %3607 = vmatmul.bf16.gmra.mxu0 %v2878
      %v3608 = vpop.f32.mrf.mxu0
      %v3609 = vadd.f32 %v3560, %v3608
      %v3610 = vpop.f32.mrf.mxu0
      %v3611 = vadd.f32 %v3562, %v3610
      %3612 = vmatmul.bf16.gmra.mxu0 %v2886
      %v3613 = vpop.f32.mrf.mxu0
      %v3614 = vadd.f32 %v3565, %v3613
      %v3615 = vpop.f32.mrf.mxu0
      %v3616 = vadd.f32 %v3567, %v3615
      %3617 = vmatmul.bf16.gmra.mxu0 %v2894
      %v3618 = vpop.f32.mrf.mxu0
      %v3619 = vadd.f32 %v3570, %v3618
      %v3620 = vpop.f32.mrf.mxu0
      %v3621 = vadd.f32 %v3572, %v3620
      %3622 = vmatmul.bf16.gmra.mxu0 %v2902
      %v3623 = vpop.f32.mrf.mxu0
      %v3624 = vadd.f32 %v3575, %v3623
      %v3625 = vpop.f32.mrf.mxu0
      %v3626 = vadd.f32 %v3577, %v3625
      %3627 = vmatmul.bf16.gmra.mxu0 %v2910
      %v3628 = vpop.f32.mrf.mxu0
      %v3629 = vadd.f32 %v3580, %v3628
      %v3630 = vpop.f32.mrf.mxu0
      %v3631 = vadd.f32 %v3582, %v3630
      %3632 = vmatmul.bf16.gmra.mxu0 %v2918
      %v3633 = vpop.f32.mrf.mxu0
      %v3634 = vadd.f32 %v3585, %v3633
      %v3635 = vpop.f32.mrf.mxu0
      %v3636 = vadd.f32 %v3587, %v3635
      %3637 = vmatmul.bf16.gmra.mxu0 %v2926
      %v3638 = vpop.f32.mrf.mxu0
      %v3639 = vadd.f32 %v3590, %v3638
      %v3640 = vpop.f32.mrf.mxu0
      %v3641 = vadd.f32 %v3592, %v3640
      %3642 = vdwg.mxu0
      %3643 = vmatpush.bf16.msra.mxu0 %v3358
      %3644 = vmatpush.bf16.msra.mxu0 %v3357
      %3645 = vmatpush.bf16.msra.mxu0 %v3356
      %3646 = vmatpush.bf16.msra.mxu0 %v3355
      %3647 = vmatpush.bf16.msra.mxu0 %v3354
      %3648 = vmatpush.bf16.msra.mxu0 %v3353
      %3649 = vmatpush.bf16.msra.mxu0 %v3352
      %3650 = vmatpush.bf16.msra.mxu0 %v3351
      %3651 = vmatmul.bf16.gmra.mxu0 %v2871
      %v3652 = vpop.f32.mrf.mxu0
      %v3653 = vadd.f32 %v3604, %v3652
      %v3654 = vpop.f32.mrf.mxu0
      %v3655 = vadd.f32 %v3606, %v3654
      %3656 = vmatmul.bf16.gmra.mxu0 %v2879
      %v3657 = vpop.f32.mrf.mxu0
      %v3658 = vadd.f32 %v3609, %v3657
      %v3659 = vpop.f32.mrf.mxu0
      %v3660 = vadd.f32 %v3611, %v3659
      %3661 = vmatmul.bf16.gmra.mxu0 %v2887
      %v3662 = vpop.f32.mrf.mxu0
      %v3663 = vadd.f32 %v3614, %v3662
      %v3664 = vpop.f32.mrf.mxu0
      %v3665 = vadd.f32 %v3616, %v3664
      %3666 = vmatmul.bf16.gmra.mxu0 %v2895
      %v3667 = vpop.f32.mrf.mxu0
      %v3668 = vadd.f32 %v3619, %v3667
      %v3669 = vpop.f32.mrf.mxu0
      %v3670 = vadd.f32 %v3621, %v3669
      %3671 = vmatmul.bf16.gmra.mxu0 %v2903
      %v3672 = vpop.f32.mrf.mxu0
      %v3673 = vadd.f32 %v3624, %v3672
      %v3674 = vpop.f32.mrf.mxu0
      %v3675 = vadd.f32 %v3626, %v3674
      %3676 = vmatmul.bf16.gmra.mxu0 %v2911
      %v3677 = vpop.f32.mrf.mxu0
      %v3678 = vadd.f32 %v3629, %v3677
      %v3679 = vpop.f32.mrf.mxu0
      %v3680 = vadd.f32 %v3631, %v3679
      %3681 = vmatmul.bf16.gmra.mxu0 %v2919
      %v3682 = vpop.f32.mrf.mxu0
      %v3683 = vadd.f32 %v3634, %v3682
      %v3684 = vpop.f32.mrf.mxu0
      %v3685 = vadd.f32 %v3636, %v3684
      %3686 = vmatmul.bf16.gmra.mxu0 %v2927
      %v3687 = vpop.f32.mrf.mxu0
      %v3688 = vadd.f32 %v3639, %v3687
      %v3689 = vpop.f32.mrf.mxu0
      %v3690 = vadd.f32 %v3641, %v3689
      %3691 = vdwg.mxu0
      %3692 = vmatpush.bf16.msra.mxu0 %v3366
      %3693 = vmatpush.bf16.msra.mxu0 %v3365
      %3694 = vmatpush.bf16.msra.mxu0 %v3364
      %3695 = vmatpush.bf16.msra.mxu0 %v3363
      %3696 = vmatpush.bf16.msra.mxu0 %v3362
      %3697 = vmatpush.bf16.msra.mxu0 %v3361
      %3698 = vmatpush.bf16.msra.mxu0 %v3360
      %3699 = vmatpush.bf16.msra.mxu0 %v3359
      %3700 = vmatmul.bf16.gmra.mxu0 %v2872
      %v3701 = vpop.f32.mrf.mxu0
      %v3702 = vadd.f32 %v3653, %v3701
      %v3703 = vpop.f32.mrf.mxu0
      %v3704 = vadd.f32 %v3655, %v3703
      %3705 = vmatmul.bf16.gmra.mxu0 %v2880
      %v3706 = vpop.f32.mrf.mxu0
      %v3707 = vadd.f32 %v3658, %v3706
      %v3708 = vpop.f32.mrf.mxu0
      %v3709 = vadd.f32 %v3660, %v3708
      %3710 = vmatmul.bf16.gmra.mxu0 %v2888
      %v3711 = vpop.f32.mrf.mxu0
      %v3712 = vadd.f32 %v3663, %v3711
      %v3713 = vpop.f32.mrf.mxu0
      %v3714 = vadd.f32 %v3665, %v3713
      %3715 = vmatmul.bf16.gmra.mxu0 %v2896
      %v3716 = vpop.f32.mrf.mxu0
      %v3717 = vadd.f32 %v3668, %v3716
      %v3718 = vpop.f32.mrf.mxu0
      %v3719 = vadd.f32 %v3670, %v3718
      %3720 = vmatmul.bf16.gmra.mxu0 %v2904
      %v3721 = vpop.f32.mrf.mxu0
      %v3722 = vadd.f32 %v3673, %v3721
      %v3723 = vpop.f32.mrf.mxu0
      %v3724 = vadd.f32 %v3675, %v3723
      %3725 = vmatmul.bf16.gmra.mxu0 %v2912
      %v3726 = vpop.f32.mrf.mxu0
      %v3727 = vadd.f32 %v3678, %v3726
      %v3728 = vpop.f32.mrf.mxu0
      %v3729 = vadd.f32 %v3680, %v3728
      %3730 = vmatmul.bf16.gmra.mxu0 %v2920
      %v3731 = vpop.f32.mrf.mxu0
      %v3732 = vadd.f32 %v3683, %v3731
      %v3733 = vpop.f32.mrf.mxu0
      %v3734 = vadd.f32 %v3685, %v3733
      %3735 = vmatmul.bf16.gmra.mxu0 %v2928
      %v3736 = vpop.f32.mrf.mxu0
      %v3737 = vadd.f32 %v3688, %v3736
      %v3738 = vpop.f32.mrf.mxu0
      %v3739 = vadd.f32 %v3690, %v3738
      %3740 = vdwg.mxu0
      %3741 = vmatpush.bf16.msra.mxu0 %v3374
      %3742 = vmatpush.bf16.msra.mxu0 %v3373
      %3743 = vmatpush.bf16.msra.mxu0 %v3372
      %3744 = vmatpush.bf16.msra.mxu0 %v3371
      %3745 = vmatpush.bf16.msra.mxu0 %v3370
      %3746 = vmatpush.bf16.msra.mxu0 %v3369
      %3747 = vmatpush.bf16.msra.mxu0 %v3368
      %3748 = vmatpush.bf16.msra.mxu0 %v3367
      %3749 = vmatmul.bf16.gmra.mxu0 %v2873
      %v3750 = vpop.f32.mrf.mxu0
      %v3751 = vadd.f32 %v3702, %v3750
      %v3752 = vpop.f32.mrf.mxu0
      %v3753 = vadd.f32 %v3704, %v3752
      %3754 = vmatmul.bf16.gmra.mxu0 %v2881
      %v3755 = vpop.f32.mrf.mxu0
      %v3756 = vadd.f32 %v3707, %v3755
      %v3757 = vpop.f32.mrf.mxu0
      %v3758 = vadd.f32 %v3709, %v3757
      %3759 = vmatmul.bf16.gmra.mxu0 %v2889
      %v3760 = vpop.f32.mrf.mxu0
      %v3761 = vadd.f32 %v3712, %v3760
      %v3762 = vpop.f32.mrf.mxu0
      %v3763 = vadd.f32 %v3714, %v3762
      %3764 = vmatmul.bf16.gmra.mxu0 %v2897
      %v3765 = vpop.f32.mrf.mxu0
      %v3766 = vadd.f32 %v3717, %v3765
      %v3767 = vpop.f32.mrf.mxu0
      %v3768 = vadd.f32 %v3719, %v3767
      %3769 = vmatmul.bf16.gmra.mxu0 %v2905
      %v3770 = vpop.f32.mrf.mxu0
      %v3771 = vadd.f32 %v3722, %v3770
      %v3772 = vpop.f32.mrf.mxu0
      %v3773 = vadd.f32 %v3724, %v3772
      %3774 = vmatmul.bf16.gmra.mxu0 %v2913
      %v3775 = vpop.f32.mrf.mxu0
      %v3776 = vadd.f32 %v3727, %v3775
      %v3777 = vpop.f32.mrf.mxu0
      %v3778 = vadd.f32 %v3729, %v3777
      %3779 = vmatmul.bf16.gmra.mxu0 %v2921
      %v3780 = vpop.f32.mrf.mxu0
      %v3781 = vadd.f32 %v3732, %v3780
      %v3782 = vpop.f32.mrf.mxu0
      %v3783 = vadd.f32 %v3734, %v3782
      %3784 = vmatmul.bf16.gmra.mxu0 %v2929
      %v3785 = vpop.f32.mrf.mxu0
      %v3786 = vadd.f32 %v3737, %v3785
      %v3787 = vpop.f32.mrf.mxu0
      %v3788 = vadd.f32 %v3739, %v3787
      %3789 = vdwg.mxu0
      %3790 = vmatpush.bf16.msra.mxu0 %v3382
      %3791 = vmatpush.bf16.msra.mxu0 %v3381
      %3792 = vmatpush.bf16.msra.mxu0 %v3380
      %3793 = vmatpush.bf16.msra.mxu0 %v3379
      %3794 = vmatpush.bf16.msra.mxu0 %v3378
      %3795 = vmatpush.bf16.msra.mxu0 %v3377
      %3796 = vmatpush.bf16.msra.mxu0 %v3376
      %3797 = vmatpush.bf16.msra.mxu0 %v3375
      %3798 = vmatmul.bf16.gmra.mxu0 %v2874
      %v3799 = vpop.f32.mrf.mxu0
      %v3800 = vadd.f32 %v3751, %v3799
      %v3801 = vpop.f32.mrf.mxu0
      %v3802 = vadd.f32 %v3753, %v3801
      %3803 = vmatmul.bf16.gmra.mxu0 %v2882
      %v3804 = vpop.f32.mrf.mxu0
      %v3805 = vadd.f32 %v3756, %v3804
      %v3806 = vpop.f32.mrf.mxu0
      %v3807 = vadd.f32 %v3758, %v3806
      %3808 = vmatmul.bf16.gmra.mxu0 %v2890
      %v3809 = vpop.f32.mrf.mxu0
      %v3810 = vadd.f32 %v3761, %v3809
      %v3811 = vpop.f32.mrf.mxu0
      %v3812 = vadd.f32 %v3763, %v3811
      %3813 = vmatmul.bf16.gmra.mxu0 %v2898
      %v3814 = vpop.f32.mrf.mxu0
      %v3815 = vadd.f32 %v3766, %v3814
      %v3816 = vpop.f32.mrf.mxu0
      %v3817 = vadd.f32 %v3768, %v3816
      %3818 = vmatmul.bf16.gmra.mxu0 %v2906
      %v3819 = vpop.f32.mrf.mxu0
      %v3820 = vadd.f32 %v3771, %v3819
      %v3821 = vpop.f32.mrf.mxu0
      %v3822 = vadd.f32 %v3773, %v3821
      %3823 = vmatmul.bf16.gmra.mxu0 %v2914
      %v3824 = vpop.f32.mrf.mxu0
      %v3825 = vadd.f32 %v3776, %v3824
      %v3826 = vpop.f32.mrf.mxu0
      %v3827 = vadd.f32 %v3778, %v3826
      %3828 = vmatmul.bf16.gmra.mxu0 %v2922
      %v3829 = vpop.f32.mrf.mxu0
      %v3830 = vadd.f32 %v3781, %v3829
      %v3831 = vpop.f32.mrf.mxu0
      %v3832 = vadd.f32 %v3783, %v3831
      %3833 = vmatmul.bf16.gmra.mxu0 %v2930
      %v3834 = vpop.f32.mrf.mxu0
      %v3835 = vadd.f32 %v3786, %v3834
      %v3836 = vpop.f32.mrf.mxu0
      %v3837 = vadd.f32 %v3788, %v3836
      %3838 = vdwg.mxu0
      %v3839 = vadd.f32 %v1286, %v3800
      %v3840 = vadd.f32 %v1287, %v3802
      %v3841 = vadd.f32 %v1288, %v3805
      %v3842 = vadd.f32 %v1289, %v3807
      %v3843 = vadd.f32 %v1290, %v3810
      %v3844 = vadd.f32 %v1291, %v3812
      %v3845 = vadd.f32 %v1292, %v3815
      %v3846 = vadd.f32 %v1293, %v3817
      %v3847 = vadd.f32 %v1294, %v3820
      %v3848 = vadd.f32 %v1295, %v3822
      %v3849 = vadd.f32 %v1296, %v3825
      %v3850 = vadd.f32 %v1297, %v3827
      %v3851 = vadd.f32 %v1298, %v3830
      %v3852 = vadd.f32 %v1299, %v3832
      %v3853 = vadd.f32 %v1300, %v3835
      %v3854 = vadd.f32 %v1301, %v3837
      %3855 = vst [vmem:[%s415] sm:$0xff] %v3839
      %3856 = vst [vmem:[%s415 + $0x8] sm:$0xff] %v3840
      %3857 = vst [vmem:[%s415 + $0x10] sm:$0xff] %v3841
      %3858 = vst [vmem:[%s415 + $0x18] sm:$0xff] %v3842
      %3859 = vst [vmem:[%s415 + $0x20] sm:$0xff] %v3843
      %3860 = vst [vmem:[%s415 + $0x28] sm:$0xff] %v3844
      %3861 = vst [vmem:[%s415 + $0x30] sm:$0xff] %v3845
      %3862 = vst [vmem:[%s415 + $0x38] sm:$0xff] %v3846
      %3863 = vst [vmem:[%s415 + $0x40] sm:$0xff] %v3847
      %3864 = vst [vmem:[%s415 + $0x48] sm:$0xff] %v3848
      %3865 = vst [vmem:[%s415 + $0x50] sm:$0xff] %v3849
      %3866 = vst [vmem:[%s415 + $0x58] sm:$0xff] %v3850
      %3867 = vst [vmem:[%s415 + $0x60] sm:$0xff] %v3851
      %3868 = vst [vmem:[%s415 + $0x68] sm:$0xff] %v3852
      %3869 = vst [vmem:[%s415 + $0x70] sm:$0xff] %v3853
      %3870 = vst [vmem:[%s415 + $0x78] sm:$0xff] %v3854
      %s3871 = smul.u32 16, %s23
      %p3872 = scmp.lt.s32.totalorder %s3871, 31
      %s3873 = scalar_select %p3872, %s3871, 31
      %s3874 = smul.addr %s3873, 8
      %s3875 = scalar_lea.vmem %s12, %s3874
      // Predicated region
      $region69: #{tsmix_block.1} parent=67 // pred_check
        %p3876 = pneg %p298
      $region70: #{tsmix_block.1} parent=67 // pred_check_branch
        %3878 = sbr.rel (%p3876) target = $region72
      $region71: #{tsmix_block.1} parent=67 // pred_region
        %s3879 = smul.u32 16, %s23
      $region72: #{tsmix_block.1} parent=67 // pred_fallthru
        _
    $region68: #{tsmix_block.1} parent=5 // pred_fallthru
      _
    %p3880 = scmp.le.s32.totalorder 2, %s18
    // Predicated region
    $region73: #{tsmix_block.1} parent=5 // pred_check
      %p3881 = pneg %p3880
    $region74: #{tsmix_block.1} parent=5 // pred_check_branch
      %3883 = sbr.rel (%p3881) target = $region76
    $region75: #{tsmix_block.1} parent=5 // pred_region
      %s3884 = ssub.s32 %s18, 2
      // Predicated region
      $region77: #{tsmix_block.1} parent=75 // pred_check
        %p3885 = pneg %p304
      $region78: #{tsmix_block.1} parent=75 // pred_check_branch
        %3887 = sbr.rel (%p3885) target = $region80
      $region79: #{tsmix_block.1} parent=75 // pred_region
        %s3888 = smul.u32 16, %s24
        %p3889 = scmp.lt.s32.totalorder %s3888, 31
        %s3890 = scalar_select %p3889, %s3888, 31
        %s3891 = smul.addr %s3890, 8
        %s3892 = scalar_lea.vmem %s12, %s3891
      $region80: #{tsmix_block.1} parent=75 // pred_fallthru
        _
    $region76: #{tsmix_block.1} parent=5 // pred_fallthru
      _
  $region6: #{tsmix_block.1} parent=0 // loop_footer
    %s22 = sadd.s32 1, %s18
  $region7: #{tsmix_block.1} parent=0 // loop_footer_branch
    %17 = sbr.rel target = $region3
  $region8: #{tsmix_block.1} parent=0 // loop_exit
    _

</llo_original>
